<compile_context>
chip_gen: v7x
topology: tpu7x:2x2x1
jax: 0.10.0
libtpu: 0.0.40
codegen_flags: <defaults>
</compile_context>

<pallas_src>
import numpy as np
import jax
import jax.numpy as jnp
from jax import lax
from jax.experimental import pallas as pl
from jax.experimental.pallas import tpu as pltpu

KH = KW = 7
PAD = 3
TH = 16          # row-tile height for the depthwise accumulation (multiple of 8)


def _round_up(x, m):
    return ((x + m - 1) // m) * m


def _make_kernel(Cin, Cout, H, W, Hd, Hs, Ws, out_dtype):
    n_tiles = Hd // TH                 # depthwise row tiles (cover [0, Hd))
    n_out_tiles = -(-H // TH)          # pointwise row tiles (cover [0, H))

    def slab(kw):                      # rolled-slab index for kw != PAD
        return kw if kw < PAD else kw - 1

    def kernel(x_ref, wdw_ref, wpw_ref, bpw_ref, out_ref, xp_ref, xr_ref, dw_ref):
        """Grid step n.
        x_ref  : (1, Cin, H, W)          one image                       (VMEM)
        wdw_ref: (Cin, 49)               depthwise weights, k = kh*7+kw  (SMEM)
        wpw_ref: (Cout, Cin)             pointwise weights               (SMEM)
        bpw_ref: (Cout,)                 effective pointwise bias        (SMEM)
        out_ref: (1, Cout, H, W)         output block (written once)     (VMEM)
        xp_ref : (Hs, Ws) f32            zero-padded channel slab        (VMEM)
        xr_ref : (KW-1, Hs, Ws) f32      kw-rolled slabs (kw != PAD)     (VMEM)
        dw_ref : (Cin, Hd, Ws) f32       staged depthwise outputs        (VMEM)
        """
        # Zero the padded scratch once per grid step: the border must be zero,
        # the interior is overwritten per channel.  Runs every step (safe for
        # per-core scratch instances under megacore sharding).
        xp_ref[...] = jnp.zeros_like(xp_ref)

        # ------------------ depthwise 7x7, one input channel at a time ------------------
        for ci in range(Cin):
            # Channel placed at lane offset 0 (lane-aligned interior store); the
            # left conv padding comes from the roll wrapping through the zeroed
            # tail lanes (Ws - W >= 2*PAD), the right padding from the zeroed
            # columns [W, Ws).
            xp_ref[pl.ds(PAD, H), pl.ds(0, W)] = x_ref[0, ci].astype(jnp.float32)

            # One lane roll per kw (XLU), written to scratch so the kh taps below
            # are plain sublane-offset loads (no in-register sublane realignment).
            xp = xp_ref[...]
            for kw in range(KW):
                if kw == PAD:
                    continue
                xr_ref[slab(kw)] = pltpu.roll(xp, shift=(PAD - kw) % Ws, axis=1)

            # Hoist the 49 scalar tap weights (SMEM reads) out of the tile loop.
            wts = [wdw_ref[ci, k] for k in range(KH * KW)]

            def tile_body(t, carry):
                r0 = t * TH
                if not isinstance(r0, int):
                    r0 = pl.multiple_of(r0, 8)
                acc = jnp.zeros((TH, Ws), jnp.float32)
                for kw in range(KW):
                    for kh in range(KH):
                        if kw == PAD:
                            rows = xp_ref[pl.ds(r0 + kh, TH), :]
                        else:
                            rows = xr_ref[slab(kw), pl.ds(r0 + kh, TH), :]
                        acc = acc + rows * wts[kh * KW + kw]
                dw_ref[ci, pl.ds(r0, TH), :] = acc
                return carry

            if n_tiles == 1:
                tile_body(0, 0)
            else:
                # Non-unrolled loop bounds the live accumulator to (TH, Ws) vregs.
                lax.fori_loop(0, n_tiles, tile_body, 0)

        # ------------------ pointwise 1x1 on the VPU, each output stored once ------------
        for t in range(n_out_tiles):
            r0 = t * TH
            th = min(TH, H - r0)
            dwt = [dw_ref[ci, pl.ds(r0, th), :] for ci in range(Cin)]
            for co in range(Cout):
                acc = dwt[0] * wpw_ref[co, 0]
                for ci in range(1, Cin):
                    acc = acc + dwt[ci] * wpw_ref[co, ci]
                acc = acc + bpw_ref[co]
                out_ref[0, co, pl.ds(r0, th), :] = acc[:, :W].astype(out_dtype)

    return kernel


def depthwise_separable_conv7(x_nchw, w_dw, b_dw, w_pw, b_pw):
    """x_nchw: (N, Cin, H, W); w_dw: (Cin, 1, 7, 7); b_dw: (Cin,);
    w_pw: (Cout, Cin, 1, 1); b_pw: (Cout,).  Returns (N, Cout, H, W) f32."""
    N, Cin, H, W = x_nchw.shape
    Cout = w_pw.shape[0]

    Hd = _round_up(H, TH)                     # row-tiled depthwise height
    Hs = _round_up(Hd + KH - 1, 8)            # sublane-aligned padded-scratch rows
    Ws = _round_up(W + 2 * PAD, 128)          # lane-aligned padded-scratch cols

    # Scalar parameter tables (SMEM); depthwise bias folded into pointwise bias.
    wdw = w_dw.reshape(Cin, KH * KW).astype(jnp.float32)            # (Cin, 49)
    wpw = w_pw.reshape(Cout, Cin).astype(jnp.float32)               # (Cout, Cin)
    bpw_eff = wpw @ b_dw.astype(jnp.float32) + b_pw.astype(jnp.float32)  # (Cout,)

    kernel = _make_kernel(Cin, Cout, H, W, Hd, Hs, Ws, jnp.float32)

    # VMEM footprint: scratch + double-buffered input/output blocks (+ headroom).
    scratch_bytes = (Hs * Ws + (KW - 1) * Hs * Ws + Cin * Hd * Ws) * 4
    block_bytes = 2 * (Cin * H * W * 4) + 2 * (Cout * H * W * 4)
    vmem_limit = max(4 << 20, int(1.5 * (scratch_bytes + block_bytes)) + (1 << 20))
    vmem_limit = min(vmem_limit, 64 << 20)

    flops = N * Cin * H * W * 2 * KH * KW + N * Cout * Cin * H * W * 2
    bytes_accessed = (N * Cin * H * W + N * Cout * H * W
                      + wdw.size + wpw.size + bpw_eff.size) * 4

    return pl.pallas_call(
        kernel,
        out_shape=jax.ShapeDtypeStruct((N, Cout, H, W), jnp.float32),
        grid_spec=pltpu.PrefetchScalarGridSpec(
            num_scalar_prefetch=0,
            grid=(N,),                                   # Cin folded into the body
            in_specs=[
                pl.BlockSpec((1, Cin, H, W), lambda n: (n, 0, 0, 0)),
                pl.BlockSpec(memory_space=pltpu.MemorySpace.SMEM),   # wdw
                pl.BlockSpec(memory_space=pltpu.MemorySpace.SMEM),   # wpw
                pl.BlockSpec(memory_space=pltpu.MemorySpace.SMEM),   # bpw_eff
            ],
            out_specs=pl.BlockSpec((1, Cout, H, W), lambda n: (n, 0, 0, 0)),
            scratch_shapes=[
                pltpu.VMEM((Hs, Ws), jnp.float32),            # padded channel slab
                pltpu.VMEM((KW - 1, Hs, Ws), jnp.float32),    # kw-rolled slabs
                pltpu.VMEM((Cin, Hd, Ws), jnp.float32),       # staged depthwise outputs
            ],
        ),
        compiler_params=pltpu.CompilerParams(
            dimension_semantics=("parallel",),   # N>=2 feeds both v7x TensorCores
            vmem_limit_bytes=vmem_limit,
        ),
        cost_estimate=pl.CostEstimate(
            flops=flops, transcendentals=0, bytes_accessed=bytes_accessed),
    )(x_nchw, wdw, wpw, bpw_eff)


def _reference(x_nchw, w_dw, b_dw, w_pw, b_pw):
    """Pure-JAX reference mirroring nn.Conv2d semantics (NCHW)."""
    Cin = x_nchw.shape[1]
    dn = ("NCHW", "OIHW", "NCHW")
    y = lax.conv_general_dilated(
        x_nchw, w_dw, window_strides=(1, 1),
        padding=((PAD, PAD), (PAD, PAD)),
        feature_group_count=Cin, dimension_numbers=dn)
    y = y + b_dw.reshape(1, -1, 1, 1)
    z = lax.conv_general_dilated(
        y, w_pw, window_strides=(1, 1), padding=((0, 0), (0, 0)),
        dimension_numbers=dn)
    return z + b_pw.reshape(1, -1, 1, 1)


if __name__ == "__main__":
    N, Cin, Cout, H, W = 2, 4, 8, 16, 16

    key = jax.random.PRNGKey(0)
    kx, k1, k2, k3, k4 = jax.random.split(key, 5)

    x = jax.random.normal(kx, (N, Cin, H, W), dtype=jnp.float32)

    # Deterministic parameter init (PyTorch Conv2d-style uniform bounds).
    fan_dw = 1 * KH * KW
    bound_dw = 1.0 / np.sqrt(fan_dw)
    w_dw = jax.random.uniform(k1, (Cin, 1, KH, KW), jnp.float32,
                              -bound_dw, bound_dw)
    b_dw = jax.random.uniform(k2, (Cin,), jnp.float32, -bound_dw, bound_dw)

    fan_pw = Cin * 1 * 1
    bound_pw = 1.0 / np.sqrt(fan_pw)
    w_pw = jax.random.uniform(k3, (Cout, Cin, 1, 1), jnp.float32,
                              -bound_pw, bound_pw)
    b_pw = jax.random.uniform(k4, (Cout,), jnp.float32, -bound_pw, bound_pw)

    out = depthwise_separable_conv7(x, w_dw, b_dw, w_pw, b_pw)
    out = jax.block_until_ready(out)

    ref = jax.block_until_ready(_reference(x, w_dw, b_dw, w_pw, b_pw))
    np.testing.assert_allclose(np.asarray(out), np.asarray(ref),
                               rtol=1e-4, atol=1e-4)

    print("KERNEL_OK")
</pallas_src>

<mosaic_0001>
module attributes {stable_mosaic.version = 11 : i64} {
  func.func @kernel(%arg0: i32, %arg1: memref<1x4x16x16xf32, #tpu.memory_space<vmem>>, %arg2: memref<4x49xf32, #tpu.memory_space<smem>>, %arg3: memref<8x4xf32, #tpu.memory_space<smem>>, %arg4: memref<8xf32, #tpu.memory_space<smem>>, %arg5: memref<1x8x16x16xf32, #tpu.memory_space<vmem>>, %arg6: memref<24x128xf32, #tpu.memory_space<vmem>>, %arg7: memref<6x24x128xf32, #tpu.memory_space<vmem>>, %arg8: memref<4x16x128xf32, #tpu.memory_space<vmem>>) attributes {dimension_semantics = [#tpu.dimension_semantics<parallel>], iteration_bounds = array<i64: 2>, scalar_prefetch = 0 : i64, scratch_operands = 3 : i64, tpu.core_type = #tpu.core_type<tc>, window_params = [{transform_indices = @transform_0, window_bounds = array<i64: 1, 4, 16, 16>}, {transform_indices = @transform_1, window_bounds = array<i64: 4, 49>}, {transform_indices = @transform_2, window_bounds = array<i64: 8, 4>}, {transform_indices = @transform_3, window_bounds = array<i64: 8>}, {transform_indices = @transform_4, window_bounds = array<i64: 1, 8, 16, 16>}]} {
    %cst = arith.constant 0.000000e+00 : f32
    %0 = vector.broadcast %cst : f32 to vector<24x128xf32>
    %c0 = arith.constant 0 : index
    %c0_0 = arith.constant 0 : index
    %1 = vector.load %arg6[%c0, %c0_0] : memref<24x128xf32, #tpu.memory_space<vmem>>, vector<24x128xf32>
    tpu.vector_store %arg6[%c0, %c0_0], %0 {strides = array<i32>} : memref<24x128xf32, #tpu.memory_space<vmem>>, vector<24x128xf32>,
    %c0_1 = arith.constant 0 : index
    %c0_2 = arith.constant 0 : index
    %c0_3 = arith.constant 0 : index
    %c0_4 = arith.constant 0 : index
    %2 = vector.load %arg1[%c0_1, %c0_2, %c0_3, %c0_4] : memref<1x4x16x16xf32, #tpu.memory_space<vmem>>, vector<1x1x16x16xf32>
    %3 = vector.shape_cast %2 : vector<1x1x16x16xf32> to vector<16x16xf32>
    %c3 = arith.constant 3 : index
    %c0_5 = arith.constant 0 : index
    %4 = vector.load %arg6[%c3, %c0_5] : memref<24x128xf32, #tpu.memory_space<vmem>>, vector<16x16xf32>
    tpu.vector_store %arg6[%c3, %c0_5], %3 {strides = array<i32>} : memref<24x128xf32, #tpu.memory_space<vmem>>, vector<16x16xf32>,
    %c0_6 = arith.constant 0 : index
    %c0_7 = arith.constant 0 : index
    %5 = vector.load %arg6[%c0_6, %c0_7] : memref<24x128xf32, #tpu.memory_space<vmem>>, vector<24x128xf32>
    %c3_i32 = arith.constant 3 : i32
    %6 = tpu.dynamic_rotate %5 by %c3_i32 dim 1 : vector<24x128xf32>, i32 -> vector<24x128xf32>
    %c0_8 = arith.constant 0 : index
    %c0_9 = arith.constant 0 : index
    %c0_10 = arith.constant 0 : index
    %7 = vector.load %arg7[%c0_8, %c0_9, %c0_10] : memref<6x24x128xf32, #tpu.memory_space<vmem>>, vector<1x24x128xf32>
    %8 = vector.shape_cast %7 : vector<1x24x128xf32> to vector<24x128xf32>
    %9 = vector.shape_cast %6 : vector<24x128xf32> to vector<1x24x128xf32>
    tpu.vector_store %arg7[%c0_8, %c0_9, %c0_10], %9 {strides = array<i32>} : memref<6x24x128xf32, #tpu.memory_space<vmem>>, vector<1x24x128xf32>,
    %c2_i32 = arith.constant 2 : i32
    %10 = tpu.dynamic_rotate %5 by %c2_i32 dim 1 : vector<24x128xf32>, i32 -> vector<24x128xf32>
    %c1 = arith.constant 1 : index
    %c0_11 = arith.constant 0 : index
    %c0_12 = arith.constant 0 : index
    %11 = vector.load %arg7[%c1, %c0_11, %c0_12] : memref<6x24x128xf32, #tpu.memory_space<vmem>>, vector<1x24x128xf32>
    %12 = vector.shape_cast %11 : vector<1x24x128xf32> to vector<24x128xf32>
    %13 = vector.shape_cast %10 : vector<24x128xf32> to vector<1x24x128xf32>
    tpu.vector_store %arg7[%c1, %c0_11, %c0_12], %13 {strides = array<i32>} : memref<6x24x128xf32, #tpu.memory_space<vmem>>, vector<1x24x128xf32>,
    %c1_i32 = arith.constant 1 : i32
    %14 = tpu.dynamic_rotate %5 by %c1_i32 dim 1 : vector<24x128xf32>, i32 -> vector<24x128xf32>
    %c2 = arith.constant 2 : index
    %c0_13 = arith.constant 0 : index
    %c0_14 = arith.constant 0 : index
    %15 = vector.load %arg7[%c2, %c0_13, %c0_14] : memref<6x24x128xf32, #tpu.memory_space<vmem>>, vector<1x24x128xf32>
    %16 = vector.shape_cast %15 : vector<1x24x128xf32> to vector<24x128xf32>
    %17 = vector.shape_cast %14 : vector<24x128xf32> to vector<1x24x128xf32>
    tpu.vector_store %arg7[%c2, %c0_13, %c0_14], %17 {strides = array<i32>} : memref<6x24x128xf32, #tpu.memory_space<vmem>>, vector<1x24x128xf32>,
    %c127_i32 = arith.constant 127 : i32
    %18 = tpu.dynamic_rotate %5 by %c127_i32 dim 1 : vector<24x128xf32>, i32 -> vector<24x128xf32>
    %c3_15 = arith.constant 3 : index
    %c0_16 = arith.constant 0 : index
    %c0_17 = arith.constant 0 : index
    %19 = vector.load %arg7[%c3_15, %c0_16, %c0_17] : memref<6x24x128xf32, #tpu.memory_space<vmem>>, vector<1x24x128xf32>
    %20 = vector.shape_cast %19 : vector<1x24x128xf32> to vector<24x128xf32>
    %21 = vector.shape_cast %18 : vector<24x128xf32> to vector<1x24x128xf32>
    tpu.vector_store %arg7[%c3_15, %c0_16, %c0_17], %21 {strides = array<i32>} : memref<6x24x128xf32, #tpu.memory_space<vmem>>, vector<1x24x128xf32>,
    %c126_i32 = arith.constant 126 : i32
    %22 = tpu.dynamic_rotate %5 by %c126_i32 dim 1 : vector<24x128xf32>, i32 -> vector<24x128xf32>
    %c4 = arith.constant 4 : index
    %c0_18 = arith.constant 0 : index
    %c0_19 = arith.constant 0 : index
    %23 = vector.load %arg7[%c4, %c0_18, %c0_19] : memref<6x24x128xf32, #tpu.memory_space<vmem>>, vector<1x24x128xf32>
    %24 = vector.shape_cast %23 : vector<1x24x128xf32> to vector<24x128xf32>
    %25 = vector.shape_cast %22 : vector<24x128xf32> to vector<1x24x128xf32>
    tpu.vector_store %arg7[%c4, %c0_18, %c0_19], %25 {strides = array<i32>} : memref<6x24x128xf32, #tpu.memory_space<vmem>>, vector<1x24x128xf32>,
    %c125_i32 = arith.constant 125 : i32
    %26 = tpu.dynamic_rotate %5 by %c125_i32 dim 1 : vector<24x128xf32>, i32 -> vector<24x128xf32>
    %c5 = arith.constant 5 : index
    %c0_20 = arith.constant 0 : index
    %c0_21 = arith.constant 0 : index
    %27 = vector.load %arg7[%c5, %c0_20, %c0_21] : memref<6x24x128xf32, #tpu.memory_space<vmem>>, vector<1x24x128xf32>
    %28 = vector.shape_cast %27 : vector<1x24x128xf32> to vector<24x128xf32>
    %29 = vector.shape_cast %26 : vector<24x128xf32> to vector<1x24x128xf32>
    tpu.vector_store %arg7[%c5, %c0_20, %c0_21], %29 {strides = array<i32>} : memref<6x24x128xf32, #tpu.memory_space<vmem>>, vector<1x24x128xf32>,
    %c0_22 = arith.constant 0 : index
    %c0_23 = arith.constant 0 : index
    %30 = memref.load %arg2[%c0_22, %c0_23] : memref<4x49xf32, #tpu.memory_space<smem>>
    %c0_24 = arith.constant 0 : index
    %c1_25 = arith.constant 1 : index
    %31 = memref.load %arg2[%c0_24, %c1_25] : memref<4x49xf32, #tpu.memory_space<smem>>
    %c0_26 = arith.constant 0 : index
    %c2_27 = arith.constant 2 : index
    %32 = memref.load %arg2[%c0_26, %c2_27] : memref<4x49xf32, #tpu.memory_space<smem>>
    %c0_28 = arith.constant 0 : index
    %c3_29 = arith.constant 3 : index
    %33 = memref.load %arg2[%c0_28, %c3_29] : memref<4x49xf32, #tpu.memory_space<smem>>
    %c0_30 = arith.constant 0 : index
    %c4_31 = arith.constant 4 : index
    %34 = memref.load %arg2[%c0_30, %c4_31] : memref<4x49xf32, #tpu.memory_space<smem>>
    %c0_32 = arith.constant 0 : index
    %c5_33 = arith.constant 5 : index
    %35 = memref.load %arg2[%c0_32, %c5_33] : memref<4x49xf32, #tpu.memory_space<smem>>
    %c0_34 = arith.constant 0 : index
    %c6 = arith.constant 6 : index
    %36 = memref.load %arg2[%c0_34, %c6] : memref<4x49xf32, #tpu.memory_space<smem>>
    %c0_35 = arith.constant 0 : index
    %c7 = arith.constant 7 : index
    %37 = memref.load %arg2[%c0_35, %c7] : memref<4x49xf32, #tpu.memory_space<smem>>
    %c0_36 = arith.constant 0 : index
    %c8 = arith.constant 8 : index
    %38 = memref.load %arg2[%c0_36, %c8] : memref<4x49xf32, #tpu.memory_space<smem>>
    %c0_37 = arith.constant 0 : index
    %c9 = arith.constant 9 : index
    %39 = memref.load %arg2[%c0_37, %c9] : memref<4x49xf32, #tpu.memory_space<smem>>
    %c0_38 = arith.constant 0 : index
    %c10 = arith.constant 10 : index
    %40 = memref.load %arg2[%c0_38, %c10] : memref<4x49xf32, #tpu.memory_space<smem>>
    %c0_39 = arith.constant 0 : index
    %c11 = arith.constant 11 : index
    %41 = memref.load %arg2[%c0_39, %c11] : memref<4x49xf32, #tpu.memory_space<smem>>
    %c0_40 = arith.constant 0 : index
    %c12 = arith.constant 12 : index
    %42 = memref.load %arg2[%c0_40, %c12] : memref<4x49xf32, #tpu.memory_space<smem>>
    %c0_41 = arith.constant 0 : index
    %c13 = arith.constant 13 : index
    %43 = memref.load %arg2[%c0_41, %c13] : memref<4x49xf32, #tpu.memory_space<smem>>
    %c0_42 = arith.constant 0 : index
    %c14 = arith.constant 14 : index
    %44 = memref.load %arg2[%c0_42, %c14] : memref<4x49xf32, #tpu.memory_space<smem>>
    %c0_43 = arith.constant 0 : index
    %c15 = arith.constant 15 : index
    %45 = memref.load %arg2[%c0_43, %c15] : memref<4x49xf32, #tpu.memory_space<smem>>
    %c0_44 = arith.constant 0 : index
    %c16 = arith.constant 16 : index
    %46 = memref.load %arg2[%c0_44, %c16] : memref<4x49xf32, #tpu.memory_space<smem>>
    %c0_45 = arith.constant 0 : index
    %c17 = arith.constant 17 : index
    %47 = memref.load %arg2[%c0_45, %c17] : memref<4x49xf32, #tpu.memory_space<smem>>
    %c0_46 = arith.constant 0 : index
    %c18 = arith.constant 18 : index
    %48 = memref.load %arg2[%c0_46, %c18] : memref<4x49xf32, #tpu.memory_space<smem>>
    %c0_47 = arith.constant 0 : index
    %c19 = arith.constant 19 : index
    %49 = memref.load %arg2[%c0_47, %c19] : memref<4x49xf32, #tpu.memory_space<smem>>
    %c0_48 = arith.constant 0 : index
    %c20 = arith.constant 20 : index
    %50 = memref.load %arg2[%c0_48, %c20] : memref<4x49xf32, #tpu.memory_space<smem>>
    %c0_49 = arith.constant 0 : index
    %c21 = arith.constant 21 : index
    %51 = memref.load %arg2[%c0_49, %c21] : memref<4x49xf32, #tpu.memory_space<smem>>
    %c0_50 = arith.constant 0 : index
    %c22 = arith.constant 22 : index
    %52 = memref.load %arg2[%c0_50, %c22] : memref<4x49xf32, #tpu.memory_space<smem>>
    %c0_51 = arith.constant 0 : index
    %c23 = arith.constant 23 : index
    %53 = memref.load %arg2[%c0_51, %c23] : memref<4x49xf32, #tpu.memory_space<smem>>
    %c0_52 = arith.constant 0 : index
    %c24 = arith.constant 24 : index
    %54 = memref.load %arg2[%c0_52, %c24] : memref<4x49xf32, #tpu.memory_space<smem>>
    %c0_53 = arith.constant 0 : index
    %c25 = arith.constant 25 : index
    %55 = memref.load %arg2[%c0_53, %c25] : memref<4x49xf32, #tpu.memory_space<smem>>
    %c0_54 = arith.constant 0 : index
    %c26 = arith.constant 26 : index
    %56 = memref.load %arg2[%c0_54, %c26] : memref<4x49xf32, #tpu.memory_space<smem>>
    %c0_55 = arith.constant 0 : index
    %c27 = arith.constant 27 : index
    %57 = memref.load %arg2[%c0_55, %c27] : memref<4x49xf32, #tpu.memory_space<smem>>
    %c0_56 = arith.constant 0 : index
    %c28 = arith.constant 28 : index
    %58 = memref.load %arg2[%c0_56, %c28] : memref<4x49xf32, #tpu.memory_space<smem>>
    %c0_57 = arith.constant 0 : index
    %c29 = arith.constant 29 : index
    %59 = memref.load %arg2[%c0_57, %c29] : memref<4x49xf32, #tpu.memory_space<smem>>
    %c0_58 = arith.constant 0 : index
    %c30 = arith.constant 30 : index
    %60 = memref.load %arg2[%c0_58, %c30] : memref<4x49xf32, #tpu.memory_space<smem>>
    %c0_59 = arith.constant 0 : index
    %c31 = arith.constant 31 : index
    %61 = memref.load %arg2[%c0_59, %c31] : memref<4x49xf32, #tpu.memory_space<smem>>
    %c0_60 = arith.constant 0 : index
    %c32 = arith.constant 32 : index
    %62 = memref.load %arg2[%c0_60, %c32] : memref<4x49xf32, #tpu.memory_space<smem>>
    %c0_61 = arith.constant 0 : index
    %c33 = arith.constant 33 : index
    %63 = memref.load %arg2[%c0_61, %c33] : memref<4x49xf32, #tpu.memory_space<smem>>
    %c0_62 = arith.constant 0 : index
    %c34 = arith.constant 34 : index
    %64 = memref.load %arg2[%c0_62, %c34] : memref<4x49xf32, #tpu.memory_space<smem>>
    %c0_63 = arith.constant 0 : index
    %c35 = arith.constant 35 : index
    %65 = memref.load %arg2[%c0_63, %c35] : memref<4x49xf32, #tpu.memory_space<smem>>
    %c0_64 = arith.constant 0 : index
    %c36 = arith.constant 36 : index
    %66 = memref.load %arg2[%c0_64, %c36] : memref<4x49xf32, #tpu.memory_space<smem>>
    %c0_65 = arith.constant 0 : index
    %c37 = arith.constant 37 : index
    %67 = memref.load %arg2[%c0_65, %c37] : memref<4x49xf32, #tpu.memory_space<smem>>
    %c0_66 = arith.constant 0 : index
    %c38 = arith.constant 38 : index
    %68 = memref.load %arg2[%c0_66, %c38] : memref<4x49xf32, #tpu.memory_space<smem>>
    %c0_67 = arith.constant 0 : index
    %c39 = arith.constant 39 : index
    %69 = memref.load %arg2[%c0_67, %c39] : memref<4x49xf32, #tpu.memory_space<smem>>
    %c0_68 = arith.constant 0 : index
    %c40 = arith.constant 40 : index
    %70 = memref.load %arg2[%c0_68, %c40] : memref<4x49xf32, #tpu.memory_space<smem>>
    %c0_69 = arith.constant 0 : index
    %c41 = arith.constant 41 : index
    %71 = memref.load %arg2[%c0_69, %c41] : memref<4x49xf32, #tpu.memory_space<smem>>
    %c0_70 = arith.constant 0 : index
    %c42 = arith.constant 42 : index
    %72 = memref.load %arg2[%c0_70, %c42] : memref<4x49xf32, #tpu.memory_space<smem>>
    %c0_71 = arith.constant 0 : index
    %c43 = arith.constant 43 : index
    %73 = memref.load %arg2[%c0_71, %c43] : memref<4x49xf32, #tpu.memory_space<smem>>
    %c0_72 = arith.constant 0 : index
    %c44 = arith.constant 44 : index
    %74 = memref.load %arg2[%c0_72, %c44] : memref<4x49xf32, #tpu.memory_space<smem>>
    %c0_73 = arith.constant 0 : index
    %c45 = arith.constant 45 : index
    %75 = memref.load %arg2[%c0_73, %c45] : memref<4x49xf32, #tpu.memory_space<smem>>
    %c0_74 = arith.constant 0 : index
    %c46 = arith.constant 46 : index
    %76 = memref.load %arg2[%c0_74, %c46] : memref<4x49xf32, #tpu.memory_space<smem>>
    %c0_75 = arith.constant 0 : index
    %c47 = arith.constant 47 : index
    %77 = memref.load %arg2[%c0_75, %c47] : memref<4x49xf32, #tpu.memory_space<smem>>
    %c0_76 = arith.constant 0 : index
    %c48 = arith.constant 48 : index
    %78 = memref.load %arg2[%c0_76, %c48] : memref<4x49xf32, #tpu.memory_space<smem>>
    %cst_77 = arith.constant 0.000000e+00 : f32
    %79 = vector.broadcast %cst_77 : f32 to vector<16x128xf32>
    %c0_78 = arith.constant 0 : index
    %c0_79 = arith.constant 0 : index
    %c0_80 = arith.constant 0 : index
    %80 = vector.load %arg7[%c0_78, %c0_79, %c0_80] : memref<6x24x128xf32, #tpu.memory_space<vmem>>, vector<1x16x128xf32>
    %81 = vector.shape_cast %80 : vector<1x16x128xf32> to vector<16x128xf32>
    %82 = vector.broadcast %30 : f32 to vector<16x128xf32>
    %83 = arith.mulf %81, %82 : vector<16x128xf32>
    %84 = arith.addf %79, %83 : vector<16x128xf32>
    %c0_81 = arith.constant 0 : index
    %c1_82 = arith.constant 1 : index
    %c0_83 = arith.constant 0 : index
    %85 = vector.load %arg7[%c0_81, %c1_82, %c0_83] : memref<6x24x128xf32, #tpu.memory_space<vmem>>, vector<1x16x128xf32>
    %86 = vector.shape_cast %85 : vector<1x16x128xf32> to vector<16x128xf32>
    %87 = vector.broadcast %37 : f32 to vector<16x128xf32>
    %88 = arith.mulf %86, %87 : vector<16x128xf32>
    %89 = arith.addf %84, %88 : vector<16x128xf32>
    %c0_84 = arith.constant 0 : index
    %c2_85 = arith.constant 2 : index
    %c0_86 = arith.constant 0 : index
    %90 = vector.load %arg7[%c0_84, %c2_85, %c0_86] : memref<6x24x128xf32, #tpu.memory_space<vmem>>, vector<1x16x128xf32>
    %91 = vector.shape_cast %90 : vector<1x16x128xf32> to vector<16x128xf32>
    %92 = vector.broadcast %44 : f32 to vector<16x128xf32>
    %93 = arith.mulf %91, %92 : vector<16x128xf32>
    %94 = arith.addf %89, %93 : vector<16x128xf32>
    %c0_87 = arith.constant 0 : index
    %c3_88 = arith.constant 3 : index
    %c0_89 = arith.constant 0 : index
    %95 = vector.load %arg7[%c0_87, %c3_88, %c0_89] : memref<6x24x128xf32, #tpu.memory_space<vmem>>, vector<1x16x128xf32>
    %96 = vector.shape_cast %95 : vector<1x16x128xf32> to vector<16x128xf32>
    %97 = vector.broadcast %51 : f32 to vector<16x128xf32>
    %98 = arith.mulf %96, %97 : vector<16x128xf32>
    %99 = arith.addf %94, %98 : vector<16x128xf32>
    %c0_90 = arith.constant 0 : index
    %c4_91 = arith.constant 4 : index
    %c0_92 = arith.constant 0 : index
    %100 = vector.load %arg7[%c0_90, %c4_91, %c0_92] : memref<6x24x128xf32, #tpu.memory_space<vmem>>, vector<1x16x128xf32>
    %101 = vector.shape_cast %100 : vector<1x16x128xf32> to vector<16x128xf32>
    %102 = vector.broadcast %58 : f32 to vector<16x128xf32>
    %103 = arith.mulf %101, %102 : vector<16x128xf32>
    %104 = arith.addf %99, %103 : vector<16x128xf32>
    %c0_93 = arith.constant 0 : index
    %c5_94 = arith.constant 5 : index
    %c0_95 = arith.constant 0 : index
    %105 = vector.load %arg7[%c0_93, %c5_94, %c0_95] : memref<6x24x128xf32, #tpu.memory_space<vmem>>, vector<1x16x128xf32>
    %106 = vector.shape_cast %105 : vector<1x16x128xf32> to vector<16x128xf32>
    %107 = vector.broadcast %65 : f32 to vector<16x128xf32>
    %108 = arith.mulf %106, %107 : vector<16x128xf32>
    %109 = arith.addf %104, %108 : vector<16x128xf32>
    %c0_96 = arith.constant 0 : index
    %c6_97 = arith.constant 6 : index
    %c0_98 = arith.constant 0 : index
    %110 = vector.load %arg7[%c0_96, %c6_97, %c0_98] : memref<6x24x128xf32, #tpu.memory_space<vmem>>, vector<1x16x128xf32>
    %111 = vector.shape_cast %110 : vector<1x16x128xf32> to vector<16x128xf32>
    %112 = vector.broadcast %72 : f32 to vector<16x128xf32>
    %113 = arith.mulf %111, %112 : vector<16x128xf32>
    %114 = arith.addf %109, %113 : vector<16x128xf32>
    %c1_99 = arith.constant 1 : index
    %c0_100 = arith.constant 0 : index
    %c0_101 = arith.constant 0 : index
    %115 = vector.load %arg7[%c1_99, %c0_100, %c0_101] : memref<6x24x128xf32, #tpu.memory_space<vmem>>, vector<1x16x128xf32>
    %116 = vector.shape_cast %115 : vector<1x16x128xf32> to vector<16x128xf32>
    %117 = vector.broadcast %31 : f32 to vector<16x128xf32>
    %118 = arith.mulf %116, %117 : vector<16x128xf32>
    %119 = arith.addf %114, %118 : vector<16x128xf32>
    %c1_102 = arith.constant 1 : index
    %c1_103 = arith.constant 1 : index
    %c0_104 = arith.constant 0 : index
    %120 = vector.load %arg7[%c1_102, %c1_103, %c0_104] : memref<6x24x128xf32, #tpu.memory_space<vmem>>, vector<1x16x128xf32>
    %121 = vector.shape_cast %120 : vector<1x16x128xf32> to vector<16x128xf32>
    %122 = vector.broadcast %38 : f32 to vector<16x128xf32>
    %123 = arith.mulf %121, %122 : vector<16x128xf32>
    %124 = arith.addf %119, %123 : vector<16x128xf32>
    %c1_105 = arith.constant 1 : index
    %c2_106 = arith.constant 2 : index
    %c0_107 = arith.constant 0 : index
    %125 = vector.load %arg7[%c1_105, %c2_106, %c0_107] : memref<6x24x128xf32, #tpu.memory_space<vmem>>, vector<1x16x128xf32>
    %126 = vector.shape_cast %125 : vector<1x16x128xf32> to vector<16x128xf32>
    %127 = vector.broadcast %45 : f32 to vector<16x128xf32>
    %128 = arith.mulf %126, %127 : vector<16x128xf32>
    %129 = arith.addf %124, %128 : vector<16x128xf32>
    %c1_108 = arith.constant 1 : index
    %c3_109 = arith.constant 3 : index
    %c0_110 = arith.constant 0 : index
    %130 = vector.load %arg7[%c1_108, %c3_109, %c0_110] : memref<6x24x128xf32, #tpu.memory_space<vmem>>, vector<1x16x128xf32>
    %131 = vector.shape_cast %130 : vector<1x16x128xf32> to vector<16x128xf32>
    %132 = vector.broadcast %52 : f32 to vector<16x128xf32>
    %133 = arith.mulf %131, %132 : vector<16x128xf32>
    %134 = arith.addf %129, %133 : vector<16x128xf32>
    %c1_111 = arith.constant 1 : index
    %c4_112 = arith.constant 4 : index
    %c0_113 = arith.constant 0 : index
    %135 = vector.load %arg7[%c1_111, %c4_112, %c0_113] : memref<6x24x128xf32, #tpu.memory_space<vmem>>, vector<1x16x128xf32>
    %136 = vector.shape_cast %135 : vector<1x16x128xf32> to vector<16x128xf32>
    %137 = vector.broadcast %59 : f32 to vector<16x128xf32>
    %138 = arith.mulf %136, %137 : vector<16x128xf32>
    %139 = arith.addf %134, %138 : vector<16x128xf32>
    %c1_114 = arith.constant 1 : index
    %c5_115 = arith.constant 5 : index
    %c0_116 = arith.constant 0 : index
    %140 = vector.load %arg7[%c1_114, %c5_115, %c0_116] : memref<6x24x128xf32, #tpu.memory_space<vmem>>, vector<1x16x128xf32>
    %141 = vector.shape_cast %140 : vector<1x16x128xf32> to vector<16x128xf32>
    %142 = vector.broadcast %66 : f32 to vector<16x128xf32>
    %143 = arith.mulf %141, %142 : vector<16x128xf32>
    %144 = arith.addf %139, %143 : vector<16x128xf32>
    %c1_117 = arith.constant 1 : index
    %c6_118 = arith.constant 6 : index
    %c0_119 = arith.constant 0 : index
    %145 = vector.load %arg7[%c1_117, %c6_118, %c0_119] : memref<6x24x128xf32, #tpu.memory_space<vmem>>, vector<1x16x128xf32>
    %146 = vector.shape_cast %145 : vector<1x16x128xf32> to vector<16x128xf32>
    %147 = vector.broadcast %73 : f32 to vector<16x128xf32>
    %148 = arith.mulf %146, %147 : vector<16x128xf32>
    %149 = arith.addf %144, %148 : vector<16x128xf32>
    %c2_120 = arith.constant 2 : index
    %c0_121 = arith.constant 0 : index
    %c0_122 = arith.constant 0 : index
    %150 = vector.load %arg7[%c2_120, %c0_121, %c0_122] : memref<6x24x128xf32, #tpu.memory_space<vmem>>, vector<1x16x128xf32>
    %151 = vector.shape_cast %150 : vector<1x16x128xf32> to vector<16x128xf32>
    %152 = vector.broadcast %32 : f32 to vector<16x128xf32>
    %153 = arith.mulf %151, %152 : vector<16x128xf32>
    %154 = arith.addf %149, %153 : vector<16x128xf32>
    %c2_123 = arith.constant 2 : index
    %c1_124 = arith.constant 1 : index
    %c0_125 = arith.constant 0 : index
    %155 = vector.load %arg7[%c2_123, %c1_124, %c0_125] : memref<6x24x128xf32, #tpu.memory_space<vmem>>, vector<1x16x128xf32>
    %156 = vector.shape_cast %155 : vector<1x16x128xf32> to vector<16x128xf32>
    %157 = vector.broadcast %39 : f32 to vector<16x128xf32>
    %158 = arith.mulf %156, %157 : vector<16x128xf32>
    %159 = arith.addf %154, %158 : vector<16x128xf32>
    %c2_126 = arith.constant 2 : index
    %c2_127 = arith.constant 2 : index
    %c0_128 = arith.constant 0 : index
    %160 = vector.load %arg7[%c2_126, %c2_127, %c0_128] : memref<6x24x128xf32, #tpu.memory_space<vmem>>, vector<1x16x128xf32>
    %161 = vector.shape_cast %160 : vector<1x16x128xf32> to vector<16x128xf32>
    %162 = vector.broadcast %46 : f32 to vector<16x128xf32>
    %163 = arith.mulf %161, %162 : vector<16x128xf32>
    %164 = arith.addf %159, %163 : vector<16x128xf32>
    %c2_129 = arith.constant 2 : index
    %c3_130 = arith.constant 3 : index
    %c0_131 = arith.constant 0 : index
    %165 = vector.load %arg7[%c2_129, %c3_130, %c0_131] : memref<6x24x128xf32, #tpu.memory_space<vmem>>, vector<1x16x128xf32>
    %166 = vector.shape_cast %165 : vector<1x16x128xf32> to vector<16x128xf32>
    %167 = vector.broadcast %53 : f32 to vector<16x128xf32>
    %168 = arith.mulf %166, %167 : vector<16x128xf32>
    %169 = arith.addf %164, %168 : vector<16x128xf32>
    %c2_132 = arith.constant 2 : index
    %c4_133 = arith.constant 4 : index
    %c0_134 = arith.constant 0 : index
    %170 = vector.load %arg7[%c2_132, %c4_133, %c0_134] : memref<6x24x128xf32, #tpu.memory_space<vmem>>, vector<1x16x128xf32>
    %171 = vector.shape_cast %170 : vector<1x16x128xf32> to vector<16x128xf32>
    %172 = vector.broadcast %60 : f32 to vector<16x128xf32>
    %173 = arith.mulf %171, %172 : vector<16x128xf32>
    %174 = arith.addf %169, %173 : vector<16x128xf32>
    %c2_135 = arith.constant 2 : index
    %c5_136 = arith.constant 5 : index
    %c0_137 = arith.constant 0 : index
    %175 = vector.load %arg7[%c2_135, %c5_136, %c0_137] : memref<6x24x128xf32, #tpu.memory_space<vmem>>, vector<1x16x128xf32>
    %176 = vector.shape_cast %175 : vector<1x16x128xf32> to vector<16x128xf32>
    %177 = vector.broadcast %67 : f32 to vector<16x128xf32>
    %178 = arith.mulf %176, %177 : vector<16x128xf32>
    %179 = arith.addf %174, %178 : vector<16x128xf32>
    %c2_138 = arith.constant 2 : index
    %c6_139 = arith.constant 6 : index
    %c0_140 = arith.constant 0 : index
    %180 = vector.load %arg7[%c2_138, %c6_139, %c0_140] : memref<6x24x128xf32, #tpu.memory_space<vmem>>, vector<1x16x128xf32>
    %181 = vector.shape_cast %180 : vector<1x16x128xf32> to vector<16x128xf32>
    %182 = vector.broadcast %74 : f32 to vector<16x128xf32>
    %183 = arith.mulf %181, %182 : vector<16x128xf32>
    %184 = arith.addf %179, %183 : vector<16x128xf32>
    %c0_141 = arith.constant 0 : index
    %c0_142 = arith.constant 0 : index
    %185 = vector.load %arg6[%c0_141, %c0_142] : memref<24x128xf32, #tpu.memory_space<vmem>>, vector<16x128xf32>
    %186 = vector.broadcast %33 : f32 to vector<16x128xf32>
    %187 = arith.mulf %185, %186 : vector<16x128xf32>
    %188 = arith.addf %184, %187 : vector<16x128xf32>
    %c1_143 = arith.constant 1 : index
    %c0_144 = arith.constant 0 : index
    %189 = vector.load %arg6[%c1_143, %c0_144] : memref<24x128xf32, #tpu.memory_space<vmem>>, vector<16x128xf32>
    %190 = vector.broadcast %40 : f32 to vector<16x128xf32>
    %191 = arith.mulf %189, %190 : vector<16x128xf32>
    %192 = arith.addf %188, %191 : vector<16x128xf32>
    %c2_145 = arith.constant 2 : index
    %c0_146 = arith.constant 0 : index
    %193 = vector.load %arg6[%c2_145, %c0_146] : memref<24x128xf32, #tpu.memory_space<vmem>>, vector<16x128xf32>
    %194 = vector.broadcast %47 : f32 to vector<16x128xf32>
    %195 = arith.mulf %193, %194 : vector<16x128xf32>
    %196 = arith.addf %192, %195 : vector<16x128xf32>
    %c3_147 = arith.constant 3 : index
    %c0_148 = arith.constant 0 : index
    %197 = vector.load %arg6[%c3_147, %c0_148] : memref<24x128xf32, #tpu.memory_space<vmem>>, vector<16x128xf32>
    %198 = vector.broadcast %54 : f32 to vector<16x128xf32>
    %199 = arith.mulf %197, %198 : vector<16x128xf32>
    %200 = arith.addf %196, %199 : vector<16x128xf32>
    %c4_149 = arith.constant 4 : index
    %c0_150 = arith.constant 0 : index
    %201 = vector.load %arg6[%c4_149, %c0_150] : memref<24x128xf32, #tpu.memory_space<vmem>>, vector<16x128xf32>
    %202 = vector.broadcast %61 : f32 to vector<16x128xf32>
    %203 = arith.mulf %201, %202 : vector<16x128xf32>
    %204 = arith.addf %200, %203 : vector<16x128xf32>
    %c5_151 = arith.constant 5 : index
    %c0_152 = arith.constant 0 : index
    %205 = vector.load %arg6[%c5_151, %c0_152] : memref<24x128xf32, #tpu.memory_space<vmem>>, vector<16x128xf32>
    %206 = vector.broadcast %68 : f32 to vector<16x128xf32>
    %207 = arith.mulf %205, %206 : vector<16x128xf32>
    %208 = arith.addf %204, %207 : vector<16x128xf32>
    %c6_153 = arith.constant 6 : index
    %c0_154 = arith.constant 0 : index
    %209 = vector.load %arg6[%c6_153, %c0_154] : memref<24x128xf32, #tpu.memory_space<vmem>>, vector<16x128xf32>
    %210 = vector.broadcast %75 : f32 to vector<16x128xf32>
    %211 = arith.mulf %209, %210 : vector<16x128xf32>
    %212 = arith.addf %208, %211 : vector<16x128xf32>
    %c3_155 = arith.constant 3 : index
    %c0_156 = arith.constant 0 : index
    %c0_157 = arith.constant 0 : index
    %213 = vector.load %arg7[%c3_155, %c0_156, %c0_157] : memref<6x24x128xf32, #tpu.memory_space<vmem>>, vector<1x16x128xf32>
    %214 = vector.shape_cast %213 : vector<1x16x128xf32> to vector<16x128xf32>
    %215 = vector.broadcast %34 : f32 to vector<16x128xf32>
    %216 = arith.mulf %214, %215 : vector<16x128xf32>
    %217 = arith.addf %212, %216 : vector<16x128xf32>
    %c3_158 = arith.constant 3 : index
    %c1_159 = arith.constant 1 : index
    %c0_160 = arith.constant 0 : index
    %218 = vector.load %arg7[%c3_158, %c1_159, %c0_160] : memref<6x24x128xf32, #tpu.memory_space<vmem>>, vector<1x16x128xf32>
    %219 = vector.shape_cast %218 : vector<1x16x128xf32> to vector<16x128xf32>
    %220 = vector.broadcast %41 : f32 to vector<16x128xf32>
    %221 = arith.mulf %219, %220 : vector<16x128xf32>
    %222 = arith.addf %217, %221 : vector<16x128xf32>
    %c3_161 = arith.constant 3 : index
    %c2_162 = arith.constant 2 : index
    %c0_163 = arith.constant 0 : index
    %223 = vector.load %arg7[%c3_161, %c2_162, %c0_163] : memref<6x24x128xf32, #tpu.memory_space<vmem>>, vector<1x16x128xf32>
    %224 = vector.shape_cast %223 : vector<1x16x128xf32> to vector<16x128xf32>
    %225 = vector.broadcast %48 : f32 to vector<16x128xf32>
    %226 = arith.mulf %224, %225 : vector<16x128xf32>
    %227 = arith.addf %222, %226 : vector<16x128xf32>
    %c3_164 = arith.constant 3 : index
    %c3_165 = arith.constant 3 : index
    %c0_166 = arith.constant 0 : index
    %228 = vector.load %arg7[%c3_164, %c3_165, %c0_166] : memref<6x24x128xf32, #tpu.memory_space<vmem>>, vector<1x16x128xf32>
    %229 = vector.shape_cast %228 : vector<1x16x128xf32> to vector<16x128xf32>
    %230 = vector.broadcast %55 : f32 to vector<16x128xf32>
    %231 = arith.mulf %229, %230 : vector<16x128xf32>
    %232 = arith.addf %227, %231 : vector<16x128xf32>
    %c3_167 = arith.constant 3 : index
    %c4_168 = arith.constant 4 : index
    %c0_169 = arith.constant 0 : index
    %233 = vector.load %arg7[%c3_167, %c4_168, %c0_169] : memref<6x24x128xf32, #tpu.memory_space<vmem>>, vector<1x16x128xf32>
    %234 = vector.shape_cast %233 : vector<1x16x128xf32> to vector<16x128xf32>
    %235 = vector.broadcast %62 : f32 to vector<16x128xf32>
    %236 = arith.mulf %234, %235 : vector<16x128xf32>
    %237 = arith.addf %232, %236 : vector<16x128xf32>
    %c3_170 = arith.constant 3 : index
    %c5_171 = arith.constant 5 : index
    %c0_172 = arith.constant 0 : index
    %238 = vector.load %arg7[%c3_170, %c5_171, %c0_172] : memref<6x24x128xf32, #tpu.memory_space<vmem>>, vector<1x16x128xf32>
    %239 = vector.shape_cast %238 : vector<1x16x128xf32> to vector<16x128xf32>
    %240 = vector.broadcast %69 : f32 to vector<16x128xf32>
    %241 = arith.mulf %239, %240 : vector<16x128xf32>
    %242 = arith.addf %237, %241 : vector<16x128xf32>
    %c3_173 = arith.constant 3 : index
    %c6_174 = arith.constant 6 : index
    %c0_175 = arith.constant 0 : index
    %243 = vector.load %arg7[%c3_173, %c6_174, %c0_175] : memref<6x24x128xf32, #tpu.memory_space<vmem>>, vector<1x16x128xf32>
    %244 = vector.shape_cast %243 : vector<1x16x128xf32> to vector<16x128xf32>
    %245 = vector.broadcast %76 : f32 to vector<16x128xf32>
    %246 = arith.mulf %244, %245 : vector<16x128xf32>
    %247 = arith.addf %242, %246 : vector<16x128xf32>
    %c4_176 = arith.constant 4 : index
    %c0_177 = arith.constant 0 : index
    %c0_178 = arith.constant 0 : index
    %248 = vector.load %arg7[%c4_176, %c0_177, %c0_178] : memref<6x24x128xf32, #tpu.memory_space<vmem>>, vector<1x16x128xf32>
    %249 = vector.shape_cast %248 : vector<1x16x128xf32> to vector<16x128xf32>
    %250 = vector.broadcast %35 : f32 to vector<16x128xf32>
    %251 = arith.mulf %249, %250 : vector<16x128xf32>
    %252 = arith.addf %247, %251 : vector<16x128xf32>
    %c4_179 = arith.constant 4 : index
    %c1_180 = arith.constant 1 : index
    %c0_181 = arith.constant 0 : index
    %253 = vector.load %arg7[%c4_179, %c1_180, %c0_181] : memref<6x24x128xf32, #tpu.memory_space<vmem>>, vector<1x16x128xf32>
    %254 = vector.shape_cast %253 : vector<1x16x128xf32> to vector<16x128xf32>
    %255 = vector.broadcast %42 : f32 to vector<16x128xf32>
    %256 = arith.mulf %254, %255 : vector<16x128xf32>
    %257 = arith.addf %252, %256 : vector<16x128xf32>
    %c4_182 = arith.constant 4 : index
    %c2_183 = arith.constant 2 : index
    %c0_184 = arith.constant 0 : index
    %258 = vector.load %arg7[%c4_182, %c2_183, %c0_184] : memref<6x24x128xf32, #tpu.memory_space<vmem>>, vector<1x16x128xf32>
    %259 = vector.shape_cast %258 : vector<1x16x128xf32> to vector<16x128xf32>
    %260 = vector.broadcast %49 : f32 to vector<16x128xf32>
    %261 = arith.mulf %259, %260 : vector<16x128xf32>
    %262 = arith.addf %257, %261 : vector<16x128xf32>
    %c4_185 = arith.constant 4 : index
    %c3_186 = arith.constant 3 : index
    %c0_187 = arith.constant 0 : index
    %263 = vector.load %arg7[%c4_185, %c3_186, %c0_187] : memref<6x24x128xf32, #tpu.memory_space<vmem>>, vector<1x16x128xf32>
    %264 = vector.shape_cast %263 : vector<1x16x128xf32> to vector<16x128xf32>
    %265 = vector.broadcast %56 : f32 to vector<16x128xf32>
    %266 = arith.mulf %264, %265 : vector<16x128xf32>
    %267 = arith.addf %262, %266 : vector<16x128xf32>
    %c4_188 = arith.constant 4 : index
    %c4_189 = arith.constant 4 : index
    %c0_190 = arith.constant 0 : index
    %268 = vector.load %arg7[%c4_188, %c4_189, %c0_190] : memref<6x24x128xf32, #tpu.memory_space<vmem>>, vector<1x16x128xf32>
    %269 = vector.shape_cast %268 : vector<1x16x128xf32> to vector<16x128xf32>
    %270 = vector.broadcast %63 : f32 to vector<16x128xf32>
    %271 = arith.mulf %269, %270 : vector<16x128xf32>
    %272 = arith.addf %267, %271 : vector<16x128xf32>
    %c4_191 = arith.constant 4 : index
    %c5_192 = arith.constant 5 : index
    %c0_193 = arith.constant 0 : index
    %273 = vector.load %arg7[%c4_191, %c5_192, %c0_193] : memref<6x24x128xf32, #tpu.memory_space<vmem>>, vector<1x16x128xf32>
    %274 = vector.shape_cast %273 : vector<1x16x128xf32> to vector<16x128xf32>
    %275 = vector.broadcast %70 : f32 to vector<16x128xf32>
    %276 = arith.mulf %274, %275 : vector<16x128xf32>
    %277 = arith.addf %272, %276 : vector<16x128xf32>
    %c4_194 = arith.constant 4 : index
    %c6_195 = arith.constant 6 : index
    %c0_196 = arith.constant 0 : index
    %278 = vector.load %arg7[%c4_194, %c6_195, %c0_196] : memref<6x24x128xf32, #tpu.memory_space<vmem>>, vector<1x16x128xf32>
    %279 = vector.shape_cast %278 : vector<1x16x128xf32> to vector<16x128xf32>
    %280 = vector.broadcast %77 : f32 to vector<16x128xf32>
    %281 = arith.mulf %279, %280 : vector<16x128xf32>
    %282 = arith.addf %277, %281 : vector<16x128xf32>
    %c5_197 = arith.constant 5 : index
    %c0_198 = arith.constant 0 : index
    %c0_199 = arith.constant 0 : index
    %283 = vector.load %arg7[%c5_197, %c0_198, %c0_199] : memref<6x24x128xf32, #tpu.memory_space<vmem>>, vector<1x16x128xf32>
    %284 = vector.shape_cast %283 : vector<1x16x128xf32> to vector<16x128xf32>
    %285 = vector.broadcast %36 : f32 to vector<16x128xf32>
    %286 = arith.mulf %284, %285 : vector<16x128xf32>
    %287 = arith.addf %282, %286 : vector<16x128xf32>
    %c5_200 = arith.constant 5 : index
    %c1_201 = arith.constant 1 : index
    %c0_202 = arith.constant 0 : index
    %288 = vector.load %arg7[%c5_200, %c1_201, %c0_202] : memref<6x24x128xf32, #tpu.memory_space<vmem>>, vector<1x16x128xf32>
    %289 = vector.shape_cast %288 : vector<1x16x128xf32> to vector<16x128xf32>
    %290 = vector.broadcast %43 : f32 to vector<16x128xf32>
    %291 = arith.mulf %289, %290 : vector<16x128xf32>
    %292 = arith.addf %287, %291 : vector<16x128xf32>
    %c5_203 = arith.constant 5 : index
    %c2_204 = arith.constant 2 : index
    %c0_205 = arith.constant 0 : index
    %293 = vector.load %arg7[%c5_203, %c2_204, %c0_205] : memref<6x24x128xf32, #tpu.memory_space<vmem>>, vector<1x16x128xf32>
    %294 = vector.shape_cast %293 : vector<1x16x128xf32> to vector<16x128xf32>
    %295 = vector.broadcast %50 : f32 to vector<16x128xf32>
    %296 = arith.mulf %294, %295 : vector<16x128xf32>
    %297 = arith.addf %292, %296 : vector<16x128xf32>
    %c5_206 = arith.constant 5 : index
    %c3_207 = arith.constant 3 : index
    %c0_208 = arith.constant 0 : index
    %298 = vector.load %arg7[%c5_206, %c3_207, %c0_208] : memref<6x24x128xf32, #tpu.memory_space<vmem>>, vector<1x16x128xf32>
    %299 = vector.shape_cast %298 : vector<1x16x128xf32> to vector<16x128xf32>
    %300 = vector.broadcast %57 : f32 to vector<16x128xf32>
    %301 = arith.mulf %299, %300 : vector<16x128xf32>
    %302 = arith.addf %297, %301 : vector<16x128xf32>
    %c5_209 = arith.constant 5 : index
    %c4_210 = arith.constant 4 : index
    %c0_211 = arith.constant 0 : index
    %303 = vector.load %arg7[%c5_209, %c4_210, %c0_211] : memref<6x24x128xf32, #tpu.memory_space<vmem>>, vector<1x16x128xf32>
    %304 = vector.shape_cast %303 : vector<1x16x128xf32> to vector<16x128xf32>
    %305 = vector.broadcast %64 : f32 to vector<16x128xf32>
    %306 = arith.mulf %304, %305 : vector<16x128xf32>
    %307 = arith.addf %302, %306 : vector<16x128xf32>
    %c5_212 = arith.constant 5 : index
    %c5_213 = arith.constant 5 : index
    %c0_214 = arith.constant 0 : index
    %308 = vector.load %arg7[%c5_212, %c5_213, %c0_214] : memref<6x24x128xf32, #tpu.memory_space<vmem>>, vector<1x16x128xf32>
    %309 = vector.shape_cast %308 : vector<1x16x128xf32> to vector<16x128xf32>
    %310 = vector.broadcast %71 : f32 to vector<16x128xf32>
    %311 = arith.mulf %309, %310 : vector<16x128xf32>
    %312 = arith.addf %307, %311 : vector<16x128xf32>
    %c5_215 = arith.constant 5 : index
    %c6_216 = arith.constant 6 : index
    %c0_217 = arith.constant 0 : index
    %313 = vector.load %arg7[%c5_215, %c6_216, %c0_217] : memref<6x24x128xf32, #tpu.memory_space<vmem>>, vector<1x16x128xf32>
    %314 = vector.shape_cast %313 : vector<1x16x128xf32> to vector<16x128xf32>
    %315 = vector.broadcast %78 : f32 to vector<16x128xf32>
    %316 = arith.mulf %314, %315 : vector<16x128xf32>
    %317 = arith.addf %312, %316 : vector<16x128xf32>
    %c0_218 = arith.constant 0 : index
    %c0_219 = arith.constant 0 : index
    %c0_220 = arith.constant 0 : index
    %318 = vector.load %arg8[%c0_218, %c0_219, %c0_220] : memref<4x16x128xf32, #tpu.memory_space<vmem>>, vector<1x16x128xf32>
    %319 = vector.shape_cast %318 : vector<1x16x128xf32> to vector<16x128xf32>
    %320 = vector.shape_cast %317 : vector<16x128xf32> to vector<1x16x128xf32>
    tpu.vector_store %arg8[%c0_218, %c0_219, %c0_220], %320 {strides = array<i32>} : memref<4x16x128xf32, #tpu.memory_space<vmem>>, vector<1x16x128xf32>,
    %c0_221 = arith.constant 0 : index
    %c1_222 = arith.constant 1 : index
    %c0_223 = arith.constant 0 : index
    %c0_224 = arith.constant 0 : index
    %321 = vector.load %arg1[%c0_221, %c1_222, %c0_223, %c0_224] : memref<1x4x16x16xf32, #tpu.memory_space<vmem>>, vector<1x1x16x16xf32>
    %322 = vector.shape_cast %321 : vector<1x1x16x16xf32> to vector<16x16xf32>
    %c3_225 = arith.constant 3 : index
    %c0_226 = arith.constant 0 : index
    %323 = vector.load %arg6[%c3_225, %c0_226] : memref<24x128xf32, #tpu.memory_space<vmem>>, vector<16x16xf32>
    tpu.vector_store %arg6[%c3_225, %c0_226], %322 {strides = array<i32>} : memref<24x128xf32, #tpu.memory_space<vmem>>, vector<16x16xf32>,
    %c0_227 = arith.constant 0 : index
    %c0_228 = arith.constant 0 : index
    %324 = vector.load %arg6[%c0_227, %c0_228] : memref<24x128xf32, #tpu.memory_space<vmem>>, vector<24x128xf32>
    %c3_i32_229 = arith.constant 3 : i32
    %325 = tpu.dynamic_rotate %324 by %c3_i32_229 dim 1 : vector<24x128xf32>, i32 -> vector<24x128xf32>
    %c0_230 = arith.constant 0 : index
    %c0_231 = arith.constant 0 : index
    %c0_232 = arith.constant 0 : index
    %326 = vector.load %arg7[%c0_230, %c0_231, %c0_232] : memref<6x24x128xf32, #tpu.memory_space<vmem>>, vector<1x24x128xf32>
    %327 = vector.shape_cast %326 : vector<1x24x128xf32> to vector<24x128xf32>
    %328 = vector.shape_cast %325 : vector<24x128xf32> to vector<1x24x128xf32>
    tpu.vector_store %arg7[%c0_230, %c0_231, %c0_232], %328 {strides = array<i32>} : memref<6x24x128xf32, #tpu.memory_space<vmem>>, vector<1x24x128xf32>,
    %c2_i32_233 = arith.constant 2 : i32
    %329 = tpu.dynamic_rotate %324 by %c2_i32_233 dim 1 : vector<24x128xf32>, i32 -> vector<24x128xf32>
    %c1_234 = arith.constant 1 : index
    %c0_235 = arith.constant 0 : index
    %c0_236 = arith.constant 0 : index
    %330 = vector.load %arg7[%c1_234, %c0_235, %c0_236] : memref<6x24x128xf32, #tpu.memory_space<vmem>>, vector<1x24x128xf32>
    %331 = vector.shape_cast %330 : vector<1x24x128xf32> to vector<24x128xf32>
    %332 = vector.shape_cast %329 : vector<24x128xf32> to vector<1x24x128xf32>
    tpu.vector_store %arg7[%c1_234, %c0_235, %c0_236], %332 {strides = array<i32>} : memref<6x24x128xf32, #tpu.memory_space<vmem>>, vector<1x24x128xf32>,
    %c1_i32_237 = arith.constant 1 : i32
    %333 = tpu.dynamic_rotate %324 by %c1_i32_237 dim 1 : vector<24x128xf32>, i32 -> vector<24x128xf32>
    %c2_238 = arith.constant 2 : index
    %c0_239 = arith.constant 0 : index
    %c0_240 = arith.constant 0 : index
    %334 = vector.load %arg7[%c2_238, %c0_239, %c0_240] : memref<6x24x128xf32, #tpu.memory_space<vmem>>, vector<1x24x128xf32>
    %335 = vector.shape_cast %334 : vector<1x24x128xf32> to vector<24x128xf32>
    %336 = vector.shape_cast %333 : vector<24x128xf32> to vector<1x24x128xf32>
    tpu.vector_store %arg7[%c2_238, %c0_239, %c0_240], %336 {strides = array<i32>} : memref<6x24x128xf32, #tpu.memory_space<vmem>>, vector<1x24x128xf32>,
    %c127_i32_241 = arith.constant 127 : i32
    %337 = tpu.dynamic_rotate %324 by %c127_i32_241 dim 1 : vector<24x128xf32>, i32 -> vector<24x128xf32>
    %c3_242 = arith.constant 3 : index
    %c0_243 = arith.constant 0 : index
    %c0_244 = arith.constant 0 : index
    %338 = vector.load %arg7[%c3_242, %c0_243, %c0_244] : memref<6x24x128xf32, #tpu.memory_space<vmem>>, vector<1x24x128xf32>
    %339 = vector.shape_cast %338 : vector<1x24x128xf32> to vector<24x128xf32>
    %340 = vector.shape_cast %337 : vector<24x128xf32> to vector<1x24x128xf32>
    tpu.vector_store %arg7[%c3_242, %c0_243, %c0_244], %340 {strides = array<i32>} : memref<6x24x128xf32, #tpu.memory_space<vmem>>, vector<1x24x128xf32>,
    %c126_i32_245 = arith.constant 126 : i32
    %341 = tpu.dynamic_rotate %324 by %c126_i32_245 dim 1 : vector<24x128xf32>, i32 -> vector<24x128xf32>
    %c4_246 = arith.constant 4 : index
    %c0_247 = arith.constant 0 : index
    %c0_248 = arith.constant 0 : index
    %342 = vector.load %arg7[%c4_246, %c0_247, %c0_248] : memref<6x24x128xf32, #tpu.memory_space<vmem>>, vector<1x24x128xf32>
    %343 = vector.shape_cast %342 : vector<1x24x128xf32> to vector<24x128xf32>
    %344 = vector.shape_cast %341 : vector<24x128xf32> to vector<1x24x128xf32>
    tpu.vector_store %arg7[%c4_246, %c0_247, %c0_248], %344 {strides = array<i32>} : memref<6x24x128xf32, #tpu.memory_space<vmem>>, vector<1x24x128xf32>,
    %c125_i32_249 = arith.constant 125 : i32
    %345 = tpu.dynamic_rotate %324 by %c125_i32_249 dim 1 : vector<24x128xf32>, i32 -> vector<24x128xf32>
    %c5_250 = arith.constant 5 : index
    %c0_251 = arith.constant 0 : index
    %c0_252 = arith.constant 0 : index
    %346 = vector.load %arg7[%c5_250, %c0_251, %c0_252] : memref<6x24x128xf32, #tpu.memory_space<vmem>>, vector<1x24x128xf32>
    %347 = vector.shape_cast %346 : vector<1x24x128xf32> to vector<24x128xf32>
    %348 = vector.shape_cast %345 : vector<24x128xf32> to vector<1x24x128xf32>
    tpu.vector_store %arg7[%c5_250, %c0_251, %c0_252], %348 {strides = array<i32>} : memref<6x24x128xf32, #tpu.memory_space<vmem>>, vector<1x24x128xf32>,
    %c1_253 = arith.constant 1 : index
    %c0_254 = arith.constant 0 : index
    %349 = memref.load %arg2[%c1_253, %c0_254] : memref<4x49xf32, #tpu.memory_space<smem>>
    %c1_255 = arith.constant 1 : index
    %c1_256 = arith.constant 1 : index
    %350 = memref.load %arg2[%c1_255, %c1_256] : memref<4x49xf32, #tpu.memory_space<smem>>
    %c1_257 = arith.constant 1 : index
    %c2_258 = arith.constant 2 : index
    %351 = memref.load %arg2[%c1_257, %c2_258] : memref<4x49xf32, #tpu.memory_space<smem>>
    %c1_259 = arith.constant 1 : index
    %c3_260 = arith.constant 3 : index
    %352 = memref.load %arg2[%c1_259, %c3_260] : memref<4x49xf32, #tpu.memory_space<smem>>
    %c1_261 = arith.constant 1 : index
    %c4_262 = arith.constant 4 : index
    %353 = memref.load %arg2[%c1_261, %c4_262] : memref<4x49xf32, #tpu.memory_space<smem>>
    %c1_263 = arith.constant 1 : index
    %c5_264 = arith.constant 5 : index
    %354 = memref.load %arg2[%c1_263, %c5_264] : memref<4x49xf32, #tpu.memory_space<smem>>
    %c1_265 = arith.constant 1 : index
    %c6_266 = arith.constant 6 : index
    %355 = memref.load %arg2[%c1_265, %c6_266] : memref<4x49xf32, #tpu.memory_space<smem>>
    %c1_267 = arith.constant 1 : index
    %c7_268 = arith.constant 7 : index
    %356 = memref.load %arg2[%c1_267, %c7_268] : memref<4x49xf32, #tpu.memory_space<smem>>
    %c1_269 = arith.constant 1 : index
    %c8_270 = arith.constant 8 : index
    %357 = memref.load %arg2[%c1_269, %c8_270] : memref<4x49xf32, #tpu.memory_space<smem>>
    %c1_271 = arith.constant 1 : index
    %c9_272 = arith.constant 9 : index
    %358 = memref.load %arg2[%c1_271, %c9_272] : memref<4x49xf32, #tpu.memory_space<smem>>
    %c1_273 = arith.constant 1 : index
    %c10_274 = arith.constant 10 : index
    %359 = memref.load %arg2[%c1_273, %c10_274] : memref<4x49xf32, #tpu.memory_space<smem>>
    %c1_275 = arith.constant 1 : index
    %c11_276 = arith.constant 11 : index
    %360 = memref.load %arg2[%c1_275, %c11_276] : memref<4x49xf32, #tpu.memory_space<smem>>
    %c1_277 = arith.constant 1 : index
    %c12_278 = arith.constant 12 : index
    %361 = memref.load %arg2[%c1_277, %c12_278] : memref<4x49xf32, #tpu.memory_space<smem>>
    %c1_279 = arith.constant 1 : index
    %c13_280 = arith.constant 13 : index
    %362 = memref.load %arg2[%c1_279, %c13_280] : memref<4x49xf32, #tpu.memory_space<smem>>
    %c1_281 = arith.constant 1 : index
    %c14_282 = arith.constant 14 : index
    %363 = memref.load %arg2[%c1_281, %c14_282] : memref<4x49xf32, #tpu.memory_space<smem>>
    %c1_283 = arith.constant 1 : index
    %c15_284 = arith.constant 15 : index
    %364 = memref.load %arg2[%c1_283, %c15_284] : memref<4x49xf32, #tpu.memory_space<smem>>
    %c1_285 = arith.constant 1 : index
    %c16_286 = arith.constant 16 : index
    %365 = memref.load %arg2[%c1_285, %c16_286] : memref<4x49xf32, #tpu.memory_space<smem>>
    %c1_287 = arith.constant 1 : index
    %c17_288 = arith.constant 17 : index
    %366 = memref.load %arg2[%c1_287, %c17_288] : memref<4x49xf32, #tpu.memory_space<smem>>
    %c1_289 = arith.constant 1 : index
    %c18_290 = arith.constant 18 : index
    %367 = memref.load %arg2[%c1_289, %c18_290] : memref<4x49xf32, #tpu.memory_space<smem>>
    %c1_291 = arith.constant 1 : index
    %c19_292 = arith.constant 19 : index
    %368 = memref.load %arg2[%c1_291, %c19_292] : memref<4x49xf32, #tpu.memory_space<smem>>
    %c1_293 = arith.constant 1 : index
    %c20_294 = arith.constant 20 : index
    %369 = memref.load %arg2[%c1_293, %c20_294] : memref<4x49xf32, #tpu.memory_space<smem>>
    %c1_295 = arith.constant 1 : index
    %c21_296 = arith.constant 21 : index
    %370 = memref.load %arg2[%c1_295, %c21_296] : memref<4x49xf32, #tpu.memory_space<smem>>
    %c1_297 = arith.constant 1 : index
    %c22_298 = arith.constant 22 : index
    %371 = memref.load %arg2[%c1_297, %c22_298] : memref<4x49xf32, #tpu.memory_space<smem>>
    %c1_299 = arith.constant 1 : index
    %c23_300 = arith.constant 23 : index
    %372 = memref.load %arg2[%c1_299, %c23_300] : memref<4x49xf32, #tpu.memory_space<smem>>
    %c1_301 = arith.constant 1 : index
    %c24_302 = arith.constant 24 : index
    %373 = memref.load %arg2[%c1_301, %c24_302] : memref<4x49xf32, #tpu.memory_space<smem>>
    %c1_303 = arith.constant 1 : index
    %c25_304 = arith.constant 25 : index
    %374 = memref.load %arg2[%c1_303, %c25_304] : memref<4x49xf32, #tpu.memory_space<smem>>
    %c1_305 = arith.constant 1 : index
    %c26_306 = arith.constant 26 : index
    %375 = memref.load %arg2[%c1_305, %c26_306] : memref<4x49xf32, #tpu.memory_space<smem>>
    %c1_307 = arith.constant 1 : index
    %c27_308 = arith.constant 27 : index
    %376 = memref.load %arg2[%c1_307, %c27_308] : memref<4x49xf32, #tpu.memory_space<smem>>
    %c1_309 = arith.constant 1 : index
    %c28_310 = arith.constant 28 : index
    %377 = memref.load %arg2[%c1_309, %c28_310] : memref<4x49xf32, #tpu.memory_space<smem>>
    %c1_311 = arith.constant 1 : index
    %c29_312 = arith.constant 29 : index
    %378 = memref.load %arg2[%c1_311, %c29_312] : memref<4x49xf32, #tpu.memory_space<smem>>
    %c1_313 = arith.constant 1 : index
    %c30_314 = arith.constant 30 : index
    %379 = memref.load %arg2[%c1_313, %c30_314] : memref<4x49xf32, #tpu.memory_space<smem>>
    %c1_315 = arith.constant 1 : index
    %c31_316 = arith.constant 31 : index
    %380 = memref.load %arg2[%c1_315, %c31_316] : memref<4x49xf32, #tpu.memory_space<smem>>
    %c1_317 = arith.constant 1 : index
    %c32_318 = arith.constant 32 : index
    %381 = memref.load %arg2[%c1_317, %c32_318] : memref<4x49xf32, #tpu.memory_space<smem>>
    %c1_319 = arith.constant 1 : index
    %c33_320 = arith.constant 33 : index
    %382 = memref.load %arg2[%c1_319, %c33_320] : memref<4x49xf32, #tpu.memory_space<smem>>
    %c1_321 = arith.constant 1 : index
    %c34_322 = arith.constant 34 : index
    %383 = memref.load %arg2[%c1_321, %c34_322] : memref<4x49xf32, #tpu.memory_space<smem>>
    %c1_323 = arith.constant 1 : index
    %c35_324 = arith.constant 35 : index
    %384 = memref.load %arg2[%c1_323, %c35_324] : memref<4x49xf32, #tpu.memory_space<smem>>
    %c1_325 = arith.constant 1 : index
    %c36_326 = arith.constant 36 : index
    %385 = memref.load %arg2[%c1_325, %c36_326] : memref<4x49xf32, #tpu.memory_space<smem>>
    %c1_327 = arith.constant 1 : index
    %c37_328 = arith.constant 37 : index
    %386 = memref.load %arg2[%c1_327, %c37_328] : memref<4x49xf32, #tpu.memory_space<smem>>
    %c1_329 = arith.constant 1 : index
    %c38_330 = arith.constant 38 : index
    %387 = memref.load %arg2[%c1_329, %c38_330] : memref<4x49xf32, #tpu.memory_space<smem>>
    %c1_331 = arith.constant 1 : index
    %c39_332 = arith.constant 39 : index
    %388 = memref.load %arg2[%c1_331, %c39_332] : memref<4x49xf32, #tpu.memory_space<smem>>
    %c1_333 = arith.constant 1 : index
    %c40_334 = arith.constant 40 : index
    %389 = memref.load %arg2[%c1_333, %c40_334] : memref<4x49xf32, #tpu.memory_space<smem>>
    %c1_335 = arith.constant 1 : index
    %c41_336 = arith.constant 41 : index
    %390 = memref.load %arg2[%c1_335, %c41_336] : memref<4x49xf32, #tpu.memory_space<smem>>
    %c1_337 = arith.constant 1 : index
    %c42_338 = arith.constant 42 : index
    %391 = memref.load %arg2[%c1_337, %c42_338] : memref<4x49xf32, #tpu.memory_space<smem>>
    %c1_339 = arith.constant 1 : index
    %c43_340 = arith.constant 43 : index
    %392 = memref.load %arg2[%c1_339, %c43_340] : memref<4x49xf32, #tpu.memory_space<smem>>
    %c1_341 = arith.constant 1 : index
    %c44_342 = arith.constant 44 : index
    %393 = memref.load %arg2[%c1_341, %c44_342] : memref<4x49xf32, #tpu.memory_space<smem>>
    %c1_343 = arith.constant 1 : index
    %c45_344 = arith.constant 45 : index
    %394 = memref.load %arg2[%c1_343, %c45_344] : memref<4x49xf32, #tpu.memory_space<smem>>
    %c1_345 = arith.constant 1 : index
    %c46_346 = arith.constant 46 : index
    %395 = memref.load %arg2[%c1_345, %c46_346] : memref<4x49xf32, #tpu.memory_space<smem>>
    %c1_347 = arith.constant 1 : index
    %c47_348 = arith.constant 47 : index
    %396 = memref.load %arg2[%c1_347, %c47_348] : memref<4x49xf32, #tpu.memory_space<smem>>
    %c1_349 = arith.constant 1 : index
    %c48_350 = arith.constant 48 : index
    %397 = memref.load %arg2[%c1_349, %c48_350] : memref<4x49xf32, #tpu.memory_space<smem>>
    %cst_351 = arith.constant 0.000000e+00 : f32
    %398 = vector.broadcast %cst_351 : f32 to vector<16x128xf32>
    %c0_352 = arith.constant 0 : index
    %c0_353 = arith.constant 0 : index
    %c0_354 = arith.constant 0 : index
    %399 = vector.load %arg7[%c0_352, %c0_353, %c0_354] : memref<6x24x128xf32, #tpu.memory_space<vmem>>, vector<1x16x128xf32>
    %400 = vector.shape_cast %399 : vector<1x16x128xf32> to vector<16x128xf32>
    %401 = vector.broadcast %349 : f32 to vector<16x128xf32>
    %402 = arith.mulf %400, %401 : vector<16x128xf32>
    %403 = arith.addf %398, %402 : vector<16x128xf32>
    %c0_355 = arith.constant 0 : index
    %c1_356 = arith.constant 1 : index
    %c0_357 = arith.constant 0 : index
    %404 = vector.load %arg7[%c0_355, %c1_356, %c0_357] : memref<6x24x128xf32, #tpu.memory_space<vmem>>, vector<1x16x128xf32>
    %405 = vector.shape_cast %404 : vector<1x16x128xf32> to vector<16x128xf32>
    %406 = vector.broadcast %356 : f32 to vector<16x128xf32>
    %407 = arith.mulf %405, %406 : vector<16x128xf32>
    %408 = arith.addf %403, %407 : vector<16x128xf32>
    %c0_358 = arith.constant 0 : index
    %c2_359 = arith.constant 2 : index
    %c0_360 = arith.constant 0 : index
    %409 = vector.load %arg7[%c0_358, %c2_359, %c0_360] : memref<6x24x128xf32, #tpu.memory_space<vmem>>, vector<1x16x128xf32>
    %410 = vector.shape_cast %409 : vector<1x16x128xf32> to vector<16x128xf32>
    %411 = vector.broadcast %363 : f32 to vector<16x128xf32>
    %412 = arith.mulf %410, %411 : vector<16x128xf32>
    %413 = arith.addf %408, %412 : vector<16x128xf32>
    %c0_361 = arith.constant 0 : index
    %c3_362 = arith.constant 3 : index
    %c0_363 = arith.constant 0 : index
    %414 = vector.load %arg7[%c0_361, %c3_362, %c0_363] : memref<6x24x128xf32, #tpu.memory_space<vmem>>, vector<1x16x128xf32>
    %415 = vector.shape_cast %414 : vector<1x16x128xf32> to vector<16x128xf32>
    %416 = vector.broadcast %370 : f32 to vector<16x128xf32>
    %417 = arith.mulf %415, %416 : vector<16x128xf32>
    %418 = arith.addf %413, %417 : vector<16x128xf32>
    %c0_364 = arith.constant 0 : index
    %c4_365 = arith.constant 4 : index
    %c0_366 = arith.constant 0 : index
    %419 = vector.load %arg7[%c0_364, %c4_365, %c0_366] : memref<6x24x128xf32, #tpu.memory_space<vmem>>, vector<1x16x128xf32>
    %420 = vector.shape_cast %419 : vector<1x16x128xf32> to vector<16x128xf32>
    %421 = vector.broadcast %377 : f32 to vector<16x128xf32>
    %422 = arith.mulf %420, %421 : vector<16x128xf32>
    %423 = arith.addf %418, %422 : vector<16x128xf32>
    %c0_367 = arith.constant 0 : index
    %c5_368 = arith.constant 5 : index
    %c0_369 = arith.constant 0 : index
    %424 = vector.load %arg7[%c0_367, %c5_368, %c0_369] : memref<6x24x128xf32, #tpu.memory_space<vmem>>, vector<1x16x128xf32>
    %425 = vector.shape_cast %424 : vector<1x16x128xf32> to vector<16x128xf32>
    %426 = vector.broadcast %384 : f32 to vector<16x128xf32>
    %427 = arith.mulf %425, %426 : vector<16x128xf32>
    %428 = arith.addf %423, %427 : vector<16x128xf32>
    %c0_370 = arith.constant 0 : index
    %c6_371 = arith.constant 6 : index
    %c0_372 = arith.constant 0 : index
    %429 = vector.load %arg7[%c0_370, %c6_371, %c0_372] : memref<6x24x128xf32, #tpu.memory_space<vmem>>, vector<1x16x128xf32>
    %430 = vector.shape_cast %429 : vector<1x16x128xf32> to vector<16x128xf32>
    %431 = vector.broadcast %391 : f32 to vector<16x128xf32>
    %432 = arith.mulf %430, %431 : vector<16x128xf32>
    %433 = arith.addf %428, %432 : vector<16x128xf32>
    %c1_373 = arith.constant 1 : index
    %c0_374 = arith.constant 0 : index
    %c0_375 = arith.constant 0 : index
    %434 = vector.load %arg7[%c1_373, %c0_374, %c0_375] : memref<6x24x128xf32, #tpu.memory_space<vmem>>, vector<1x16x128xf32>
    %435 = vector.shape_cast %434 : vector<1x16x128xf32> to vector<16x128xf32>
    %436 = vector.broadcast %350 : f32 to vector<16x128xf32>
    %437 = arith.mulf %435, %436 : vector<16x128xf32>
    %438 = arith.addf %433, %437 : vector<16x128xf32>
    %c1_376 = arith.constant 1 : index
    %c1_377 = arith.constant 1 : index
    %c0_378 = arith.constant 0 : index
    %439 = vector.load %arg7[%c1_376, %c1_377, %c0_378] : memref<6x24x128xf32, #tpu.memory_space<vmem>>, vector<1x16x128xf32>
    %440 = vector.shape_cast %439 : vector<1x16x128xf32> to vector<16x128xf32>
    %441 = vector.broadcast %357 : f32 to vector<16x128xf32>
    %442 = arith.mulf %440, %441 : vector<16x128xf32>
    %443 = arith.addf %438, %442 : vector<16x128xf32>
    %c1_379 = arith.constant 1 : index
    %c2_380 = arith.constant 2 : index
    %c0_381 = arith.constant 0 : index
    %444 = vector.load %arg7[%c1_379, %c2_380, %c0_381] : memref<6x24x128xf32, #tpu.memory_space<vmem>>, vector<1x16x128xf32>
    %445 = vector.shape_cast %444 : vector<1x16x128xf32> to vector<16x128xf32>
    %446 = vector.broadcast %364 : f32 to vector<16x128xf32>
    %447 = arith.mulf %445, %446 : vector<16x128xf32>
    %448 = arith.addf %443, %447 : vector<16x128xf32>
    %c1_382 = arith.constant 1 : index
    %c3_383 = arith.constant 3 : index
    %c0_384 = arith.constant 0 : index
    %449 = vector.load %arg7[%c1_382, %c3_383, %c0_384] : memref<6x24x128xf32, #tpu.memory_space<vmem>>, vector<1x16x128xf32>
    %450 = vector.shape_cast %449 : vector<1x16x128xf32> to vector<16x128xf32>
    %451 = vector.broadcast %371 : f32 to vector<16x128xf32>
    %452 = arith.mulf %450, %451 : vector<16x128xf32>
    %453 = arith.addf %448, %452 : vector<16x128xf32>
    %c1_385 = arith.constant 1 : index
    %c4_386 = arith.constant 4 : index
    %c0_387 = arith.constant 0 : index
    %454 = vector.load %arg7[%c1_385, %c4_386, %c0_387] : memref<6x24x128xf32, #tpu.memory_space<vmem>>, vector<1x16x128xf32>
    %455 = vector.shape_cast %454 : vector<1x16x128xf32> to vector<16x128xf32>
    %456 = vector.broadcast %378 : f32 to vector<16x128xf32>
    %457 = arith.mulf %455, %456 : vector<16x128xf32>
    %458 = arith.addf %453, %457 : vector<16x128xf32>
    %c1_388 = arith.constant 1 : index
    %c5_389 = arith.constant 5 : index
    %c0_390 = arith.constant 0 : index
    %459 = vector.load %arg7[%c1_388, %c5_389, %c0_390] : memref<6x24x128xf32, #tpu.memory_space<vmem>>, vector<1x16x128xf32>
    %460 = vector.shape_cast %459 : vector<1x16x128xf32> to vector<16x128xf32>
    %461 = vector.broadcast %385 : f32 to vector<16x128xf32>
    %462 = arith.mulf %460, %461 : vector<16x128xf32>
    %463 = arith.addf %458, %462 : vector<16x128xf32>
    %c1_391 = arith.constant 1 : index
    %c6_392 = arith.constant 6 : index
    %c0_393 = arith.constant 0 : index
    %464 = vector.load %arg7[%c1_391, %c6_392, %c0_393] : memref<6x24x128xf32, #tpu.memory_space<vmem>>, vector<1x16x128xf32>
    %465 = vector.shape_cast %464 : vector<1x16x128xf32> to vector<16x128xf32>
    %466 = vector.broadcast %392 : f32 to vector<16x128xf32>
    %467 = arith.mulf %465, %466 : vector<16x128xf32>
    %468 = arith.addf %463, %467 : vector<16x128xf32>
    %c2_394 = arith.constant 2 : index
    %c0_395 = arith.constant 0 : index
    %c0_396 = arith.constant 0 : index
    %469 = vector.load %arg7[%c2_394, %c0_395, %c0_396] : memref<6x24x128xf32, #tpu.memory_space<vmem>>, vector<1x16x128xf32>
    %470 = vector.shape_cast %469 : vector<1x16x128xf32> to vector<16x128xf32>
    %471 = vector.broadcast %351 : f32 to vector<16x128xf32>
    %472 = arith.mulf %470, %471 : vector<16x128xf32>
    %473 = arith.addf %468, %472 : vector<16x128xf32>
    %c2_397 = arith.constant 2 : index
    %c1_398 = arith.constant 1 : index
    %c0_399 = arith.constant 0 : index
    %474 = vector.load %arg7[%c2_397, %c1_398, %c0_399] : memref<6x24x128xf32, #tpu.memory_space<vmem>>, vector<1x16x128xf32>
    %475 = vector.shape_cast %474 : vector<1x16x128xf32> to vector<16x128xf32>
    %476 = vector.broadcast %358 : f32 to vector<16x128xf32>
    %477 = arith.mulf %475, %476 : vector<16x128xf32>
    %478 = arith.addf %473, %477 : vector<16x128xf32>
    %c2_400 = arith.constant 2 : index
    %c2_401 = arith.constant 2 : index
    %c0_402 = arith.constant 0 : index
    %479 = vector.load %arg7[%c2_400, %c2_401, %c0_402] : memref<6x24x128xf32, #tpu.memory_space<vmem>>, vector<1x16x128xf32>
    %480 = vector.shape_cast %479 : vector<1x16x128xf32> to vector<16x128xf32>
    %481 = vector.broadcast %365 : f32 to vector<16x128xf32>
    %482 = arith.mulf %480, %481 : vector<16x128xf32>
    %483 = arith.addf %478, %482 : vector<16x128xf32>
    %c2_403 = arith.constant 2 : index
    %c3_404 = arith.constant 3 : index
    %c0_405 = arith.constant 0 : index
    %484 = vector.load %arg7[%c2_403, %c3_404, %c0_405] : memref<6x24x128xf32, #tpu.memory_space<vmem>>, vector<1x16x128xf32>
    %485 = vector.shape_cast %484 : vector<1x16x128xf32> to vector<16x128xf32>
    %486 = vector.broadcast %372 : f32 to vector<16x128xf32>
    %487 = arith.mulf %485, %486 : vector<16x128xf32>
    %488 = arith.addf %483, %487 : vector<16x128xf32>
    %c2_406 = arith.constant 2 : index
    %c4_407 = arith.constant 4 : index
    %c0_408 = arith.constant 0 : index
    %489 = vector.load %arg7[%c2_406, %c4_407, %c0_408] : memref<6x24x128xf32, #tpu.memory_space<vmem>>, vector<1x16x128xf32>
    %490 = vector.shape_cast %489 : vector<1x16x128xf32> to vector<16x128xf32>
    %491 = vector.broadcast %379 : f32 to vector<16x128xf32>
    %492 = arith.mulf %490, %491 : vector<16x128xf32>
    %493 = arith.addf %488, %492 : vector<16x128xf32>
    %c2_409 = arith.constant 2 : index
    %c5_410 = arith.constant 5 : index
    %c0_411 = arith.constant 0 : index
    %494 = vector.load %arg7[%c2_409, %c5_410, %c0_411] : memref<6x24x128xf32, #tpu.memory_space<vmem>>, vector<1x16x128xf32>
    %495 = vector.shape_cast %494 : vector<1x16x128xf32> to vector<16x128xf32>
    %496 = vector.broadcast %386 : f32 to vector<16x128xf32>
    %497 = arith.mulf %495, %496 : vector<16x128xf32>
    %498 = arith.addf %493, %497 : vector<16x128xf32>
    %c2_412 = arith.constant 2 : index
    %c6_413 = arith.constant 6 : index
    %c0_414 = arith.constant 0 : index
    %499 = vector.load %arg7[%c2_412, %c6_413, %c0_414] : memref<6x24x128xf32, #tpu.memory_space<vmem>>, vector<1x16x128xf32>
    %500 = vector.shape_cast %499 : vector<1x16x128xf32> to vector<16x128xf32>
    %501 = vector.broadcast %393 : f32 to vector<16x128xf32>
    %502 = arith.mulf %500, %501 : vector<16x128xf32>
    %503 = arith.addf %498, %502 : vector<16x128xf32>
    %c0_415 = arith.constant 0 : index
    %c0_416 = arith.constant 0 : index
    %504 = vector.load %arg6[%c0_415, %c0_416] : memref<24x128xf32, #tpu.memory_space<vmem>>, vector<16x128xf32>
    %505 = vector.broadcast %352 : f32 to vector<16x128xf32>
    %506 = arith.mulf %504, %505 : vector<16x128xf32>
    %507 = arith.addf %503, %506 : vector<16x128xf32>
    %c1_417 = arith.constant 1 : index
    %c0_418 = arith.constant 0 : index
    %508 = vector.load %arg6[%c1_417, %c0_418] : memref<24x128xf32, #tpu.memory_space<vmem>>, vector<16x128xf32>
    %509 = vector.broadcast %359 : f32 to vector<16x128xf32>
    %510 = arith.mulf %508, %509 : vector<16x128xf32>
    %511 = arith.addf %507, %510 : vector<16x128xf32>
    %c2_419 = arith.constant 2 : index
    %c0_420 = arith.constant 0 : index
    %512 = vector.load %arg6[%c2_419, %c0_420] : memref<24x128xf32, #tpu.memory_space<vmem>>, vector<16x128xf32>
    %513 = vector.broadcast %366 : f32 to vector<16x128xf32>
    %514 = arith.mulf %512, %513 : vector<16x128xf32>
    %515 = arith.addf %511, %514 : vector<16x128xf32>
    %c3_421 = arith.constant 3 : index
    %c0_422 = arith.constant 0 : index
    %516 = vector.load %arg6[%c3_421, %c0_422] : memref<24x128xf32, #tpu.memory_space<vmem>>, vector<16x128xf32>
    %517 = vector.broadcast %373 : f32 to vector<16x128xf32>
    %518 = arith.mulf %516, %517 : vector<16x128xf32>
    %519 = arith.addf %515, %518 : vector<16x128xf32>
    %c4_423 = arith.constant 4 : index
    %c0_424 = arith.constant 0 : index
    %520 = vector.load %arg6[%c4_423, %c0_424] : memref<24x128xf32, #tpu.memory_space<vmem>>, vector<16x128xf32>
    %521 = vector.broadcast %380 : f32 to vector<16x128xf32>
    %522 = arith.mulf %520, %521 : vector<16x128xf32>
    %523 = arith.addf %519, %522 : vector<16x128xf32>
    %c5_425 = arith.constant 5 : index
    %c0_426 = arith.constant 0 : index
    %524 = vector.load %arg6[%c5_425, %c0_426] : memref<24x128xf32, #tpu.memory_space<vmem>>, vector<16x128xf32>
    %525 = vector.broadcast %387 : f32 to vector<16x128xf32>
    %526 = arith.mulf %524, %525 : vector<16x128xf32>
    %527 = arith.addf %523, %526 : vector<16x128xf32>
    %c6_427 = arith.constant 6 : index
    %c0_428 = arith.constant 0 : index
    %528 = vector.load %arg6[%c6_427, %c0_428] : memref<24x128xf32, #tpu.memory_space<vmem>>, vector<16x128xf32>
    %529 = vector.broadcast %394 : f32 to vector<16x128xf32>
    %530 = arith.mulf %528, %529 : vector<16x128xf32>
    %531 = arith.addf %527, %530 : vector<16x128xf32>
    %c3_429 = arith.constant 3 : index
    %c0_430 = arith.constant 0 : index
    %c0_431 = arith.constant 0 : index
    %532 = vector.load %arg7[%c3_429, %c0_430, %c0_431] : memref<6x24x128xf32, #tpu.memory_space<vmem>>, vector<1x16x128xf32>
    %533 = vector.shape_cast %532 : vector<1x16x128xf32> to vector<16x128xf32>
    %534 = vector.broadcast %353 : f32 to vector<16x128xf32>
    %535 = arith.mulf %533, %534 : vector<16x128xf32>
    %536 = arith.addf %531, %535 : vector<16x128xf32>
    %c3_432 = arith.constant 3 : index
    %c1_433 = arith.constant 1 : index
    %c0_434 = arith.constant 0 : index
    %537 = vector.load %arg7[%c3_432, %c1_433, %c0_434] : memref<6x24x128xf32, #tpu.memory_space<vmem>>, vector<1x16x128xf32>
    %538 = vector.shape_cast %537 : vector<1x16x128xf32> to vector<16x128xf32>
    %539 = vector.broadcast %360 : f32 to vector<16x128xf32>
    %540 = arith.mulf %538, %539 : vector<16x128xf32>
    %541 = arith.addf %536, %540 : vector<16x128xf32>
    %c3_435 = arith.constant 3 : index
    %c2_436 = arith.constant 2 : index
    %c0_437 = arith.constant 0 : index
    %542 = vector.load %arg7[%c3_435, %c2_436, %c0_437] : memref<6x24x128xf32, #tpu.memory_space<vmem>>, vector<1x16x128xf32>
    %543 = vector.shape_cast %542 : vector<1x16x128xf32> to vector<16x128xf32>
    %544 = vector.broadcast %367 : f32 to vector<16x128xf32>
    %545 = arith.mulf %543, %544 : vector<16x128xf32>
    %546 = arith.addf %541, %545 : vector<16x128xf32>
    %c3_438 = arith.constant 3 : index
    %c3_439 = arith.constant 3 : index
    %c0_440 = arith.constant 0 : index
    %547 = vector.load %arg7[%c3_438, %c3_439, %c0_440] : memref<6x24x128xf32, #tpu.memory_space<vmem>>, vector<1x16x128xf32>
    %548 = vector.shape_cast %547 : vector<1x16x128xf32> to vector<16x128xf32>
    %549 = vector.broadcast %374 : f32 to vector<16x128xf32>
    %550 = arith.mulf %548, %549 : vector<16x128xf32>
    %551 = arith.addf %546, %550 : vector<16x128xf32>
    %c3_441 = arith.constant 3 : index
    %c4_442 = arith.constant 4 : index
    %c0_443 = arith.constant 0 : index
    %552 = vector.load %arg7[%c3_441, %c4_442, %c0_443] : memref<6x24x128xf32, #tpu.memory_space<vmem>>, vector<1x16x128xf32>
    %553 = vector.shape_cast %552 : vector<1x16x128xf32> to vector<16x128xf32>
    %554 = vector.broadcast %381 : f32 to vector<16x128xf32>
    %555 = arith.mulf %553, %554 : vector<16x128xf32>
    %556 = arith.addf %551, %555 : vector<16x128xf32>
    %c3_444 = arith.constant 3 : index
    %c5_445 = arith.constant 5 : index
    %c0_446 = arith.constant 0 : index
    %557 = vector.load %arg7[%c3_444, %c5_445, %c0_446] : memref<6x24x128xf32, #tpu.memory_space<vmem>>, vector<1x16x128xf32>
    %558 = vector.shape_cast %557 : vector<1x16x128xf32> to vector<16x128xf32>
    %559 = vector.broadcast %388 : f32 to vector<16x128xf32>
    %560 = arith.mulf %558, %559 : vector<16x128xf32>
    %561 = arith.addf %556, %560 : vector<16x128xf32>
    %c3_447 = arith.constant 3 : index
    %c6_448 = arith.constant 6 : index
    %c0_449 = arith.constant 0 : index
    %562 = vector.load %arg7[%c3_447, %c6_448, %c0_449] : memref<6x24x128xf32, #tpu.memory_space<vmem>>, vector<1x16x128xf32>
    %563 = vector.shape_cast %562 : vector<1x16x128xf32> to vector<16x128xf32>
    %564 = vector.broadcast %395 : f32 to vector<16x128xf32>
    %565 = arith.mulf %563, %564 : vector<16x128xf32>
    %566 = arith.addf %561, %565 : vector<16x128xf32>
    %c4_450 = arith.constant 4 : index
    %c0_451 = arith.constant 0 : index
    %c0_452 = arith.constant 0 : index
    %567 = vector.load %arg7[%c4_450, %c0_451, %c0_452] : memref<6x24x128xf32, #tpu.memory_space<vmem>>, vector<1x16x128xf32>
    %568 = vector.shape_cast %567 : vector<1x16x128xf32> to vector<16x128xf32>
    %569 = vector.broadcast %354 : f32 to vector<16x128xf32>
    %570 = arith.mulf %568, %569 : vector<16x128xf32>
    %571 = arith.addf %566, %570 : vector<16x128xf32>
    %c4_453 = arith.constant 4 : index
    %c1_454 = arith.constant 1 : index
    %c0_455 = arith.constant 0 : index
    %572 = vector.load %arg7[%c4_453, %c1_454, %c0_455] : memref<6x24x128xf32, #tpu.memory_space<vmem>>, vector<1x16x128xf32>
    %573 = vector.shape_cast %572 : vector<1x16x128xf32> to vector<16x128xf32>
    %574 = vector.broadcast %361 : f32 to vector<16x128xf32>
    %575 = arith.mulf %573, %574 : vector<16x128xf32>
    %576 = arith.addf %571, %575 : vector<16x128xf32>
    %c4_456 = arith.constant 4 : index
    %c2_457 = arith.constant 2 : index
    %c0_458 = arith.constant 0 : index
    %577 = vector.load %arg7[%c4_456, %c2_457, %c0_458] : memref<6x24x128xf32, #tpu.memory_space<vmem>>, vector<1x16x128xf32>
    %578 = vector.shape_cast %577 : vector<1x16x128xf32> to vector<16x128xf32>
    %579 = vector.broadcast %368 : f32 to vector<16x128xf32>
    %580 = arith.mulf %578, %579 : vector<16x128xf32>
    %581 = arith.addf %576, %580 : vector<16x128xf32>
    %c4_459 = arith.constant 4 : index
    %c3_460 = arith.constant 3 : index
    %c0_461 = arith.constant 0 : index
    %582 = vector.load %arg7[%c4_459, %c3_460, %c0_461] : memref<6x24x128xf32, #tpu.memory_space<vmem>>, vector<1x16x128xf32>
    %583 = vector.shape_cast %582 : vector<1x16x128xf32> to vector<16x128xf32>
    %584 = vector.broadcast %375 : f32 to vector<16x128xf32>
    %585 = arith.mulf %583, %584 : vector<16x128xf32>
    %586 = arith.addf %581, %585 : vector<16x128xf32>
    %c4_462 = arith.constant 4 : index
    %c4_463 = arith.constant 4 : index
    %c0_464 = arith.constant 0 : index
    %587 = vector.load %arg7[%c4_462, %c4_463, %c0_464] : memref<6x24x128xf32, #tpu.memory_space<vmem>>, vector<1x16x128xf32>
    %588 = vector.shape_cast %587 : vector<1x16x128xf32> to vector<16x128xf32>
    %589 = vector.broadcast %382 : f32 to vector<16x128xf32>
    %590 = arith.mulf %588, %589 : vector<16x128xf32>
    %591 = arith.addf %586, %590 : vector<16x128xf32>
    %c4_465 = arith.constant 4 : index
    %c5_466 = arith.constant 5 : index
    %c0_467 = arith.constant 0 : index
    %592 = vector.load %arg7[%c4_465, %c5_466, %c0_467] : memref<6x24x128xf32, #tpu.memory_space<vmem>>, vector<1x16x128xf32>
    %593 = vector.shape_cast %592 : vector<1x16x128xf32> to vector<16x128xf32>
    %594 = vector.broadcast %389 : f32 to vector<16x128xf32>
    %595 = arith.mulf %593, %594 : vector<16x128xf32>
    %596 = arith.addf %591, %595 : vector<16x128xf32>
    %c4_468 = arith.constant 4 : index
    %c6_469 = arith.constant 6 : index
    %c0_470 = arith.constant 0 : index
    %597 = vector.load %arg7[%c4_468, %c6_469, %c0_470] : memref<6x24x128xf32, #tpu.memory_space<vmem>>, vector<1x16x128xf32>
    %598 = vector.shape_cast %597 : vector<1x16x128xf32> to vector<16x128xf32>
    %599 = vector.broadcast %396 : f32 to vector<16x128xf32>
    %600 = arith.mulf %598, %599 : vector<16x128xf32>
    %601 = arith.addf %596, %600 : vector<16x128xf32>
    %c5_471 = arith.constant 5 : index
    %c0_472 = arith.constant 0 : index
    %c0_473 = arith.constant 0 : index
    %602 = vector.load %arg7[%c5_471, %c0_472, %c0_473] : memref<6x24x128xf32, #tpu.memory_space<vmem>>, vector<1x16x128xf32>
    %603 = vector.shape_cast %602 : vector<1x16x128xf32> to vector<16x128xf32>
    %604 = vector.broadcast %355 : f32 to vector<16x128xf32>
    %605 = arith.mulf %603, %604 : vector<16x128xf32>
    %606 = arith.addf %601, %605 : vector<16x128xf32>
    %c5_474 = arith.constant 5 : index
    %c1_475 = arith.constant 1 : index
    %c0_476 = arith.constant 0 : index
    %607 = vector.load %arg7[%c5_474, %c1_475, %c0_476] : memref<6x24x128xf32, #tpu.memory_space<vmem>>, vector<1x16x128xf32>
    %608 = vector.shape_cast %607 : vector<1x16x128xf32> to vector<16x128xf32>
    %609 = vector.broadcast %362 : f32 to vector<16x128xf32>
    %610 = arith.mulf %608, %609 : vector<16x128xf32>
    %611 = arith.addf %606, %610 : vector<16x128xf32>
    %c5_477 = arith.constant 5 : index
    %c2_478 = arith.constant 2 : index
    %c0_479 = arith.constant 0 : index
    %612 = vector.load %arg7[%c5_477, %c2_478, %c0_479] : memref<6x24x128xf32, #tpu.memory_space<vmem>>, vector<1x16x128xf32>
    %613 = vector.shape_cast %612 : vector<1x16x128xf32> to vector<16x128xf32>
    %614 = vector.broadcast %369 : f32 to vector<16x128xf32>
    %615 = arith.mulf %613, %614 : vector<16x128xf32>
    %616 = arith.addf %611, %615 : vector<16x128xf32>
    %c5_480 = arith.constant 5 : index
    %c3_481 = arith.constant 3 : index
    %c0_482 = arith.constant 0 : index
    %617 = vector.load %arg7[%c5_480, %c3_481, %c0_482] : memref<6x24x128xf32, #tpu.memory_space<vmem>>, vector<1x16x128xf32>
    %618 = vector.shape_cast %617 : vector<1x16x128xf32> to vector<16x128xf32>
    %619 = vector.broadcast %376 : f32 to vector<16x128xf32>
    %620 = arith.mulf %618, %619 : vector<16x128xf32>
    %621 = arith.addf %616, %620 : vector<16x128xf32>
    %c5_483 = arith.constant 5 : index
    %c4_484 = arith.constant 4 : index
    %c0_485 = arith.constant 0 : index
    %622 = vector.load %arg7[%c5_483, %c4_484, %c0_485] : memref<6x24x128xf32, #tpu.memory_space<vmem>>, vector<1x16x128xf32>
    %623 = vector.shape_cast %622 : vector<1x16x128xf32> to vector<16x128xf32>
    %624 = vector.broadcast %383 : f32 to vector<16x128xf32>
    %625 = arith.mulf %623, %624 : vector<16x128xf32>
    %626 = arith.addf %621, %625 : vector<16x128xf32>
    %c5_486 = arith.constant 5 : index
    %c5_487 = arith.constant 5 : index
    %c0_488 = arith.constant 0 : index
    %627 = vector.load %arg7[%c5_486, %c5_487, %c0_488] : memref<6x24x128xf32, #tpu.memory_space<vmem>>, vector<1x16x128xf32>
    %628 = vector.shape_cast %627 : vector<1x16x128xf32> to vector<16x128xf32>
    %629 = vector.broadcast %390 : f32 to vector<16x128xf32>
    %630 = arith.mulf %628, %629 : vector<16x128xf32>
    %631 = arith.addf %626, %630 : vector<16x128xf32>
    %c5_489 = arith.constant 5 : index
    %c6_490 = arith.constant 6 : index
    %c0_491 = arith.constant 0 : index
    %632 = vector.load %arg7[%c5_489, %c6_490, %c0_491] : memref<6x24x128xf32, #tpu.memory_space<vmem>>, vector<1x16x128xf32>
    %633 = vector.shape_cast %632 : vector<1x16x128xf32> to vector<16x128xf32>
    %634 = vector.broadcast %397 : f32 to vector<16x128xf32>
    %635 = arith.mulf %633, %634 : vector<16x128xf32>
    %636 = arith.addf %631, %635 : vector<16x128xf32>
    %c1_492 = arith.constant 1 : index
    %c0_493 = arith.constant 0 : index
    %c0_494 = arith.constant 0 : index
    %637 = vector.load %arg8[%c1_492, %c0_493, %c0_494] : memref<4x16x128xf32, #tpu.memory_space<vmem>>, vector<1x16x128xf32>
    %638 = vector.shape_cast %637 : vector<1x16x128xf32> to vector<16x128xf32>
    %639 = vector.shape_cast %636 : vector<16x128xf32> to vector<1x16x128xf32>
    tpu.vector_store %arg8[%c1_492, %c0_493, %c0_494], %639 {strides = array<i32>} : memref<4x16x128xf32, #tpu.memory_space<vmem>>, vector<1x16x128xf32>,
    %c0_495 = arith.constant 0 : index
    %c2_496 = arith.constant 2 : index
    %c0_497 = arith.constant 0 : index
    %c0_498 = arith.constant 0 : index
    %640 = vector.load %arg1[%c0_495, %c2_496, %c0_497, %c0_498] : memref<1x4x16x16xf32, #tpu.memory_space<vmem>>, vector<1x1x16x16xf32>
    %641 = vector.shape_cast %640 : vector<1x1x16x16xf32> to vector<16x16xf32>
    %c3_499 = arith.constant 3 : index
    %c0_500 = arith.constant 0 : index
    %642 = vector.load %arg6[%c3_499, %c0_500] : memref<24x128xf32, #tpu.memory_space<vmem>>, vector<16x16xf32>
    tpu.vector_store %arg6[%c3_499, %c0_500], %641 {strides = array<i32>} : memref<24x128xf32, #tpu.memory_space<vmem>>, vector<16x16xf32>,
    %c0_501 = arith.constant 0 : index
    %c0_502 = arith.constant 0 : index
    %643 = vector.load %arg6[%c0_501, %c0_502] : memref<24x128xf32, #tpu.memory_space<vmem>>, vector<24x128xf32>
    %c3_i32_503 = arith.constant 3 : i32
    %644 = tpu.dynamic_rotate %643 by %c3_i32_503 dim 1 : vector<24x128xf32>, i32 -> vector<24x128xf32>
    %c0_504 = arith.constant 0 : index
    %c0_505 = arith.constant 0 : index
    %c0_506 = arith.constant 0 : index
    %645 = vector.load %arg7[%c0_504, %c0_505, %c0_506] : memref<6x24x128xf32, #tpu.memory_space<vmem>>, vector<1x24x128xf32>
    %646 = vector.shape_cast %645 : vector<1x24x128xf32> to vector<24x128xf32>
    %647 = vector.shape_cast %644 : vector<24x128xf32> to vector<1x24x128xf32>
    tpu.vector_store %arg7[%c0_504, %c0_505, %c0_506], %647 {strides = array<i32>} : memref<6x24x128xf32, #tpu.memory_space<vmem>>, vector<1x24x128xf32>,
    %c2_i32_507 = arith.constant 2 : i32
    %648 = tpu.dynamic_rotate %643 by %c2_i32_507 dim 1 : vector<24x128xf32>, i32 -> vector<24x128xf32>
    %c1_508 = arith.constant 1 : index
    %c0_509 = arith.constant 0 : index
    %c0_510 = arith.constant 0 : index
    %649 = vector.load %arg7[%c1_508, %c0_509, %c0_510] : memref<6x24x128xf32, #tpu.memory_space<vmem>>, vector<1x24x128xf32>
    %650 = vector.shape_cast %649 : vector<1x24x128xf32> to vector<24x128xf32>
    %651 = vector.shape_cast %648 : vector<24x128xf32> to vector<1x24x128xf32>
    tpu.vector_store %arg7[%c1_508, %c0_509, %c0_510], %651 {strides = array<i32>} : memref<6x24x128xf32, #tpu.memory_space<vmem>>, vector<1x24x128xf32>,
    %c1_i32_511 = arith.constant 1 : i32
    %652 = tpu.dynamic_rotate %643 by %c1_i32_511 dim 1 : vector<24x128xf32>, i32 -> vector<24x128xf32>
    %c2_512 = arith.constant 2 : index
    %c0_513 = arith.constant 0 : index
    %c0_514 = arith.constant 0 : index
    %653 = vector.load %arg7[%c2_512, %c0_513, %c0_514] : memref<6x24x128xf32, #tpu.memory_space<vmem>>, vector<1x24x128xf32>
    %654 = vector.shape_cast %653 : vector<1x24x128xf32> to vector<24x128xf32>
    %655 = vector.shape_cast %652 : vector<24x128xf32> to vector<1x24x128xf32>
    tpu.vector_store %arg7[%c2_512, %c0_513, %c0_514], %655 {strides = array<i32>} : memref<6x24x128xf32, #tpu.memory_space<vmem>>, vector<1x24x128xf32>,
    %c127_i32_515 = arith.constant 127 : i32
    %656 = tpu.dynamic_rotate %643 by %c127_i32_515 dim 1 : vector<24x128xf32>, i32 -> vector<24x128xf32>
    %c3_516 = arith.constant 3 : index
    %c0_517 = arith.constant 0 : index
    %c0_518 = arith.constant 0 : index
    %657 = vector.load %arg7[%c3_516, %c0_517, %c0_518] : memref<6x24x128xf32, #tpu.memory_space<vmem>>, vector<1x24x128xf32>
    %658 = vector.shape_cast %657 : vector<1x24x128xf32> to vector<24x128xf32>
    %659 = vector.shape_cast %656 : vector<24x128xf32> to vector<1x24x128xf32>
    tpu.vector_store %arg7[%c3_516, %c0_517, %c0_518], %659 {strides = array<i32>} : memref<6x24x128xf32, #tpu.memory_space<vmem>>, vector<1x24x128xf32>,
    %c126_i32_519 = arith.constant 126 : i32
    %660 = tpu.dynamic_rotate %643 by %c126_i32_519 dim 1 : vector<24x128xf32>, i32 -> vector<24x128xf32>
    %c4_520 = arith.constant 4 : index
    %c0_521 = arith.constant 0 : index
    %c0_522 = arith.constant 0 : index
    %661 = vector.load %arg7[%c4_520, %c0_521, %c0_522] : memref<6x24x128xf32, #tpu.memory_space<vmem>>, vector<1x24x128xf32>
    %662 = vector.shape_cast %661 : vector<1x24x128xf32> to vector<24x128xf32>
    %663 = vector.shape_cast %660 : vector<24x128xf32> to vector<1x24x128xf32>
    tpu.vector_store %arg7[%c4_520, %c0_521, %c0_522], %663 {strides = array<i32>} : memref<6x24x128xf32, #tpu.memory_space<vmem>>, vector<1x24x128xf32>,
    %c125_i32_523 = arith.constant 125 : i32
    %664 = tpu.dynamic_rotate %643 by %c125_i32_523 dim 1 : vector<24x128xf32>, i32 -> vector<24x128xf32>
    %c5_524 = arith.constant 5 : index
    %c0_525 = arith.constant 0 : index
    %c0_526 = arith.constant 0 : index
    %665 = vector.load %arg7[%c5_524, %c0_525, %c0_526] : memref<6x24x128xf32, #tpu.memory_space<vmem>>, vector<1x24x128xf32>
    %666 = vector.shape_cast %665 : vector<1x24x128xf32> to vector<24x128xf32>
    %667 = vector.shape_cast %664 : vector<24x128xf32> to vector<1x24x128xf32>
    tpu.vector_store %arg7[%c5_524, %c0_525, %c0_526], %667 {strides = array<i32>} : memref<6x24x128xf32, #tpu.memory_space<vmem>>, vector<1x24x128xf32>,
    %c2_527 = arith.constant 2 : index
    %c0_528 = arith.constant 0 : index
    %668 = memref.load %arg2[%c2_527, %c0_528] : memref<4x49xf32, #tpu.memory_space<smem>>
    %c2_529 = arith.constant 2 : index
    %c1_530 = arith.constant 1 : index
    %669 = memref.load %arg2[%c2_529, %c1_530] : memref<4x49xf32, #tpu.memory_space<smem>>
    %c2_531 = arith.constant 2 : index
    %c2_532 = arith.constant 2 : index
    %670 = memref.load %arg2[%c2_531, %c2_532] : memref<4x49xf32, #tpu.memory_space<smem>>
    %c2_533 = arith.constant 2 : index
    %c3_534 = arith.constant 3 : index
    %671 = memref.load %arg2[%c2_533, %c3_534] : memref<4x49xf32, #tpu.memory_space<smem>>
    %c2_535 = arith.constant 2 : index
    %c4_536 = arith.constant 4 : index
    %672 = memref.load %arg2[%c2_535, %c4_536] : memref<4x49xf32, #tpu.memory_space<smem>>
    %c2_537 = arith.constant 2 : index
    %c5_538 = arith.constant 5 : index
    %673 = memref.load %arg2[%c2_537, %c5_538] : memref<4x49xf32, #tpu.memory_space<smem>>
    %c2_539 = arith.constant 2 : index
    %c6_540 = arith.constant 6 : index
    %674 = memref.load %arg2[%c2_539, %c6_540] : memref<4x49xf32, #tpu.memory_space<smem>>
    %c2_541 = arith.constant 2 : index
    %c7_542 = arith.constant 7 : index
    %675 = memref.load %arg2[%c2_541, %c7_542] : memref<4x49xf32, #tpu.memory_space<smem>>
    %c2_543 = arith.constant 2 : index
    %c8_544 = arith.constant 8 : index
    %676 = memref.load %arg2[%c2_543, %c8_544] : memref<4x49xf32, #tpu.memory_space<smem>>
    %c2_545 = arith.constant 2 : index
    %c9_546 = arith.constant 9 : index
    %677 = memref.load %arg2[%c2_545, %c9_546] : memref<4x49xf32, #tpu.memory_space<smem>>
    %c2_547 = arith.constant 2 : index
    %c10_548 = arith.constant 10 : index
    %678 = memref.load %arg2[%c2_547, %c10_548] : memref<4x49xf32, #tpu.memory_space<smem>>
    %c2_549 = arith.constant 2 : index
    %c11_550 = arith.constant 11 : index
    %679 = memref.load %arg2[%c2_549, %c11_550] : memref<4x49xf32, #tpu.memory_space<smem>>
    %c2_551 = arith.constant 2 : index
    %c12_552 = arith.constant 12 : index
    %680 = memref.load %arg2[%c2_551, %c12_552] : memref<4x49xf32, #tpu.memory_space<smem>>
    %c2_553 = arith.constant 2 : index
    %c13_554 = arith.constant 13 : index
    %681 = memref.load %arg2[%c2_553, %c13_554] : memref<4x49xf32, #tpu.memory_space<smem>>
    %c2_555 = arith.constant 2 : index
    %c14_556 = arith.constant 14 : index
    %682 = memref.load %arg2[%c2_555, %c14_556] : memref<4x49xf32, #tpu.memory_space<smem>>
    %c2_557 = arith.constant 2 : index
    %c15_558 = arith.constant 15 : index
    %683 = memref.load %arg2[%c2_557, %c15_558] : memref<4x49xf32, #tpu.memory_space<smem>>
    %c2_559 = arith.constant 2 : index
    %c16_560 = arith.constant 16 : index
    %684 = memref.load %arg2[%c2_559, %c16_560] : memref<4x49xf32, #tpu.memory_space<smem>>
    %c2_561 = arith.constant 2 : index
    %c17_562 = arith.constant 17 : index
    %685 = memref.load %arg2[%c2_561, %c17_562] : memref<4x49xf32, #tpu.memory_space<smem>>
    %c2_563 = arith.constant 2 : index
    %c18_564 = arith.constant 18 : index
    %686 = memref.load %arg2[%c2_563, %c18_564] : memref<4x49xf32, #tpu.memory_space<smem>>
    %c2_565 = arith.constant 2 : index
    %c19_566 = arith.constant 19 : index
    %687 = memref.load %arg2[%c2_565, %c19_566] : memref<4x49xf32, #tpu.memory_space<smem>>
    %c2_567 = arith.constant 2 : index
    %c20_568 = arith.constant 20 : index
    %688 = memref.load %arg2[%c2_567, %c20_568] : memref<4x49xf32, #tpu.memory_space<smem>>
    %c2_569 = arith.constant 2 : index
    %c21_570 = arith.constant 21 : index
    %689 = memref.load %arg2[%c2_569, %c21_570] : memref<4x49xf32, #tpu.memory_space<smem>>
    %c2_571 = arith.constant 2 : index
    %c22_572 = arith.constant 22 : index
    %690 = memref.load %arg2[%c2_571, %c22_572] : memref<4x49xf32, #tpu.memory_space<smem>>
    %c2_573 = arith.constant 2 : index
    %c23_574 = arith.constant 23 : index
    %691 = memref.load %arg2[%c2_573, %c23_574] : memref<4x49xf32, #tpu.memory_space<smem>>
    %c2_575 = arith.constant 2 : index
    %c24_576 = arith.constant 24 : index
    %692 = memref.load %arg2[%c2_575, %c24_576] : memref<4x49xf32, #tpu.memory_space<smem>>
    %c2_577 = arith.constant 2 : index
    %c25_578 = arith.constant 25 : index
    %693 = memref.load %arg2[%c2_577, %c25_578] : memref<4x49xf32, #tpu.memory_space<smem>>
    %c2_579 = arith.constant 2 : index
    %c26_580 = arith.constant 26 : index
    %694 = memref.load %arg2[%c2_579, %c26_580] : memref<4x49xf32, #tpu.memory_space<smem>>
    %c2_581 = arith.constant 2 : index
    %c27_582 = arith.constant 27 : index
    %695 = memref.load %arg2[%c2_581, %c27_582] : memref<4x49xf32, #tpu.memory_space<smem>>
    %c2_583 = arith.constant 2 : index
    %c28_584 = arith.constant 28 : index
    %696 = memref.load %arg2[%c2_583, %c28_584] : memref<4x49xf32, #tpu.memory_space<smem>>
    %c2_585 = arith.constant 2 : index
    %c29_586 = arith.constant 29 : index
    %697 = memref.load %arg2[%c2_585, %c29_586] : memref<4x49xf32, #tpu.memory_space<smem>>
    %c2_587 = arith.constant 2 : index
    %c30_588 = arith.constant 30 : index
    %698 = memref.load %arg2[%c2_587, %c30_588] : memref<4x49xf32, #tpu.memory_space<smem>>
    %c2_589 = arith.constant 2 : index
    %c31_590 = arith.constant 31 : index
    %699 = memref.load %arg2[%c2_589, %c31_590] : memref<4x49xf32, #tpu.memory_space<smem>>
    %c2_591 = arith.constant 2 : index
    %c32_592 = arith.constant 32 : index
    %700 = memref.load %arg2[%c2_591, %c32_592] : memref<4x49xf32, #tpu.memory_space<smem>>
    %c2_593 = arith.constant 2 : index
    %c33_594 = arith.constant 33 : index
    %701 = memref.load %arg2[%c2_593, %c33_594] : memref<4x49xf32, #tpu.memory_space<smem>>
    %c2_595 = arith.constant 2 : index
    %c34_596 = arith.constant 34 : index
    %702 = memref.load %arg2[%c2_595, %c34_596] : memref<4x49xf32, #tpu.memory_space<smem>>
    %c2_597 = arith.constant 2 : index
    %c35_598 = arith.constant 35 : index
    %703 = memref.load %arg2[%c2_597, %c35_598] : memref<4x49xf32, #tpu.memory_space<smem>>
    %c2_599 = arith.constant 2 : index
    %c36_600 = arith.constant 36 : index
    %704 = memref.load %arg2[%c2_599, %c36_600] : memref<4x49xf32, #tpu.memory_space<smem>>
    %c2_601 = arith.constant 2 : index
    %c37_602 = arith.constant 37 : index
    %705 = memref.load %arg2[%c2_601, %c37_602] : memref<4x49xf32, #tpu.memory_space<smem>>
    %c2_603 = arith.constant 2 : index
    %c38_604 = arith.constant 38 : index
    %706 = memref.load %arg2[%c2_603, %c38_604] : memref<4x49xf32, #tpu.memory_space<smem>>
    %c2_605 = arith.constant 2 : index
    %c39_606 = arith.constant 39 : index
    %707 = memref.load %arg2[%c2_605, %c39_606] : memref<4x49xf32, #tpu.memory_space<smem>>
    %c2_607 = arith.constant 2 : index
    %c40_608 = arith.constant 40 : index
    %708 = memref.load %arg2[%c2_607, %c40_608] : memref<4x49xf32, #tpu.memory_space<smem>>
    %c2_609 = arith.constant 2 : index
    %c41_610 = arith.constant 41 : index
    %709 = memref.load %arg2[%c2_609, %c41_610] : memref<4x49xf32, #tpu.memory_space<smem>>
    %c2_611 = arith.constant 2 : index
    %c42_612 = arith.constant 42 : index
    %710 = memref.load %arg2[%c2_611, %c42_612] : memref<4x49xf32, #tpu.memory_space<smem>>
    %c2_613 = arith.constant 2 : index
    %c43_614 = arith.constant 43 : index
    %711 = memref.load %arg2[%c2_613, %c43_614] : memref<4x49xf32, #tpu.memory_space<smem>>
    %c2_615 = arith.constant 2 : index
    %c44_616 = arith.constant 44 : index
    %712 = memref.load %arg2[%c2_615, %c44_616] : memref<4x49xf32, #tpu.memory_space<smem>>
    %c2_617 = arith.constant 2 : index
    %c45_618 = arith.constant 45 : index
    %713 = memref.load %arg2[%c2_617, %c45_618] : memref<4x49xf32, #tpu.memory_space<smem>>
    %c2_619 = arith.constant 2 : index
    %c46_620 = arith.constant 46 : index
    %714 = memref.load %arg2[%c2_619, %c46_620] : memref<4x49xf32, #tpu.memory_space<smem>>
    %c2_621 = arith.constant 2 : index
    %c47_622 = arith.constant 47 : index
    %715 = memref.load %arg2[%c2_621, %c47_622] : memref<4x49xf32, #tpu.memory_space<smem>>
    %c2_623 = arith.constant 2 : index
    %c48_624 = arith.constant 48 : index
    %716 = memref.load %arg2[%c2_623, %c48_624] : memref<4x49xf32, #tpu.memory_space<smem>>
    %cst_625 = arith.constant 0.000000e+00 : f32
    %717 = vector.broadcast %cst_625 : f32 to vector<16x128xf32>
    %c0_626 = arith.constant 0 : index
    %c0_627 = arith.constant 0 : index
    %c0_628 = arith.constant 0 : index
    %718 = vector.load %arg7[%c0_626, %c0_627, %c0_628] : memref<6x24x128xf32, #tpu.memory_space<vmem>>, vector<1x16x128xf32>
    %719 = vector.shape_cast %718 : vector<1x16x128xf32> to vector<16x128xf32>
    %720 = vector.broadcast %668 : f32 to vector<16x128xf32>
    %721 = arith.mulf %719, %720 : vector<16x128xf32>
    %722 = arith.addf %717, %721 : vector<16x128xf32>
    %c0_629 = arith.constant 0 : index
    %c1_630 = arith.constant 1 : index
    %c0_631 = arith.constant 0 : index
    %723 = vector.load %arg7[%c0_629, %c1_630, %c0_631] : memref<6x24x128xf32, #tpu.memory_space<vmem>>, vector<1x16x128xf32>
    %724 = vector.shape_cast %723 : vector<1x16x128xf32> to vector<16x128xf32>
    %725 = vector.broadcast %675 : f32 to vector<16x128xf32>
    %726 = arith.mulf %724, %725 : vector<16x128xf32>
    %727 = arith.addf %722, %726 : vector<16x128xf32>
    %c0_632 = arith.constant 0 : index
    %c2_633 = arith.constant 2 : index
    %c0_634 = arith.constant 0 : index
    %728 = vector.load %arg7[%c0_632, %c2_633, %c0_634] : memref<6x24x128xf32, #tpu.memory_space<vmem>>, vector<1x16x128xf32>
    %729 = vector.shape_cast %728 : vector<1x16x128xf32> to vector<16x128xf32>
    %730 = vector.broadcast %682 : f32 to vector<16x128xf32>
    %731 = arith.mulf %729, %730 : vector<16x128xf32>
    %732 = arith.addf %727, %731 : vector<16x128xf32>
    %c0_635 = arith.constant 0 : index
    %c3_636 = arith.constant 3 : index
    %c0_637 = arith.constant 0 : index
    %733 = vector.load %arg7[%c0_635, %c3_636, %c0_637] : memref<6x24x128xf32, #tpu.memory_space<vmem>>, vector<1x16x128xf32>
    %734 = vector.shape_cast %733 : vector<1x16x128xf32> to vector<16x128xf32>
    %735 = vector.broadcast %689 : f32 to vector<16x128xf32>
    %736 = arith.mulf %734, %735 : vector<16x128xf32>
    %737 = arith.addf %732, %736 : vector<16x128xf32>
    %c0_638 = arith.constant 0 : index
    %c4_639 = arith.constant 4 : index
    %c0_640 = arith.constant 0 : index
    %738 = vector.load %arg7[%c0_638, %c4_639, %c0_640] : memref<6x24x128xf32, #tpu.memory_space<vmem>>, vector<1x16x128xf32>
    %739 = vector.shape_cast %738 : vector<1x16x128xf32> to vector<16x128xf32>
    %740 = vector.broadcast %696 : f32 to vector<16x128xf32>
    %741 = arith.mulf %739, %740 : vector<16x128xf32>
    %742 = arith.addf %737, %741 : vector<16x128xf32>
    %c0_641 = arith.constant 0 : index
    %c5_642 = arith.constant 5 : index
    %c0_643 = arith.constant 0 : index
    %743 = vector.load %arg7[%c0_641, %c5_642, %c0_643] : memref<6x24x128xf32, #tpu.memory_space<vmem>>, vector<1x16x128xf32>
    %744 = vector.shape_cast %743 : vector<1x16x128xf32> to vector<16x128xf32>
    %745 = vector.broadcast %703 : f32 to vector<16x128xf32>
    %746 = arith.mulf %744, %745 : vector<16x128xf32>
    %747 = arith.addf %742, %746 : vector<16x128xf32>
    %c0_644 = arith.constant 0 : index
    %c6_645 = arith.constant 6 : index
    %c0_646 = arith.constant 0 : index
    %748 = vector.load %arg7[%c0_644, %c6_645, %c0_646] : memref<6x24x128xf32, #tpu.memory_space<vmem>>, vector<1x16x128xf32>
    %749 = vector.shape_cast %748 : vector<1x16x128xf32> to vector<16x128xf32>
    %750 = vector.broadcast %710 : f32 to vector<16x128xf32>
    %751 = arith.mulf %749, %750 : vector<16x128xf32>
    %752 = arith.addf %747, %751 : vector<16x128xf32>
    %c1_647 = arith.constant 1 : index
    %c0_648 = arith.constant 0 : index
    %c0_649 = arith.constant 0 : index
    %753 = vector.load %arg7[%c1_647, %c0_648, %c0_649] : memref<6x24x128xf32, #tpu.memory_space<vmem>>, vector<1x16x128xf32>
    %754 = vector.shape_cast %753 : vector<1x16x128xf32> to vector<16x128xf32>
    %755 = vector.broadcast %669 : f32 to vector<16x128xf32>
    %756 = arith.mulf %754, %755 : vector<16x128xf32>
    %757 = arith.addf %752, %756 : vector<16x128xf32>
    %c1_650 = arith.constant 1 : index
    %c1_651 = arith.constant 1 : index
    %c0_652 = arith.constant 0 : index
    %758 = vector.load %arg7[%c1_650, %c1_651, %c0_652] : memref<6x24x128xf32, #tpu.memory_space<vmem>>, vector<1x16x128xf32>
    %759 = vector.shape_cast %758 : vector<1x16x128xf32> to vector<16x128xf32>
    %760 = vector.broadcast %676 : f32 to vector<16x128xf32>
    %761 = arith.mulf %759, %760 : vector<16x128xf32>
    %762 = arith.addf %757, %761 : vector<16x128xf32>
    %c1_653 = arith.constant 1 : index
    %c2_654 = arith.constant 2 : index
    %c0_655 = arith.constant 0 : index
    %763 = vector.load %arg7[%c1_653, %c2_654, %c0_655] : memref<6x24x128xf32, #tpu.memory_space<vmem>>, vector<1x16x128xf32>
    %764 = vector.shape_cast %763 : vector<1x16x128xf32> to vector<16x128xf32>
    %765 = vector.broadcast %683 : f32 to vector<16x128xf32>
    %766 = arith.mulf %764, %765 : vector<16x128xf32>
    %767 = arith.addf %762, %766 : vector<16x128xf32>
    %c1_656 = arith.constant 1 : index
    %c3_657 = arith.constant 3 : index
    %c0_658 = arith.constant 0 : index
    %768 = vector.load %arg7[%c1_656, %c3_657, %c0_658] : memref<6x24x128xf32, #tpu.memory_space<vmem>>, vector<1x16x128xf32>
    %769 = vector.shape_cast %768 : vector<1x16x128xf32> to vector<16x128xf32>
    %770 = vector.broadcast %690 : f32 to vector<16x128xf32>
    %771 = arith.mulf %769, %770 : vector<16x128xf32>
    %772 = arith.addf %767, %771 : vector<16x128xf32>
    %c1_659 = arith.constant 1 : index
    %c4_660 = arith.constant 4 : index
    %c0_661 = arith.constant 0 : index
    %773 = vector.load %arg7[%c1_659, %c4_660, %c0_661] : memref<6x24x128xf32, #tpu.memory_space<vmem>>, vector<1x16x128xf32>
    %774 = vector.shape_cast %773 : vector<1x16x128xf32> to vector<16x128xf32>
    %775 = vector.broadcast %697 : f32 to vector<16x128xf32>
    %776 = arith.mulf %774, %775 : vector<16x128xf32>
    %777 = arith.addf %772, %776 : vector<16x128xf32>
    %c1_662 = arith.constant 1 : index
    %c5_663 = arith.constant 5 : index
    %c0_664 = arith.constant 0 : index
    %778 = vector.load %arg7[%c1_662, %c5_663, %c0_664] : memref<6x24x128xf32, #tpu.memory_space<vmem>>, vector<1x16x128xf32>
    %779 = vector.shape_cast %778 : vector<1x16x128xf32> to vector<16x128xf32>
    %780 = vector.broadcast %704 : f32 to vector<16x128xf32>
    %781 = arith.mulf %779, %780 : vector<16x128xf32>
    %782 = arith.addf %777, %781 : vector<16x128xf32>
    %c1_665 = arith.constant 1 : index
    %c6_666 = arith.constant 6 : index
    %c0_667 = arith.constant 0 : index
    %783 = vector.load %arg7[%c1_665, %c6_666, %c0_667] : memref<6x24x128xf32, #tpu.memory_space<vmem>>, vector<1x16x128xf32>
    %784 = vector.shape_cast %783 : vector<1x16x128xf32> to vector<16x128xf32>
    %785 = vector.broadcast %711 : f32 to vector<16x128xf32>
    %786 = arith.mulf %784, %785 : vector<16x128xf32>
    %787 = arith.addf %782, %786 : vector<16x128xf32>
    %c2_668 = arith.constant 2 : index
    %c0_669 = arith.constant 0 : index
    %c0_670 = arith.constant 0 : index
    %788 = vector.load %arg7[%c2_668, %c0_669, %c0_670] : memref<6x24x128xf32, #tpu.memory_space<vmem>>, vector<1x16x128xf32>
    %789 = vector.shape_cast %788 : vector<1x16x128xf32> to vector<16x128xf32>
    %790 = vector.broadcast %670 : f32 to vector<16x128xf32>
    %791 = arith.mulf %789, %790 : vector<16x128xf32>
    %792 = arith.addf %787, %791 : vector<16x128xf32>
    %c2_671 = arith.constant 2 : index
    %c1_672 = arith.constant 1 : index
    %c0_673 = arith.constant 0 : index
    %793 = vector.load %arg7[%c2_671, %c1_672, %c0_673] : memref<6x24x128xf32, #tpu.memory_space<vmem>>, vector<1x16x128xf32>
    %794 = vector.shape_cast %793 : vector<1x16x128xf32> to vector<16x128xf32>
    %795 = vector.broadcast %677 : f32 to vector<16x128xf32>
    %796 = arith.mulf %794, %795 : vector<16x128xf32>
    %797 = arith.addf %792, %796 : vector<16x128xf32>
    %c2_674 = arith.constant 2 : index
    %c2_675 = arith.constant 2 : index
    %c0_676 = arith.constant 0 : index
    %798 = vector.load %arg7[%c2_674, %c2_675, %c0_676] : memref<6x24x128xf32, #tpu.memory_space<vmem>>, vector<1x16x128xf32>
    %799 = vector.shape_cast %798 : vector<1x16x128xf32> to vector<16x128xf32>
    %800 = vector.broadcast %684 : f32 to vector<16x128xf32>
    %801 = arith.mulf %799, %800 : vector<16x128xf32>
    %802 = arith.addf %797, %801 : vector<16x128xf32>
    %c2_677 = arith.constant 2 : index
    %c3_678 = arith.constant 3 : index
    %c0_679 = arith.constant 0 : index
    %803 = vector.load %arg7[%c2_677, %c3_678, %c0_679] : memref<6x24x128xf32, #tpu.memory_space<vmem>>, vector<1x16x128xf32>
    %804 = vector.shape_cast %803 : vector<1x16x128xf32> to vector<16x128xf32>
    %805 = vector.broadcast %691 : f32 to vector<16x128xf32>
    %806 = arith.mulf %804, %805 : vector<16x128xf32>
    %807 = arith.addf %802, %806 : vector<16x128xf32>
    %c2_680 = arith.constant 2 : index
    %c4_681 = arith.constant 4 : index
    %c0_682 = arith.constant 0 : index
    %808 = vector.load %arg7[%c2_680, %c4_681, %c0_682] : memref<6x24x128xf32, #tpu.memory_space<vmem>>, vector<1x16x128xf32>
    %809 = vector.shape_cast %808 : vector<1x16x128xf32> to vector<16x128xf32>
    %810 = vector.broadcast %698 : f32 to vector<16x128xf32>
    %811 = arith.mulf %809, %810 : vector<16x128xf32>
    %812 = arith.addf %807, %811 : vector<16x128xf32>
    %c2_683 = arith.constant 2 : index
    %c5_684 = arith.constant 5 : index
    %c0_685 = arith.constant 0 : index
    %813 = vector.load %arg7[%c2_683, %c5_684, %c0_685] : memref<6x24x128xf32, #tpu.memory_space<vmem>>, vector<1x16x128xf32>
    %814 = vector.shape_cast %813 : vector<1x16x128xf32> to vector<16x128xf32>
    %815 = vector.broadcast %705 : f32 to vector<16x128xf32>
    %816 = arith.mulf %814, %815 : vector<16x128xf32>
    %817 = arith.addf %812, %816 : vector<16x128xf32>
    %c2_686 = arith.constant 2 : index
    %c6_687 = arith.constant 6 : index
    %c0_688 = arith.constant 0 : index
    %818 = vector.load %arg7[%c2_686, %c6_687, %c0_688] : memref<6x24x128xf32, #tpu.memory_space<vmem>>, vector<1x16x128xf32>
    %819 = vector.shape_cast %818 : vector<1x16x128xf32> to vector<16x128xf32>
    %820 = vector.broadcast %712 : f32 to vector<16x128xf32>
    %821 = arith.mulf %819, %820 : vector<16x128xf32>
    %822 = arith.addf %817, %821 : vector<16x128xf32>
    %c0_689 = arith.constant 0 : index
    %c0_690 = arith.constant 0 : index
    %823 = vector.load %arg6[%c0_689, %c0_690] : memref<24x128xf32, #tpu.memory_space<vmem>>, vector<16x128xf32>
    %824 = vector.broadcast %671 : f32 to vector<16x128xf32>
    %825 = arith.mulf %823, %824 : vector<16x128xf32>
    %826 = arith.addf %822, %825 : vector<16x128xf32>
    %c1_691 = arith.constant 1 : index
    %c0_692 = arith.constant 0 : index
    %827 = vector.load %arg6[%c1_691, %c0_692] : memref<24x128xf32, #tpu.memory_space<vmem>>, vector<16x128xf32>
    %828 = vector.broadcast %678 : f32 to vector<16x128xf32>
    %829 = arith.mulf %827, %828 : vector<16x128xf32>
    %830 = arith.addf %826, %829 : vector<16x128xf32>
    %c2_693 = arith.constant 2 : index
    %c0_694 = arith.constant 0 : index
    %831 = vector.load %arg6[%c2_693, %c0_694] : memref<24x128xf32, #tpu.memory_space<vmem>>, vector<16x128xf32>
    %832 = vector.broadcast %685 : f32 to vector<16x128xf32>
    %833 = arith.mulf %831, %832 : vector<16x128xf32>
    %834 = arith.addf %830, %833 : vector<16x128xf32>
    %c3_695 = arith.constant 3 : index
    %c0_696 = arith.constant 0 : index
    %835 = vector.load %arg6[%c3_695, %c0_696] : memref<24x128xf32, #tpu.memory_space<vmem>>, vector<16x128xf32>
    %836 = vector.broadcast %692 : f32 to vector<16x128xf32>
    %837 = arith.mulf %835, %836 : vector<16x128xf32>
    %838 = arith.addf %834, %837 : vector<16x128xf32>
    %c4_697 = arith.constant 4 : index
    %c0_698 = arith.constant 0 : index
    %839 = vector.load %arg6[%c4_697, %c0_698] : memref<24x128xf32, #tpu.memory_space<vmem>>, vector<16x128xf32>
    %840 = vector.broadcast %699 : f32 to vector<16x128xf32>
    %841 = arith.mulf %839, %840 : vector<16x128xf32>
    %842 = arith.addf %838, %841 : vector<16x128xf32>
    %c5_699 = arith.constant 5 : index
    %c0_700 = arith.constant 0 : index
    %843 = vector.load %arg6[%c5_699, %c0_700] : memref<24x128xf32, #tpu.memory_space<vmem>>, vector<16x128xf32>
    %844 = vector.broadcast %706 : f32 to vector<16x128xf32>
    %845 = arith.mulf %843, %844 : vector<16x128xf32>
    %846 = arith.addf %842, %845 : vector<16x128xf32>
    %c6_701 = arith.constant 6 : index
    %c0_702 = arith.constant 0 : index
    %847 = vector.load %arg6[%c6_701, %c0_702] : memref<24x128xf32, #tpu.memory_space<vmem>>, vector<16x128xf32>
    %848 = vector.broadcast %713 : f32 to vector<16x128xf32>
    %849 = arith.mulf %847, %848 : vector<16x128xf32>
    %850 = arith.addf %846, %849 : vector<16x128xf32>
    %c3_703 = arith.constant 3 : index
    %c0_704 = arith.constant 0 : index
    %c0_705 = arith.constant 0 : index
    %851 = vector.load %arg7[%c3_703, %c0_704, %c0_705] : memref<6x24x128xf32, #tpu.memory_space<vmem>>, vector<1x16x128xf32>
    %852 = vector.shape_cast %851 : vector<1x16x128xf32> to vector<16x128xf32>
    %853 = vector.broadcast %672 : f32 to vector<16x128xf32>
    %854 = arith.mulf %852, %853 : vector<16x128xf32>
    %855 = arith.addf %850, %854 : vector<16x128xf32>
    %c3_706 = arith.constant 3 : index
    %c1_707 = arith.constant 1 : index
    %c0_708 = arith.constant 0 : index
    %856 = vector.load %arg7[%c3_706, %c1_707, %c0_708] : memref<6x24x128xf32, #tpu.memory_space<vmem>>, vector<1x16x128xf32>
    %857 = vector.shape_cast %856 : vector<1x16x128xf32> to vector<16x128xf32>
    %858 = vector.broadcast %679 : f32 to vector<16x128xf32>
    %859 = arith.mulf %857, %858 : vector<16x128xf32>
    %860 = arith.addf %855, %859 : vector<16x128xf32>
    %c3_709 = arith.constant 3 : index
    %c2_710 = arith.constant 2 : index
    %c0_711 = arith.constant 0 : index
    %861 = vector.load %arg7[%c3_709, %c2_710, %c0_711] : memref<6x24x128xf32, #tpu.memory_space<vmem>>, vector<1x16x128xf32>
    %862 = vector.shape_cast %861 : vector<1x16x128xf32> to vector<16x128xf32>
    %863 = vector.broadcast %686 : f32 to vector<16x128xf32>
    %864 = arith.mulf %862, %863 : vector<16x128xf32>
    %865 = arith.addf %860, %864 : vector<16x128xf32>
    %c3_712 = arith.constant 3 : index
    %c3_713 = arith.constant 3 : index
    %c0_714 = arith.constant 0 : index
    %866 = vector.load %arg7[%c3_712, %c3_713, %c0_714] : memref<6x24x128xf32, #tpu.memory_space<vmem>>, vector<1x16x128xf32>
    %867 = vector.shape_cast %866 : vector<1x16x128xf32> to vector<16x128xf32>
    %868 = vector.broadcast %693 : f32 to vector<16x128xf32>
    %869 = arith.mulf %867, %868 : vector<16x128xf32>
    %870 = arith.addf %865, %869 : vector<16x128xf32>
    %c3_715 = arith.constant 3 : index
    %c4_716 = arith.constant 4 : index
    %c0_717 = arith.constant 0 : index
    %871 = vector.load %arg7[%c3_715, %c4_716, %c0_717] : memref<6x24x128xf32, #tpu.memory_space<vmem>>, vector<1x16x128xf32>
    %872 = vector.shape_cast %871 : vector<1x16x128xf32> to vector<16x128xf32>
    %873 = vector.broadcast %700 : f32 to vector<16x128xf32>
    %874 = arith.mulf %872, %873 : vector<16x128xf32>
    %875 = arith.addf %870, %874 : vector<16x128xf32>
    %c3_718 = arith.constant 3 : index
    %c5_719 = arith.constant 5 : index
    %c0_720 = arith.constant 0 : index
    %876 = vector.load %arg7[%c3_718, %c5_719, %c0_720] : memref<6x24x128xf32, #tpu.memory_space<vmem>>, vector<1x16x128xf32>
    %877 = vector.shape_cast %876 : vector<1x16x128xf32> to vector<16x128xf32>
    %878 = vector.broadcast %707 : f32 to vector<16x128xf32>
    %879 = arith.mulf %877, %878 : vector<16x128xf32>
    %880 = arith.addf %875, %879 : vector<16x128xf32>
    %c3_721 = arith.constant 3 : index
    %c6_722 = arith.constant 6 : index
    %c0_723 = arith.constant 0 : index
    %881 = vector.load %arg7[%c3_721, %c6_722, %c0_723] : memref<6x24x128xf32, #tpu.memory_space<vmem>>, vector<1x16x128xf32>
    %882 = vector.shape_cast %881 : vector<1x16x128xf32> to vector<16x128xf32>
    %883 = vector.broadcast %714 : f32 to vector<16x128xf32>
    %884 = arith.mulf %882, %883 : vector<16x128xf32>
    %885 = arith.addf %880, %884 : vector<16x128xf32>
    %c4_724 = arith.constant 4 : index
    %c0_725 = arith.constant 0 : index
    %c0_726 = arith.constant 0 : index
    %886 = vector.load %arg7[%c4_724, %c0_725, %c0_726] : memref<6x24x128xf32, #tpu.memory_space<vmem>>, vector<1x16x128xf32>
    %887 = vector.shape_cast %886 : vector<1x16x128xf32> to vector<16x128xf32>
    %888 = vector.broadcast %673 : f32 to vector<16x128xf32>
    %889 = arith.mulf %887, %888 : vector<16x128xf32>
    %890 = arith.addf %885, %889 : vector<16x128xf32>
    %c4_727 = arith.constant 4 : index
    %c1_728 = arith.constant 1 : index
    %c0_729 = arith.constant 0 : index
    %891 = vector.load %arg7[%c4_727, %c1_728, %c0_729] : memref<6x24x128xf32, #tpu.memory_space<vmem>>, vector<1x16x128xf32>
    %892 = vector.shape_cast %891 : vector<1x16x128xf32> to vector<16x128xf32>
    %893 = vector.broadcast %680 : f32 to vector<16x128xf32>
    %894 = arith.mulf %892, %893 : vector<16x128xf32>
    %895 = arith.addf %890, %894 : vector<16x128xf32>
    %c4_730 = arith.constant 4 : index
    %c2_731 = arith.constant 2 : index
    %c0_732 = arith.constant 0 : index
    %896 = vector.load %arg7[%c4_730, %c2_731, %c0_732] : memref<6x24x128xf32, #tpu.memory_space<vmem>>, vector<1x16x128xf32>
    %897 = vector.shape_cast %896 : vector<1x16x128xf32> to vector<16x128xf32>
    %898 = vector.broadcast %687 : f32 to vector<16x128xf32>
    %899 = arith.mulf %897, %898 : vector<16x128xf32>
    %900 = arith.addf %895, %899 : vector<16x128xf32>
    %c4_733 = arith.constant 4 : index
    %c3_734 = arith.constant 3 : index
    %c0_735 = arith.constant 0 : index
    %901 = vector.load %arg7[%c4_733, %c3_734, %c0_735] : memref<6x24x128xf32, #tpu.memory_space<vmem>>, vector<1x16x128xf32>
    %902 = vector.shape_cast %901 : vector<1x16x128xf32> to vector<16x128xf32>
    %903 = vector.broadcast %694 : f32 to vector<16x128xf32>
    %904 = arith.mulf %902, %903 : vector<16x128xf32>
    %905 = arith.addf %900, %904 : vector<16x128xf32>
    %c4_736 = arith.constant 4 : index
    %c4_737 = arith.constant 4 : index
    %c0_738 = arith.constant 0 : index
    %906 = vector.load %arg7[%c4_736, %c4_737, %c0_738] : memref<6x24x128xf32, #tpu.memory_space<vmem>>, vector<1x16x128xf32>
    %907 = vector.shape_cast %906 : vector<1x16x128xf32> to vector<16x128xf32>
    %908 = vector.broadcast %701 : f32 to vector<16x128xf32>
    %909 = arith.mulf %907, %908 : vector<16x128xf32>
    %910 = arith.addf %905, %909 : vector<16x128xf32>
    %c4_739 = arith.constant 4 : index
    %c5_740 = arith.constant 5 : index
    %c0_741 = arith.constant 0 : index
    %911 = vector.load %arg7[%c4_739, %c5_740, %c0_741] : memref<6x24x128xf32, #tpu.memory_space<vmem>>, vector<1x16x128xf32>
    %912 = vector.shape_cast %911 : vector<1x16x128xf32> to vector<16x128xf32>
    %913 = vector.broadcast %708 : f32 to vector<16x128xf32>
    %914 = arith.mulf %912, %913 : vector<16x128xf32>
    %915 = arith.addf %910, %914 : vector<16x128xf32>
    %c4_742 = arith.constant 4 : index
    %c6_743 = arith.constant 6 : index
    %c0_744 = arith.constant 0 : index
    %916 = vector.load %arg7[%c4_742, %c6_743, %c0_744] : memref<6x24x128xf32, #tpu.memory_space<vmem>>, vector<1x16x128xf32>
    %917 = vector.shape_cast %916 : vector<1x16x128xf32> to vector<16x128xf32>
    %918 = vector.broadcast %715 : f32 to vector<16x128xf32>
    %919 = arith.mulf %917, %918 : vector<16x128xf32>
    %920 = arith.addf %915, %919 : vector<16x128xf32>
    %c5_745 = arith.constant 5 : index
    %c0_746 = arith.constant 0 : index
    %c0_747 = arith.constant 0 : index
    %921 = vector.load %arg7[%c5_745, %c0_746, %c0_747] : memref<6x24x128xf32, #tpu.memory_space<vmem>>, vector<1x16x128xf32>
    %922 = vector.shape_cast %921 : vector<1x16x128xf32> to vector<16x128xf32>
    %923 = vector.broadcast %674 : f32 to vector<16x128xf32>
    %924 = arith.mulf %922, %923 : vector<16x128xf32>
    %925 = arith.addf %920, %924 : vector<16x128xf32>
    %c5_748 = arith.constant 5 : index
    %c1_749 = arith.constant 1 : index
    %c0_750 = arith.constant 0 : index
    %926 = vector.load %arg7[%c5_748, %c1_749, %c0_750] : memref<6x24x128xf32, #tpu.memory_space<vmem>>, vector<1x16x128xf32>
    %927 = vector.shape_cast %926 : vector<1x16x128xf32> to vector<16x128xf32>
    %928 = vector.broadcast %681 : f32 to vector<16x128xf32>
    %929 = arith.mulf %927, %928 : vector<16x128xf32>
    %930 = arith.addf %925, %929 : vector<16x128xf32>
    %c5_751 = arith.constant 5 : index
    %c2_752 = arith.constant 2 : index
    %c0_753 = arith.constant 0 : index
    %931 = vector.load %arg7[%c5_751, %c2_752, %c0_753] : memref<6x24x128xf32, #tpu.memory_space<vmem>>, vector<1x16x128xf32>
    %932 = vector.shape_cast %931 : vector<1x16x128xf32> to vector<16x128xf32>
    %933 = vector.broadcast %688 : f32 to vector<16x128xf32>
    %934 = arith.mulf %932, %933 : vector<16x128xf32>
    %935 = arith.addf %930, %934 : vector<16x128xf32>
    %c5_754 = arith.constant 5 : index
    %c3_755 = arith.constant 3 : index
    %c0_756 = arith.constant 0 : index
    %936 = vector.load %arg7[%c5_754, %c3_755, %c0_756] : memref<6x24x128xf32, #tpu.memory_space<vmem>>, vector<1x16x128xf32>
    %937 = vector.shape_cast %936 : vector<1x16x128xf32> to vector<16x128xf32>
    %938 = vector.broadcast %695 : f32 to vector<16x128xf32>
    %939 = arith.mulf %937, %938 : vector<16x128xf32>
    %940 = arith.addf %935, %939 : vector<16x128xf32>
    %c5_757 = arith.constant 5 : index
    %c4_758 = arith.constant 4 : index
    %c0_759 = arith.constant 0 : index
    %941 = vector.load %arg7[%c5_757, %c4_758, %c0_759] : memref<6x24x128xf32, #tpu.memory_space<vmem>>, vector<1x16x128xf32>
    %942 = vector.shape_cast %941 : vector<1x16x128xf32> to vector<16x128xf32>
    %943 = vector.broadcast %702 : f32 to vector<16x128xf32>
    %944 = arith.mulf %942, %943 : vector<16x128xf32>
    %945 = arith.addf %940, %944 : vector<16x128xf32>
    %c5_760 = arith.constant 5 : index
    %c5_761 = arith.constant 5 : index
    %c0_762 = arith.constant 0 : index
    %946 = vector.load %arg7[%c5_760, %c5_761, %c0_762] : memref<6x24x128xf32, #tpu.memory_space<vmem>>, vector<1x16x128xf32>
    %947 = vector.shape_cast %946 : vector<1x16x128xf32> to vector<16x128xf32>
    %948 = vector.broadcast %709 : f32 to vector<16x128xf32>
    %949 = arith.mulf %947, %948 : vector<16x128xf32>
    %950 = arith.addf %945, %949 : vector<16x128xf32>
    %c5_763 = arith.constant 5 : index
    %c6_764 = arith.constant 6 : index
    %c0_765 = arith.constant 0 : index
    %951 = vector.load %arg7[%c5_763, %c6_764, %c0_765] : memref<6x24x128xf32, #tpu.memory_space<vmem>>, vector<1x16x128xf32>
    %952 = vector.shape_cast %951 : vector<1x16x128xf32> to vector<16x128xf32>
    %953 = vector.broadcast %716 : f32 to vector<16x128xf32>
    %954 = arith.mulf %952, %953 : vector<16x128xf32>
    %955 = arith.addf %950, %954 : vector<16x128xf32>
    %c2_766 = arith.constant 2 : index
    %c0_767 = arith.constant 0 : index
    %c0_768 = arith.constant 0 : index
    %956 = vector.load %arg8[%c2_766, %c0_767, %c0_768] : memref<4x16x128xf32, #tpu.memory_space<vmem>>, vector<1x16x128xf32>
    %957 = vector.shape_cast %956 : vector<1x16x128xf32> to vector<16x128xf32>
    %958 = vector.shape_cast %955 : vector<16x128xf32> to vector<1x16x128xf32>
    tpu.vector_store %arg8[%c2_766, %c0_767, %c0_768], %958 {strides = array<i32>} : memref<4x16x128xf32, #tpu.memory_space<vmem>>, vector<1x16x128xf32>,
    %c0_769 = arith.constant 0 : index
    %c3_770 = arith.constant 3 : index
    %c0_771 = arith.constant 0 : index
    %c0_772 = arith.constant 0 : index
    %959 = vector.load %arg1[%c0_769, %c3_770, %c0_771, %c0_772] : memref<1x4x16x16xf32, #tpu.memory_space<vmem>>, vector<1x1x16x16xf32>
    %960 = vector.shape_cast %959 : vector<1x1x16x16xf32> to vector<16x16xf32>
    %c3_773 = arith.constant 3 : index
    %c0_774 = arith.constant 0 : index
    %961 = vector.load %arg6[%c3_773, %c0_774] : memref<24x128xf32, #tpu.memory_space<vmem>>, vector<16x16xf32>
    tpu.vector_store %arg6[%c3_773, %c0_774], %960 {strides = array<i32>} : memref<24x128xf32, #tpu.memory_space<vmem>>, vector<16x16xf32>,
    %c0_775 = arith.constant 0 : index
    %c0_776 = arith.constant 0 : index
    %962 = vector.load %arg6[%c0_775, %c0_776] : memref<24x128xf32, #tpu.memory_space<vmem>>, vector<24x128xf32>
    %c3_i32_777 = arith.constant 3 : i32
    %963 = tpu.dynamic_rotate %962 by %c3_i32_777 dim 1 : vector<24x128xf32>, i32 -> vector<24x128xf32>
    %c0_778 = arith.constant 0 : index
    %c0_779 = arith.constant 0 : index
    %c0_780 = arith.constant 0 : index
    %964 = vector.load %arg7[%c0_778, %c0_779, %c0_780] : memref<6x24x128xf32, #tpu.memory_space<vmem>>, vector<1x24x128xf32>
    %965 = vector.shape_cast %964 : vector<1x24x128xf32> to vector<24x128xf32>
    %966 = vector.shape_cast %963 : vector<24x128xf32> to vector<1x24x128xf32>
    tpu.vector_store %arg7[%c0_778, %c0_779, %c0_780], %966 {strides = array<i32>} : memref<6x24x128xf32, #tpu.memory_space<vmem>>, vector<1x24x128xf32>,
    %c2_i32_781 = arith.constant 2 : i32
    %967 = tpu.dynamic_rotate %962 by %c2_i32_781 dim 1 : vector<24x128xf32>, i32 -> vector<24x128xf32>
    %c1_782 = arith.constant 1 : index
    %c0_783 = arith.constant 0 : index
    %c0_784 = arith.constant 0 : index
    %968 = vector.load %arg7[%c1_782, %c0_783, %c0_784] : memref<6x24x128xf32, #tpu.memory_space<vmem>>, vector<1x24x128xf32>
    %969 = vector.shape_cast %968 : vector<1x24x128xf32> to vector<24x128xf32>
    %970 = vector.shape_cast %967 : vector<24x128xf32> to vector<1x24x128xf32>
    tpu.vector_store %arg7[%c1_782, %c0_783, %c0_784], %970 {strides = array<i32>} : memref<6x24x128xf32, #tpu.memory_space<vmem>>, vector<1x24x128xf32>,
    %c1_i32_785 = arith.constant 1 : i32
    %971 = tpu.dynamic_rotate %962 by %c1_i32_785 dim 1 : vector<24x128xf32>, i32 -> vector<24x128xf32>
    %c2_786 = arith.constant 2 : index
    %c0_787 = arith.constant 0 : index
    %c0_788 = arith.constant 0 : index
    %972 = vector.load %arg7[%c2_786, %c0_787, %c0_788] : memref<6x24x128xf32, #tpu.memory_space<vmem>>, vector<1x24x128xf32>
    %973 = vector.shape_cast %972 : vector<1x24x128xf32> to vector<24x128xf32>
    %974 = vector.shape_cast %971 : vector<24x128xf32> to vector<1x24x128xf32>
    tpu.vector_store %arg7[%c2_786, %c0_787, %c0_788], %974 {strides = array<i32>} : memref<6x24x128xf32, #tpu.memory_space<vmem>>, vector<1x24x128xf32>,
    %c127_i32_789 = arith.constant 127 : i32
    %975 = tpu.dynamic_rotate %962 by %c127_i32_789 dim 1 : vector<24x128xf32>, i32 -> vector<24x128xf32>
    %c3_790 = arith.constant 3 : index
    %c0_791 = arith.constant 0 : index
    %c0_792 = arith.constant 0 : index
    %976 = vector.load %arg7[%c3_790, %c0_791, %c0_792] : memref<6x24x128xf32, #tpu.memory_space<vmem>>, vector<1x24x128xf32>
    %977 = vector.shape_cast %976 : vector<1x24x128xf32> to vector<24x128xf32>
    %978 = vector.shape_cast %975 : vector<24x128xf32> to vector<1x24x128xf32>
    tpu.vector_store %arg7[%c3_790, %c0_791, %c0_792], %978 {strides = array<i32>} : memref<6x24x128xf32, #tpu.memory_space<vmem>>, vector<1x24x128xf32>,
    %c126_i32_793 = arith.constant 126 : i32
    %979 = tpu.dynamic_rotate %962 by %c126_i32_793 dim 1 : vector<24x128xf32>, i32 -> vector<24x128xf32>
    %c4_794 = arith.constant 4 : index
    %c0_795 = arith.constant 0 : index
    %c0_796 = arith.constant 0 : index
    %980 = vector.load %arg7[%c4_794, %c0_795, %c0_796] : memref<6x24x128xf32, #tpu.memory_space<vmem>>, vector<1x24x128xf32>
    %981 = vector.shape_cast %980 : vector<1x24x128xf32> to vector<24x128xf32>
    %982 = vector.shape_cast %979 : vector<24x128xf32> to vector<1x24x128xf32>
    tpu.vector_store %arg7[%c4_794, %c0_795, %c0_796], %982 {strides = array<i32>} : memref<6x24x128xf32, #tpu.memory_space<vmem>>, vector<1x24x128xf32>,
    %c125_i32_797 = arith.constant 125 : i32
    %983 = tpu.dynamic_rotate %962 by %c125_i32_797 dim 1 : vector<24x128xf32>, i32 -> vector<24x128xf32>
    %c5_798 = arith.constant 5 : index
    %c0_799 = arith.constant 0 : index
    %c0_800 = arith.constant 0 : index
    %984 = vector.load %arg7[%c5_798, %c0_799, %c0_800] : memref<6x24x128xf32, #tpu.memory_space<vmem>>, vector<1x24x128xf32>
    %985 = vector.shape_cast %984 : vector<1x24x128xf32> to vector<24x128xf32>
    %986 = vector.shape_cast %983 : vector<24x128xf32> to vector<1x24x128xf32>
    tpu.vector_store %arg7[%c5_798, %c0_799, %c0_800], %986 {strides = array<i32>} : memref<6x24x128xf32, #tpu.memory_space<vmem>>, vector<1x24x128xf32>,
    %c3_801 = arith.constant 3 : index
    %c0_802 = arith.constant 0 : index
    %987 = memref.load %arg2[%c3_801, %c0_802] : memref<4x49xf32, #tpu.memory_space<smem>>
    %c3_803 = arith.constant 3 : index
    %c1_804 = arith.constant 1 : index
    %988 = memref.load %arg2[%c3_803, %c1_804] : memref<4x49xf32, #tpu.memory_space<smem>>
    %c3_805 = arith.constant 3 : index
    %c2_806 = arith.constant 2 : index
    %989 = memref.load %arg2[%c3_805, %c2_806] : memref<4x49xf32, #tpu.memory_space<smem>>
    %c3_807 = arith.constant 3 : index
    %c3_808 = arith.constant 3 : index
    %990 = memref.load %arg2[%c3_807, %c3_808] : memref<4x49xf32, #tpu.memory_space<smem>>
    %c3_809 = arith.constant 3 : index
    %c4_810 = arith.constant 4 : index
    %991 = memref.load %arg2[%c3_809, %c4_810] : memref<4x49xf32, #tpu.memory_space<smem>>
    %c3_811 = arith.constant 3 : index
    %c5_812 = arith.constant 5 : index
    %992 = memref.load %arg2[%c3_811, %c5_812] : memref<4x49xf32, #tpu.memory_space<smem>>
    %c3_813 = arith.constant 3 : index
    %c6_814 = arith.constant 6 : index
    %993 = memref.load %arg2[%c3_813, %c6_814] : memref<4x49xf32, #tpu.memory_space<smem>>
    %c3_815 = arith.constant 3 : index
    %c7_816 = arith.constant 7 : index
    %994 = memref.load %arg2[%c3_815, %c7_816] : memref<4x49xf32, #tpu.memory_space<smem>>
    %c3_817 = arith.constant 3 : index
    %c8_818 = arith.constant 8 : index
    %995 = memref.load %arg2[%c3_817, %c8_818] : memref<4x49xf32, #tpu.memory_space<smem>>
    %c3_819 = arith.constant 3 : index
    %c9_820 = arith.constant 9 : index
    %996 = memref.load %arg2[%c3_819, %c9_820] : memref<4x49xf32, #tpu.memory_space<smem>>
    %c3_821 = arith.constant 3 : index
    %c10_822 = arith.constant 10 : index
    %997 = memref.load %arg2[%c3_821, %c10_822] : memref<4x49xf32, #tpu.memory_space<smem>>
    %c3_823 = arith.constant 3 : index
    %c11_824 = arith.constant 11 : index
    %998 = memref.load %arg2[%c3_823, %c11_824] : memref<4x49xf32, #tpu.memory_space<smem>>
    %c3_825 = arith.constant 3 : index
    %c12_826 = arith.constant 12 : index
    %999 = memref.load %arg2[%c3_825, %c12_826] : memref<4x49xf32, #tpu.memory_space<smem>>
    %c3_827 = arith.constant 3 : index
    %c13_828 = arith.constant 13 : index
    %1000 = memref.load %arg2[%c3_827, %c13_828] : memref<4x49xf32, #tpu.memory_space<smem>>
    %c3_829 = arith.constant 3 : index
    %c14_830 = arith.constant 14 : index
    %1001 = memref.load %arg2[%c3_829, %c14_830] : memref<4x49xf32, #tpu.memory_space<smem>>
    %c3_831 = arith.constant 3 : index
    %c15_832 = arith.constant 15 : index
    %1002 = memref.load %arg2[%c3_831, %c15_832] : memref<4x49xf32, #tpu.memory_space<smem>>
    %c3_833 = arith.constant 3 : index
    %c16_834 = arith.constant 16 : index
    %1003 = memref.load %arg2[%c3_833, %c16_834] : memref<4x49xf32, #tpu.memory_space<smem>>
    %c3_835 = arith.constant 3 : index
    %c17_836 = arith.constant 17 : index
    %1004 = memref.load %arg2[%c3_835, %c17_836] : memref<4x49xf32, #tpu.memory_space<smem>>
    %c3_837 = arith.constant 3 : index
    %c18_838 = arith.constant 18 : index
    %1005 = memref.load %arg2[%c3_837, %c18_838] : memref<4x49xf32, #tpu.memory_space<smem>>
    %c3_839 = arith.constant 3 : index
    %c19_840 = arith.constant 19 : index
    %1006 = memref.load %arg2[%c3_839, %c19_840] : memref<4x49xf32, #tpu.memory_space<smem>>
    %c3_841 = arith.constant 3 : index
    %c20_842 = arith.constant 20 : index
    %1007 = memref.load %arg2[%c3_841, %c20_842] : memref<4x49xf32, #tpu.memory_space<smem>>
    %c3_843 = arith.constant 3 : index
    %c21_844 = arith.constant 21 : index
    %1008 = memref.load %arg2[%c3_843, %c21_844] : memref<4x49xf32, #tpu.memory_space<smem>>
    %c3_845 = arith.constant 3 : index
    %c22_846 = arith.constant 22 : index
    %1009 = memref.load %arg2[%c3_845, %c22_846] : memref<4x49xf32, #tpu.memory_space<smem>>
    %c3_847 = arith.constant 3 : index
    %c23_848 = arith.constant 23 : index
    %1010 = memref.load %arg2[%c3_847, %c23_848] : memref<4x49xf32, #tpu.memory_space<smem>>
    %c3_849 = arith.constant 3 : index
    %c24_850 = arith.constant 24 : index
    %1011 = memref.load %arg2[%c3_849, %c24_850] : memref<4x49xf32, #tpu.memory_space<smem>>
    %c3_851 = arith.constant 3 : index
    %c25_852 = arith.constant 25 : index
    %1012 = memref.load %arg2[%c3_851, %c25_852] : memref<4x49xf32, #tpu.memory_space<smem>>
    %c3_853 = arith.constant 3 : index
    %c26_854 = arith.constant 26 : index
    %1013 = memref.load %arg2[%c3_853, %c26_854] : memref<4x49xf32, #tpu.memory_space<smem>>
    %c3_855 = arith.constant 3 : index
    %c27_856 = arith.constant 27 : index
    %1014 = memref.load %arg2[%c3_855, %c27_856] : memref<4x49xf32, #tpu.memory_space<smem>>
    %c3_857 = arith.constant 3 : index
    %c28_858 = arith.constant 28 : index
    %1015 = memref.load %arg2[%c3_857, %c28_858] : memref<4x49xf32, #tpu.memory_space<smem>>
    %c3_859 = arith.constant 3 : index
    %c29_860 = arith.constant 29 : index
    %1016 = memref.load %arg2[%c3_859, %c29_860] : memref<4x49xf32, #tpu.memory_space<smem>>
    %c3_861 = arith.constant 3 : index
    %c30_862 = arith.constant 30 : index
    %1017 = memref.load %arg2[%c3_861, %c30_862] : memref<4x49xf32, #tpu.memory_space<smem>>
    %c3_863 = arith.constant 3 : index
    %c31_864 = arith.constant 31 : index
    %1018 = memref.load %arg2[%c3_863, %c31_864] : memref<4x49xf32, #tpu.memory_space<smem>>
    %c3_865 = arith.constant 3 : index
    %c32_866 = arith.constant 32 : index
    %1019 = memref.load %arg2[%c3_865, %c32_866] : memref<4x49xf32, #tpu.memory_space<smem>>
    %c3_867 = arith.constant 3 : index
    %c33_868 = arith.constant 33 : index
    %1020 = memref.load %arg2[%c3_867, %c33_868] : memref<4x49xf32, #tpu.memory_space<smem>>
    %c3_869 = arith.constant 3 : index
    %c34_870 = arith.constant 34 : index
    %1021 = memref.load %arg2[%c3_869, %c34_870] : memref<4x49xf32, #tpu.memory_space<smem>>
    %c3_871 = arith.constant 3 : index
    %c35_872 = arith.constant 35 : index
    %1022 = memref.load %arg2[%c3_871, %c35_872] : memref<4x49xf32, #tpu.memory_space<smem>>
    %c3_873 = arith.constant 3 : index
    %c36_874 = arith.constant 36 : index
    %1023 = memref.load %arg2[%c3_873, %c36_874] : memref<4x49xf32, #tpu.memory_space<smem>>
    %c3_875 = arith.constant 3 : index
    %c37_876 = arith.constant 37 : index
    %1024 = memref.load %arg2[%c3_875, %c37_876] : memref<4x49xf32, #tpu.memory_space<smem>>
    %c3_877 = arith.constant 3 : index
    %c38_878 = arith.constant 38 : index
    %1025 = memref.load %arg2[%c3_877, %c38_878] : memref<4x49xf32, #tpu.memory_space<smem>>
    %c3_879 = arith.constant 3 : index
    %c39_880 = arith.constant 39 : index
    %1026 = memref.load %arg2[%c3_879, %c39_880] : memref<4x49xf32, #tpu.memory_space<smem>>
    %c3_881 = arith.constant 3 : index
    %c40_882 = arith.constant 40 : index
    %1027 = memref.load %arg2[%c3_881, %c40_882] : memref<4x49xf32, #tpu.memory_space<smem>>
    %c3_883 = arith.constant 3 : index
    %c41_884 = arith.constant 41 : index
    %1028 = memref.load %arg2[%c3_883, %c41_884] : memref<4x49xf32, #tpu.memory_space<smem>>
    %c3_885 = arith.constant 3 : index
    %c42_886 = arith.constant 42 : index
    %1029 = memref.load %arg2[%c3_885, %c42_886] : memref<4x49xf32, #tpu.memory_space<smem>>
    %c3_887 = arith.constant 3 : index
    %c43_888 = arith.constant 43 : index
    %1030 = memref.load %arg2[%c3_887, %c43_888] : memref<4x49xf32, #tpu.memory_space<smem>>
    %c3_889 = arith.constant 3 : index
    %c44_890 = arith.constant 44 : index
    %1031 = memref.load %arg2[%c3_889, %c44_890] : memref<4x49xf32, #tpu.memory_space<smem>>
    %c3_891 = arith.constant 3 : index
    %c45_892 = arith.constant 45 : index
    %1032 = memref.load %arg2[%c3_891, %c45_892] : memref<4x49xf32, #tpu.memory_space<smem>>
    %c3_893 = arith.constant 3 : index
    %c46_894 = arith.constant 46 : index
    %1033 = memref.load %arg2[%c3_893, %c46_894] : memref<4x49xf32, #tpu.memory_space<smem>>
    %c3_895 = arith.constant 3 : index
    %c47_896 = arith.constant 47 : index
    %1034 = memref.load %arg2[%c3_895, %c47_896] : memref<4x49xf32, #tpu.memory_space<smem>>
    %c3_897 = arith.constant 3 : index
    %c48_898 = arith.constant 48 : index
    %1035 = memref.load %arg2[%c3_897, %c48_898] : memref<4x49xf32, #tpu.memory_space<smem>>
    %cst_899 = arith.constant 0.000000e+00 : f32
    %1036 = vector.broadcast %cst_899 : f32 to vector<16x128xf32>
    %c0_900 = arith.constant 0 : index
    %c0_901 = arith.constant 0 : index
    %c0_902 = arith.constant 0 : index
    %1037 = vector.load %arg7[%c0_900, %c0_901, %c0_902] : memref<6x24x128xf32, #tpu.memory_space<vmem>>, vector<1x16x128xf32>
    %1038 = vector.shape_cast %1037 : vector<1x16x128xf32> to vector<16x128xf32>
    %1039 = vector.broadcast %987 : f32 to vector<16x128xf32>
    %1040 = arith.mulf %1038, %1039 : vector<16x128xf32>
    %1041 = arith.addf %1036, %1040 : vector<16x128xf32>
    %c0_903 = arith.constant 0 : index
    %c1_904 = arith.constant 1 : index
    %c0_905 = arith.constant 0 : index
    %1042 = vector.load %arg7[%c0_903, %c1_904, %c0_905] : memref<6x24x128xf32, #tpu.memory_space<vmem>>, vector<1x16x128xf32>
    %1043 = vector.shape_cast %1042 : vector<1x16x128xf32> to vector<16x128xf32>
    %1044 = vector.broadcast %994 : f32 to vector<16x128xf32>
    %1045 = arith.mulf %1043, %1044 : vector<16x128xf32>
    %1046 = arith.addf %1041, %1045 : vector<16x128xf32>
    %c0_906 = arith.constant 0 : index
    %c2_907 = arith.constant 2 : index
    %c0_908 = arith.constant 0 : index
    %1047 = vector.load %arg7[%c0_906, %c2_907, %c0_908] : memref<6x24x128xf32, #tpu.memory_space<vmem>>, vector<1x16x128xf32>
    %1048 = vector.shape_cast %1047 : vector<1x16x128xf32> to vector<16x128xf32>
    %1049 = vector.broadcast %1001 : f32 to vector<16x128xf32>
    %1050 = arith.mulf %1048, %1049 : vector<16x128xf32>
    %1051 = arith.addf %1046, %1050 : vector<16x128xf32>
    %c0_909 = arith.constant 0 : index
    %c3_910 = arith.constant 3 : index
    %c0_911 = arith.constant 0 : index
    %1052 = vector.load %arg7[%c0_909, %c3_910, %c0_911] : memref<6x24x128xf32, #tpu.memory_space<vmem>>, vector<1x16x128xf32>
    %1053 = vector.shape_cast %1052 : vector<1x16x128xf32> to vector<16x128xf32>
    %1054 = vector.broadcast %1008 : f32 to vector<16x128xf32>
    %1055 = arith.mulf %1053, %1054 : vector<16x128xf32>
    %1056 = arith.addf %1051, %1055 : vector<16x128xf32>
    %c0_912 = arith.constant 0 : index
    %c4_913 = arith.constant 4 : index
    %c0_914 = arith.constant 0 : index
    %1057 = vector.load %arg7[%c0_912, %c4_913, %c0_914] : memref<6x24x128xf32, #tpu.memory_space<vmem>>, vector<1x16x128xf32>
    %1058 = vector.shape_cast %1057 : vector<1x16x128xf32> to vector<16x128xf32>
    %1059 = vector.broadcast %1015 : f32 to vector<16x128xf32>
    %1060 = arith.mulf %1058, %1059 : vector<16x128xf32>
    %1061 = arith.addf %1056, %1060 : vector<16x128xf32>
    %c0_915 = arith.constant 0 : index
    %c5_916 = arith.constant 5 : index
    %c0_917 = arith.constant 0 : index
    %1062 = vector.load %arg7[%c0_915, %c5_916, %c0_917] : memref<6x24x128xf32, #tpu.memory_space<vmem>>, vector<1x16x128xf32>
    %1063 = vector.shape_cast %1062 : vector<1x16x128xf32> to vector<16x128xf32>
    %1064 = vector.broadcast %1022 : f32 to vector<16x128xf32>
    %1065 = arith.mulf %1063, %1064 : vector<16x128xf32>
    %1066 = arith.addf %1061, %1065 : vector<16x128xf32>
    %c0_918 = arith.constant 0 : index
    %c6_919 = arith.constant 6 : index
    %c0_920 = arith.constant 0 : index
    %1067 = vector.load %arg7[%c0_918, %c6_919, %c0_920] : memref<6x24x128xf32, #tpu.memory_space<vmem>>, vector<1x16x128xf32>
    %1068 = vector.shape_cast %1067 : vector<1x16x128xf32> to vector<16x128xf32>
    %1069 = vector.broadcast %1029 : f32 to vector<16x128xf32>
    %1070 = arith.mulf %1068, %1069 : vector<16x128xf32>
    %1071 = arith.addf %1066, %1070 : vector<16x128xf32>
    %c1_921 = arith.constant 1 : index
    %c0_922 = arith.constant 0 : index
    %c0_923 = arith.constant 0 : index
    %1072 = vector.load %arg7[%c1_921, %c0_922, %c0_923] : memref<6x24x128xf32, #tpu.memory_space<vmem>>, vector<1x16x128xf32>
    %1073 = vector.shape_cast %1072 : vector<1x16x128xf32> to vector<16x128xf32>
    %1074 = vector.broadcast %988 : f32 to vector<16x128xf32>
    %1075 = arith.mulf %1073, %1074 : vector<16x128xf32>
    %1076 = arith.addf %1071, %1075 : vector<16x128xf32>
    %c1_924 = arith.constant 1 : index
    %c1_925 = arith.constant 1 : index
    %c0_926 = arith.constant 0 : index
    %1077 = vector.load %arg7[%c1_924, %c1_925, %c0_926] : memref<6x24x128xf32, #tpu.memory_space<vmem>>, vector<1x16x128xf32>
    %1078 = vector.shape_cast %1077 : vector<1x16x128xf32> to vector<16x128xf32>
    %1079 = vector.broadcast %995 : f32 to vector<16x128xf32>
    %1080 = arith.mulf %1078, %1079 : vector<16x128xf32>
    %1081 = arith.addf %1076, %1080 : vector<16x128xf32>
    %c1_927 = arith.constant 1 : index
    %c2_928 = arith.constant 2 : index
    %c0_929 = arith.constant 0 : index
    %1082 = vector.load %arg7[%c1_927, %c2_928, %c0_929] : memref<6x24x128xf32, #tpu.memory_space<vmem>>, vector<1x16x128xf32>
    %1083 = vector.shape_cast %1082 : vector<1x16x128xf32> to vector<16x128xf32>
    %1084 = vector.broadcast %1002 : f32 to vector<16x128xf32>
    %1085 = arith.mulf %1083, %1084 : vector<16x128xf32>
    %1086 = arith.addf %1081, %1085 : vector<16x128xf32>
    %c1_930 = arith.constant 1 : index
    %c3_931 = arith.constant 3 : index
    %c0_932 = arith.constant 0 : index
    %1087 = vector.load %arg7[%c1_930, %c3_931, %c0_932] : memref<6x24x128xf32, #tpu.memory_space<vmem>>, vector<1x16x128xf32>
    %1088 = vector.shape_cast %1087 : vector<1x16x128xf32> to vector<16x128xf32>
    %1089 = vector.broadcast %1009 : f32 to vector<16x128xf32>
    %1090 = arith.mulf %1088, %1089 : vector<16x128xf32>
    %1091 = arith.addf %1086, %1090 : vector<16x128xf32>
    %c1_933 = arith.constant 1 : index
    %c4_934 = arith.constant 4 : index
    %c0_935 = arith.constant 0 : index
    %1092 = vector.load %arg7[%c1_933, %c4_934, %c0_935] : memref<6x24x128xf32, #tpu.memory_space<vmem>>, vector<1x16x128xf32>
    %1093 = vector.shape_cast %1092 : vector<1x16x128xf32> to vector<16x128xf32>
    %1094 = vector.broadcast %1016 : f32 to vector<16x128xf32>
    %1095 = arith.mulf %1093, %1094 : vector<16x128xf32>
    %1096 = arith.addf %1091, %1095 : vector<16x128xf32>
    %c1_936 = arith.constant 1 : index
    %c5_937 = arith.constant 5 : index
    %c0_938 = arith.constant 0 : index
    %1097 = vector.load %arg7[%c1_936, %c5_937, %c0_938] : memref<6x24x128xf32, #tpu.memory_space<vmem>>, vector<1x16x128xf32>
    %1098 = vector.shape_cast %1097 : vector<1x16x128xf32> to vector<16x128xf32>
    %1099 = vector.broadcast %1023 : f32 to vector<16x128xf32>
    %1100 = arith.mulf %1098, %1099 : vector<16x128xf32>
    %1101 = arith.addf %1096, %1100 : vector<16x128xf32>
    %c1_939 = arith.constant 1 : index
    %c6_940 = arith.constant 6 : index
    %c0_941 = arith.constant 0 : index
    %1102 = vector.load %arg7[%c1_939, %c6_940, %c0_941] : memref<6x24x128xf32, #tpu.memory_space<vmem>>, vector<1x16x128xf32>
    %1103 = vector.shape_cast %1102 : vector<1x16x128xf32> to vector<16x128xf32>
    %1104 = vector.broadcast %1030 : f32 to vector<16x128xf32>
    %1105 = arith.mulf %1103, %1104 : vector<16x128xf32>
    %1106 = arith.addf %1101, %1105 : vector<16x128xf32>
    %c2_942 = arith.constant 2 : index
    %c0_943 = arith.constant 0 : index
    %c0_944 = arith.constant 0 : index
    %1107 = vector.load %arg7[%c2_942, %c0_943, %c0_944] : memref<6x24x128xf32, #tpu.memory_space<vmem>>, vector<1x16x128xf32>
    %1108 = vector.shape_cast %1107 : vector<1x16x128xf32> to vector<16x128xf32>
    %1109 = vector.broadcast %989 : f32 to vector<16x128xf32>
    %1110 = arith.mulf %1108, %1109 : vector<16x128xf32>
    %1111 = arith.addf %1106, %1110 : vector<16x128xf32>
    %c2_945 = arith.constant 2 : index
    %c1_946 = arith.constant 1 : index
    %c0_947 = arith.constant 0 : index
    %1112 = vector.load %arg7[%c2_945, %c1_946, %c0_947] : memref<6x24x128xf32, #tpu.memory_space<vmem>>, vector<1x16x128xf32>
    %1113 = vector.shape_cast %1112 : vector<1x16x128xf32> to vector<16x128xf32>
    %1114 = vector.broadcast %996 : f32 to vector<16x128xf32>
    %1115 = arith.mulf %1113, %1114 : vector<16x128xf32>
    %1116 = arith.addf %1111, %1115 : vector<16x128xf32>
    %c2_948 = arith.constant 2 : index
    %c2_949 = arith.constant 2 : index
    %c0_950 = arith.constant 0 : index
    %1117 = vector.load %arg7[%c2_948, %c2_949, %c0_950] : memref<6x24x128xf32, #tpu.memory_space<vmem>>, vector<1x16x128xf32>
    %1118 = vector.shape_cast %1117 : vector<1x16x128xf32> to vector<16x128xf32>
    %1119 = vector.broadcast %1003 : f32 to vector<16x128xf32>
    %1120 = arith.mulf %1118, %1119 : vector<16x128xf32>
    %1121 = arith.addf %1116, %1120 : vector<16x128xf32>
    %c2_951 = arith.constant 2 : index
    %c3_952 = arith.constant 3 : index
    %c0_953 = arith.constant 0 : index
    %1122 = vector.load %arg7[%c2_951, %c3_952, %c0_953] : memref<6x24x128xf32, #tpu.memory_space<vmem>>, vector<1x16x128xf32>
    %1123 = vector.shape_cast %1122 : vector<1x16x128xf32> to vector<16x128xf32>
    %1124 = vector.broadcast %1010 : f32 to vector<16x128xf32>
    %1125 = arith.mulf %1123, %1124 : vector<16x128xf32>
    %1126 = arith.addf %1121, %1125 : vector<16x128xf32>
    %c2_954 = arith.constant 2 : index
    %c4_955 = arith.constant 4 : index
    %c0_956 = arith.constant 0 : index
    %1127 = vector.load %arg7[%c2_954, %c4_955, %c0_956] : memref<6x24x128xf32, #tpu.memory_space<vmem>>, vector<1x16x128xf32>
    %1128 = vector.shape_cast %1127 : vector<1x16x128xf32> to vector<16x128xf32>
    %1129 = vector.broadcast %1017 : f32 to vector<16x128xf32>
    %1130 = arith.mulf %1128, %1129 : vector<16x128xf32>
    %1131 = arith.addf %1126, %1130 : vector<16x128xf32>
    %c2_957 = arith.constant 2 : index
    %c5_958 = arith.constant 5 : index
    %c0_959 = arith.constant 0 : index
    %1132 = vector.load %arg7[%c2_957, %c5_958, %c0_959] : memref<6x24x128xf32, #tpu.memory_space<vmem>>, vector<1x16x128xf32>
    %1133 = vector.shape_cast %1132 : vector<1x16x128xf32> to vector<16x128xf32>
    %1134 = vector.broadcast %1024 : f32 to vector<16x128xf32>
    %1135 = arith.mulf %1133, %1134 : vector<16x128xf32>
    %1136 = arith.addf %1131, %1135 : vector<16x128xf32>
    %c2_960 = arith.constant 2 : index
    %c6_961 = arith.constant 6 : index
    %c0_962 = arith.constant 0 : index
    %1137 = vector.load %arg7[%c2_960, %c6_961, %c0_962] : memref<6x24x128xf32, #tpu.memory_space<vmem>>, vector<1x16x128xf32>
    %1138 = vector.shape_cast %1137 : vector<1x16x128xf32> to vector<16x128xf32>
    %1139 = vector.broadcast %1031 : f32 to vector<16x128xf32>
    %1140 = arith.mulf %1138, %1139 : vector<16x128xf32>
    %1141 = arith.addf %1136, %1140 : vector<16x128xf32>
    %c0_963 = arith.constant 0 : index
    %c0_964 = arith.constant 0 : index
    %1142 = vector.load %arg6[%c0_963, %c0_964] : memref<24x128xf32, #tpu.memory_space<vmem>>, vector<16x128xf32>
    %1143 = vector.broadcast %990 : f32 to vector<16x128xf32>
    %1144 = arith.mulf %1142, %1143 : vector<16x128xf32>
    %1145 = arith.addf %1141, %1144 : vector<16x128xf32>
    %c1_965 = arith.constant 1 : index
    %c0_966 = arith.constant 0 : index
    %1146 = vector.load %arg6[%c1_965, %c0_966] : memref<24x128xf32, #tpu.memory_space<vmem>>, vector<16x128xf32>
    %1147 = vector.broadcast %997 : f32 to vector<16x128xf32>
    %1148 = arith.mulf %1146, %1147 : vector<16x128xf32>
    %1149 = arith.addf %1145, %1148 : vector<16x128xf32>
    %c2_967 = arith.constant 2 : index
    %c0_968 = arith.constant 0 : index
    %1150 = vector.load %arg6[%c2_967, %c0_968] : memref<24x128xf32, #tpu.memory_space<vmem>>, vector<16x128xf32>
    %1151 = vector.broadcast %1004 : f32 to vector<16x128xf32>
    %1152 = arith.mulf %1150, %1151 : vector<16x128xf32>
    %1153 = arith.addf %1149, %1152 : vector<16x128xf32>
    %c3_969 = arith.constant 3 : index
    %c0_970 = arith.constant 0 : index
    %1154 = vector.load %arg6[%c3_969, %c0_970] : memref<24x128xf32, #tpu.memory_space<vmem>>, vector<16x128xf32>
    %1155 = vector.broadcast %1011 : f32 to vector<16x128xf32>
    %1156 = arith.mulf %1154, %1155 : vector<16x128xf32>
    %1157 = arith.addf %1153, %1156 : vector<16x128xf32>
    %c4_971 = arith.constant 4 : index
    %c0_972 = arith.constant 0 : index
    %1158 = vector.load %arg6[%c4_971, %c0_972] : memref<24x128xf32, #tpu.memory_space<vmem>>, vector<16x128xf32>
    %1159 = vector.broadcast %1018 : f32 to vector<16x128xf32>
    %1160 = arith.mulf %1158, %1159 : vector<16x128xf32>
    %1161 = arith.addf %1157, %1160 : vector<16x128xf32>
    %c5_973 = arith.constant 5 : index
    %c0_974 = arith.constant 0 : index
    %1162 = vector.load %arg6[%c5_973, %c0_974] : memref<24x128xf32, #tpu.memory_space<vmem>>, vector<16x128xf32>
    %1163 = vector.broadcast %1025 : f32 to vector<16x128xf32>
    %1164 = arith.mulf %1162, %1163 : vector<16x128xf32>
    %1165 = arith.addf %1161, %1164 : vector<16x128xf32>
    %c6_975 = arith.constant 6 : index
    %c0_976 = arith.constant 0 : index
    %1166 = vector.load %arg6[%c6_975, %c0_976] : memref<24x128xf32, #tpu.memory_space<vmem>>, vector<16x128xf32>
    %1167 = vector.broadcast %1032 : f32 to vector<16x128xf32>
    %1168 = arith.mulf %1166, %1167 : vector<16x128xf32>
    %1169 = arith.addf %1165, %1168 : vector<16x128xf32>
    %c3_977 = arith.constant 3 : index
    %c0_978 = arith.constant 0 : index
    %c0_979 = arith.constant 0 : index
    %1170 = vector.load %arg7[%c3_977, %c0_978, %c0_979] : memref<6x24x128xf32, #tpu.memory_space<vmem>>, vector<1x16x128xf32>
    %1171 = vector.shape_cast %1170 : vector<1x16x128xf32> to vector<16x128xf32>
    %1172 = vector.broadcast %991 : f32 to vector<16x128xf32>
    %1173 = arith.mulf %1171, %1172 : vector<16x128xf32>
    %1174 = arith.addf %1169, %1173 : vector<16x128xf32>
    %c3_980 = arith.constant 3 : index
    %c1_981 = arith.constant 1 : index
    %c0_982 = arith.constant 0 : index
    %1175 = vector.load %arg7[%c3_980, %c1_981, %c0_982] : memref<6x24x128xf32, #tpu.memory_space<vmem>>, vector<1x16x128xf32>
    %1176 = vector.shape_cast %1175 : vector<1x16x128xf32> to vector<16x128xf32>
    %1177 = vector.broadcast %998 : f32 to vector<16x128xf32>
    %1178 = arith.mulf %1176, %1177 : vector<16x128xf32>
    %1179 = arith.addf %1174, %1178 : vector<16x128xf32>
    %c3_983 = arith.constant 3 : index
    %c2_984 = arith.constant 2 : index
    %c0_985 = arith.constant 0 : index
    %1180 = vector.load %arg7[%c3_983, %c2_984, %c0_985] : memref<6x24x128xf32, #tpu.memory_space<vmem>>, vector<1x16x128xf32>
    %1181 = vector.shape_cast %1180 : vector<1x16x128xf32> to vector<16x128xf32>
    %1182 = vector.broadcast %1005 : f32 to vector<16x128xf32>
    %1183 = arith.mulf %1181, %1182 : vector<16x128xf32>
    %1184 = arith.addf %1179, %1183 : vector<16x128xf32>
    %c3_986 = arith.constant 3 : index
    %c3_987 = arith.constant 3 : index
    %c0_988 = arith.constant 0 : index
    %1185 = vector.load %arg7[%c3_986, %c3_987, %c0_988] : memref<6x24x128xf32, #tpu.memory_space<vmem>>, vector<1x16x128xf32>
    %1186 = vector.shape_cast %1185 : vector<1x16x128xf32> to vector<16x128xf32>
    %1187 = vector.broadcast %1012 : f32 to vector<16x128xf32>
    %1188 = arith.mulf %1186, %1187 : vector<16x128xf32>
    %1189 = arith.addf %1184, %1188 : vector<16x128xf32>
    %c3_989 = arith.constant 3 : index
    %c4_990 = arith.constant 4 : index
    %c0_991 = arith.constant 0 : index
    %1190 = vector.load %arg7[%c3_989, %c4_990, %c0_991] : memref<6x24x128xf32, #tpu.memory_space<vmem>>, vector<1x16x128xf32>
    %1191 = vector.shape_cast %1190 : vector<1x16x128xf32> to vector<16x128xf32>
    %1192 = vector.broadcast %1019 : f32 to vector<16x128xf32>
    %1193 = arith.mulf %1191, %1192 : vector<16x128xf32>
    %1194 = arith.addf %1189, %1193 : vector<16x128xf32>
    %c3_992 = arith.constant 3 : index
    %c5_993 = arith.constant 5 : index
    %c0_994 = arith.constant 0 : index
    %1195 = vector.load %arg7[%c3_992, %c5_993, %c0_994] : memref<6x24x128xf32, #tpu.memory_space<vmem>>, vector<1x16x128xf32>
    %1196 = vector.shape_cast %1195 : vector<1x16x128xf32> to vector<16x128xf32>
    %1197 = vector.broadcast %1026 : f32 to vector<16x128xf32>
    %1198 = arith.mulf %1196, %1197 : vector<16x128xf32>
    %1199 = arith.addf %1194, %1198 : vector<16x128xf32>
    %c3_995 = arith.constant 3 : index
    %c6_996 = arith.constant 6 : index
    %c0_997 = arith.constant 0 : index
    %1200 = vector.load %arg7[%c3_995, %c6_996, %c0_997] : memref<6x24x128xf32, #tpu.memory_space<vmem>>, vector<1x16x128xf32>
    %1201 = vector.shape_cast %1200 : vector<1x16x128xf32> to vector<16x128xf32>
    %1202 = vector.broadcast %1033 : f32 to vector<16x128xf32>
    %1203 = arith.mulf %1201, %1202 : vector<16x128xf32>
    %1204 = arith.addf %1199, %1203 : vector<16x128xf32>
    %c4_998 = arith.constant 4 : index
    %c0_999 = arith.constant 0 : index
    %c0_1000 = arith.constant 0 : index
    %1205 = vector.load %arg7[%c4_998, %c0_999, %c0_1000] : memref<6x24x128xf32, #tpu.memory_space<vmem>>, vector<1x16x128xf32>
    %1206 = vector.shape_cast %1205 : vector<1x16x128xf32> to vector<16x128xf32>
    %1207 = vector.broadcast %992 : f32 to vector<16x128xf32>
    %1208 = arith.mulf %1206, %1207 : vector<16x128xf32>
    %1209 = arith.addf %1204, %1208 : vector<16x128xf32>
    %c4_1001 = arith.constant 4 : index
    %c1_1002 = arith.constant 1 : index
    %c0_1003 = arith.constant 0 : index
    %1210 = vector.load %arg7[%c4_1001, %c1_1002, %c0_1003] : memref<6x24x128xf32, #tpu.memory_space<vmem>>, vector<1x16x128xf32>
    %1211 = vector.shape_cast %1210 : vector<1x16x128xf32> to vector<16x128xf32>
    %1212 = vector.broadcast %999 : f32 to vector<16x128xf32>
    %1213 = arith.mulf %1211, %1212 : vector<16x128xf32>
    %1214 = arith.addf %1209, %1213 : vector<16x128xf32>
    %c4_1004 = arith.constant 4 : index
    %c2_1005 = arith.constant 2 : index
    %c0_1006 = arith.constant 0 : index
    %1215 = vector.load %arg7[%c4_1004, %c2_1005, %c0_1006] : memref<6x24x128xf32, #tpu.memory_space<vmem>>, vector<1x16x128xf32>
    %1216 = vector.shape_cast %1215 : vector<1x16x128xf32> to vector<16x128xf32>
    %1217 = vector.broadcast %1006 : f32 to vector<16x128xf32>
    %1218 = arith.mulf %1216, %1217 : vector<16x128xf32>
    %1219 = arith.addf %1214, %1218 : vector<16x128xf32>
    %c4_1007 = arith.constant 4 : index
    %c3_1008 = arith.constant 3 : index
    %c0_1009 = arith.constant 0 : index
    %1220 = vector.load %arg7[%c4_1007, %c3_1008, %c0_1009] : memref<6x24x128xf32, #tpu.memory_space<vmem>>, vector<1x16x128xf32>
    %1221 = vector.shape_cast %1220 : vector<1x16x128xf32> to vector<16x128xf32>
    %1222 = vector.broadcast %1013 : f32 to vector<16x128xf32>
    %1223 = arith.mulf %1221, %1222 : vector<16x128xf32>
    %1224 = arith.addf %1219, %1223 : vector<16x128xf32>
    %c4_1010 = arith.constant 4 : index
    %c4_1011 = arith.constant 4 : index
    %c0_1012 = arith.constant 0 : index
    %1225 = vector.load %arg7[%c4_1010, %c4_1011, %c0_1012] : memref<6x24x128xf32, #tpu.memory_space<vmem>>, vector<1x16x128xf32>
    %1226 = vector.shape_cast %1225 : vector<1x16x128xf32> to vector<16x128xf32>
    %1227 = vector.broadcast %1020 : f32 to vector<16x128xf32>
    %1228 = arith.mulf %1226, %1227 : vector<16x128xf32>
    %1229 = arith.addf %1224, %1228 : vector<16x128xf32>
    %c4_1013 = arith.constant 4 : index
    %c5_1014 = arith.constant 5 : index
    %c0_1015 = arith.constant 0 : index
    %1230 = vector.load %arg7[%c4_1013, %c5_1014, %c0_1015] : memref<6x24x128xf32, #tpu.memory_space<vmem>>, vector<1x16x128xf32>
    %1231 = vector.shape_cast %1230 : vector<1x16x128xf32> to vector<16x128xf32>
    %1232 = vector.broadcast %1027 : f32 to vector<16x128xf32>
    %1233 = arith.mulf %1231, %1232 : vector<16x128xf32>
    %1234 = arith.addf %1229, %1233 : vector<16x128xf32>
    %c4_1016 = arith.constant 4 : index
    %c6_1017 = arith.constant 6 : index
    %c0_1018 = arith.constant 0 : index
    %1235 = vector.load %arg7[%c4_1016, %c6_1017, %c0_1018] : memref<6x24x128xf32, #tpu.memory_space<vmem>>, vector<1x16x128xf32>
    %1236 = vector.shape_cast %1235 : vector<1x16x128xf32> to vector<16x128xf32>
    %1237 = vector.broadcast %1034 : f32 to vector<16x128xf32>
    %1238 = arith.mulf %1236, %1237 : vector<16x128xf32>
    %1239 = arith.addf %1234, %1238 : vector<16x128xf32>
    %c5_1019 = arith.constant 5 : index
    %c0_1020 = arith.constant 0 : index
    %c0_1021 = arith.constant 0 : index
    %1240 = vector.load %arg7[%c5_1019, %c0_1020, %c0_1021] : memref<6x24x128xf32, #tpu.memory_space<vmem>>, vector<1x16x128xf32>
    %1241 = vector.shape_cast %1240 : vector<1x16x128xf32> to vector<16x128xf32>
    %1242 = vector.broadcast %993 : f32 to vector<16x128xf32>
    %1243 = arith.mulf %1241, %1242 : vector<16x128xf32>
    %1244 = arith.addf %1239, %1243 : vector<16x128xf32>
    %c5_1022 = arith.constant 5 : index
    %c1_1023 = arith.constant 1 : index
    %c0_1024 = arith.constant 0 : index
    %1245 = vector.load %arg7[%c5_1022, %c1_1023, %c0_1024] : memref<6x24x128xf32, #tpu.memory_space<vmem>>, vector<1x16x128xf32>
    %1246 = vector.shape_cast %1245 : vector<1x16x128xf32> to vector<16x128xf32>
    %1247 = vector.broadcast %1000 : f32 to vector<16x128xf32>
    %1248 = arith.mulf %1246, %1247 : vector<16x128xf32>
    %1249 = arith.addf %1244, %1248 : vector<16x128xf32>
    %c5_1025 = arith.constant 5 : index
    %c2_1026 = arith.constant 2 : index
    %c0_1027 = arith.constant 0 : index
    %1250 = vector.load %arg7[%c5_1025, %c2_1026, %c0_1027] : memref<6x24x128xf32, #tpu.memory_space<vmem>>, vector<1x16x128xf32>
    %1251 = vector.shape_cast %1250 : vector<1x16x128xf32> to vector<16x128xf32>
    %1252 = vector.broadcast %1007 : f32 to vector<16x128xf32>
    %1253 = arith.mulf %1251, %1252 : vector<16x128xf32>
    %1254 = arith.addf %1249, %1253 : vector<16x128xf32>
    %c5_1028 = arith.constant 5 : index
    %c3_1029 = arith.constant 3 : index
    %c0_1030 = arith.constant 0 : index
    %1255 = vector.load %arg7[%c5_1028, %c3_1029, %c0_1030] : memref<6x24x128xf32, #tpu.memory_space<vmem>>, vector<1x16x128xf32>
    %1256 = vector.shape_cast %1255 : vector<1x16x128xf32> to vector<16x128xf32>
    %1257 = vector.broadcast %1014 : f32 to vector<16x128xf32>
    %1258 = arith.mulf %1256, %1257 : vector<16x128xf32>
    %1259 = arith.addf %1254, %1258 : vector<16x128xf32>
    %c5_1031 = arith.constant 5 : index
    %c4_1032 = arith.constant 4 : index
    %c0_1033 = arith.constant 0 : index
    %1260 = vector.load %arg7[%c5_1031, %c4_1032, %c0_1033] : memref<6x24x128xf32, #tpu.memory_space<vmem>>, vector<1x16x128xf32>
    %1261 = vector.shape_cast %1260 : vector<1x16x128xf32> to vector<16x128xf32>
    %1262 = vector.broadcast %1021 : f32 to vector<16x128xf32>
    %1263 = arith.mulf %1261, %1262 : vector<16x128xf32>
    %1264 = arith.addf %1259, %1263 : vector<16x128xf32>
    %c5_1034 = arith.constant 5 : index
    %c5_1035 = arith.constant 5 : index
    %c0_1036 = arith.constant 0 : index
    %1265 = vector.load %arg7[%c5_1034, %c5_1035, %c0_1036] : memref<6x24x128xf32, #tpu.memory_space<vmem>>, vector<1x16x128xf32>
    %1266 = vector.shape_cast %1265 : vector<1x16x128xf32> to vector<16x128xf32>
    %1267 = vector.broadcast %1028 : f32 to vector<16x128xf32>
    %1268 = arith.mulf %1266, %1267 : vector<16x128xf32>
    %1269 = arith.addf %1264, %1268 : vector<16x128xf32>
    %c5_1037 = arith.constant 5 : index
    %c6_1038 = arith.constant 6 : index
    %c0_1039 = arith.constant 0 : index
    %1270 = vector.load %arg7[%c5_1037, %c6_1038, %c0_1039] : memref<6x24x128xf32, #tpu.memory_space<vmem>>, vector<1x16x128xf32>
    %1271 = vector.shape_cast %1270 : vector<1x16x128xf32> to vector<16x128xf32>
    %1272 = vector.broadcast %1035 : f32 to vector<16x128xf32>
    %1273 = arith.mulf %1271, %1272 : vector<16x128xf32>
    %1274 = arith.addf %1269, %1273 : vector<16x128xf32>
    %c3_1040 = arith.constant 3 : index
    %c0_1041 = arith.constant 0 : index
    %c0_1042 = arith.constant 0 : index
    %1275 = vector.load %arg8[%c3_1040, %c0_1041, %c0_1042] : memref<4x16x128xf32, #tpu.memory_space<vmem>>, vector<1x16x128xf32>
    %1276 = vector.shape_cast %1275 : vector<1x16x128xf32> to vector<16x128xf32>
    %1277 = vector.shape_cast %1274 : vector<16x128xf32> to vector<1x16x128xf32>
    tpu.vector_store %arg8[%c3_1040, %c0_1041, %c0_1042], %1277 {strides = array<i32>} : memref<4x16x128xf32, #tpu.memory_space<vmem>>, vector<1x16x128xf32>,
    %c0_1043 = arith.constant 0 : index
    %c0_1044 = arith.constant 0 : index
    %c0_1045 = arith.constant 0 : index
    %1278 = vector.load %arg8[%c0_1043, %c0_1044, %c0_1045] : memref<4x16x128xf32, #tpu.memory_space<vmem>>, vector<1x16x128xf32>
    %1279 = vector.shape_cast %1278 : vector<1x16x128xf32> to vector<16x128xf32>
    %c1_1046 = arith.constant 1 : index
    %c0_1047 = arith.constant 0 : index
    %c0_1048 = arith.constant 0 : index
    %1280 = vector.load %arg8[%c1_1046, %c0_1047, %c0_1048] : memref<4x16x128xf32, #tpu.memory_space<vmem>>, vector<1x16x128xf32>
    %1281 = vector.shape_cast %1280 : vector<1x16x128xf32> to vector<16x128xf32>
    %c2_1049 = arith.constant 2 : index
    %c0_1050 = arith.constant 0 : index
    %c0_1051 = arith.constant 0 : index
    %1282 = vector.load %arg8[%c2_1049, %c0_1050, %c0_1051] : memref<4x16x128xf32, #tpu.memory_space<vmem>>, vector<1x16x128xf32>
    %1283 = vector.shape_cast %1282 : vector<1x16x128xf32> to vector<16x128xf32>
    %c3_1052 = arith.constant 3 : index
    %c0_1053 = arith.constant 0 : index
    %c0_1054 = arith.constant 0 : index
    %1284 = vector.load %arg8[%c3_1052, %c0_1053, %c0_1054] : memref<4x16x128xf32, #tpu.memory_space<vmem>>, vector<1x16x128xf32>
    %1285 = vector.shape_cast %1284 : vector<1x16x128xf32> to vector<16x128xf32>
    %c0_1055 = arith.constant 0 : index
    %c0_1056 = arith.constant 0 : index
    %1286 = memref.load %arg3[%c0_1055, %c0_1056] : memref<8x4xf32, #tpu.memory_space<smem>>
    %1287 = vector.broadcast %1286 : f32 to vector<16x128xf32>
    %1288 = arith.mulf %1279, %1287 : vector<16x128xf32>
    %c0_1057 = arith.constant 0 : index
    %c1_1058 = arith.constant 1 : index
    %1289 = memref.load %arg3[%c0_1057, %c1_1058] : memref<8x4xf32, #tpu.memory_space<smem>>
    %1290 = vector.broadcast %1289 : f32 to vector<16x128xf32>
    %1291 = arith.mulf %1281, %1290 : vector<16x128xf32>
    %1292 = arith.addf %1288, %1291 : vector<16x128xf32>
    %c0_1059 = arith.constant 0 : index
    %c2_1060 = arith.constant 2 : index
    %1293 = memref.load %arg3[%c0_1059, %c2_1060] : memref<8x4xf32, #tpu.memory_space<smem>>
    %1294 = vector.broadcast %1293 : f32 to vector<16x128xf32>
    %1295 = arith.mulf %1283, %1294 : vector<16x128xf32>
    %1296 = arith.addf %1292, %1295 : vector<16x128xf32>
    %c0_1061 = arith.constant 0 : index
    %c3_1062 = arith.constant 3 : index
    %1297 = memref.load %arg3[%c0_1061, %c3_1062] : memref<8x4xf32, #tpu.memory_space<smem>>
    %1298 = vector.broadcast %1297 : f32 to vector<16x128xf32>
    %1299 = arith.mulf %1285, %1298 : vector<16x128xf32>
    %1300 = arith.addf %1296, %1299 : vector<16x128xf32>
    %c0_1063 = arith.constant 0 : index
    %1301 = memref.load %arg4[%c0_1063] : memref<8xf32, #tpu.memory_space<smem>>
    %1302 = vector.broadcast %1301 : f32 to vector<16x128xf32>
    %1303 = arith.addf %1300, %1302 : vector<16x128xf32>
    %1304 = vector.extract_strided_slice %1303 {offsets = [0, 0], sizes = [16, 16], strides = [1, 1]} : vector<16x128xf32> to vector<16x16xf32>
    %c0_1064 = arith.constant 0 : index
    %c0_1065 = arith.constant 0 : index
    %c0_1066 = arith.constant 0 : index
    %c0_1067 = arith.constant 0 : index
    %1305 = vector.load %arg5[%c0_1064, %c0_1065, %c0_1066, %c0_1067] : memref<1x8x16x16xf32, #tpu.memory_space<vmem>>, vector<1x1x16x16xf32>
    %1306 = vector.shape_cast %1305 : vector<1x1x16x16xf32> to vector<16x16xf32>
    %1307 = vector.shape_cast %1304 : vector<16x16xf32> to vector<1x1x16x16xf32>
    tpu.vector_store %arg5[%c0_1064, %c0_1065, %c0_1066, %c0_1067], %1307 {strides = array<i32>} : memref<1x8x16x16xf32, #tpu.memory_space<vmem>>, vector<1x1x16x16xf32>,
    %c1_1068 = arith.constant 1 : index
    %c0_1069 = arith.constant 0 : index
    %1308 = memref.load %arg3[%c1_1068, %c0_1069] : memref<8x4xf32, #tpu.memory_space<smem>>
    %1309 = vector.broadcast %1308 : f32 to vector<16x128xf32>
    %1310 = arith.mulf %1279, %1309 : vector<16x128xf32>
    %c1_1070 = arith.constant 1 : index
    %c1_1071 = arith.constant 1 : index
    %1311 = memref.load %arg3[%c1_1070, %c1_1071] : memref<8x4xf32, #tpu.memory_space<smem>>
    %1312 = vector.broadcast %1311 : f32 to vector<16x128xf32>
    %1313 = arith.mulf %1281, %1312 : vector<16x128xf32>
    %1314 = arith.addf %1310, %1313 : vector<16x128xf32>
    %c1_1072 = arith.constant 1 : index
    %c2_1073 = arith.constant 2 : index
    %1315 = memref.load %arg3[%c1_1072, %c2_1073] : memref<8x4xf32, #tpu.memory_space<smem>>
    %1316 = vector.broadcast %1315 : f32 to vector<16x128xf32>
    %1317 = arith.mulf %1283, %1316 : vector<16x128xf32>
    %1318 = arith.addf %1314, %1317 : vector<16x128xf32>
    %c1_1074 = arith.constant 1 : index
    %c3_1075 = arith.constant 3 : index
    %1319 = memref.load %arg3[%c1_1074, %c3_1075] : memref<8x4xf32, #tpu.memory_space<smem>>
    %1320 = vector.broadcast %1319 : f32 to vector<16x128xf32>
    %1321 = arith.mulf %1285, %1320 : vector<16x128xf32>
    %1322 = arith.addf %1318, %1321 : vector<16x128xf32>
    %c1_1076 = arith.constant 1 : index
    %1323 = memref.load %arg4[%c1_1076] : memref<8xf32, #tpu.memory_space<smem>>
    %1324 = vector.broadcast %1323 : f32 to vector<16x128xf32>
    %1325 = arith.addf %1322, %1324 : vector<16x128xf32>
    %1326 = vector.extract_strided_slice %1325 {offsets = [0, 0], sizes = [16, 16], strides = [1, 1]} : vector<16x128xf32> to vector<16x16xf32>
    %c0_1077 = arith.constant 0 : index
    %c1_1078 = arith.constant 1 : index
    %c0_1079 = arith.constant 0 : index
    %c0_1080 = arith.constant 0 : index
    %1327 = vector.load %arg5[%c0_1077, %c1_1078, %c0_1079, %c0_1080] : memref<1x8x16x16xf32, #tpu.memory_space<vmem>>, vector<1x1x16x16xf32>
    %1328 = vector.shape_cast %1327 : vector<1x1x16x16xf32> to vector<16x16xf32>
    %1329 = vector.shape_cast %1326 : vector<16x16xf32> to vector<1x1x16x16xf32>
    tpu.vector_store %arg5[%c0_1077, %c1_1078, %c0_1079, %c0_1080], %1329 {strides = array<i32>} : memref<1x8x16x16xf32, #tpu.memory_space<vmem>>, vector<1x1x16x16xf32>,
    %c2_1081 = arith.constant 2 : index
    %c0_1082 = arith.constant 0 : index
    %1330 = memref.load %arg3[%c2_1081, %c0_1082] : memref<8x4xf32, #tpu.memory_space<smem>>
    %1331 = vector.broadcast %1330 : f32 to vector<16x128xf32>
    %1332 = arith.mulf %1279, %1331 : vector<16x128xf32>
    %c2_1083 = arith.constant 2 : index
    %c1_1084 = arith.constant 1 : index
    %1333 = memref.load %arg3[%c2_1083, %c1_1084] : memref<8x4xf32, #tpu.memory_space<smem>>
    %1334 = vector.broadcast %1333 : f32 to vector<16x128xf32>
    %1335 = arith.mulf %1281, %1334 : vector<16x128xf32>
    %1336 = arith.addf %1332, %1335 : vector<16x128xf32>
    %c2_1085 = arith.constant 2 : index
    %c2_1086 = arith.constant 2 : index
    %1337 = memref.load %arg3[%c2_1085, %c2_1086] : memref<8x4xf32, #tpu.memory_space<smem>>
    %1338 = vector.broadcast %1337 : f32 to vector<16x128xf32>
    %1339 = arith.mulf %1283, %1338 : vector<16x128xf32>
    %1340 = arith.addf %1336, %1339 : vector<16x128xf32>
    %c2_1087 = arith.constant 2 : index
    %c3_1088 = arith.constant 3 : index
    %1341 = memref.load %arg3[%c2_1087, %c3_1088] : memref<8x4xf32, #tpu.memory_space<smem>>
    %1342 = vector.broadcast %1341 : f32 to vector<16x128xf32>
    %1343 = arith.mulf %1285, %1342 : vector<16x128xf32>
    %1344 = arith.addf %1340, %1343 : vector<16x128xf32>
    %c2_1089 = arith.constant 2 : index
    %1345 = memref.load %arg4[%c2_1089] : memref<8xf32, #tpu.memory_space<smem>>
    %1346 = vector.broadcast %1345 : f32 to vector<16x128xf32>
    %1347 = arith.addf %1344, %1346 : vector<16x128xf32>
    %1348 = vector.extract_strided_slice %1347 {offsets = [0, 0], sizes = [16, 16], strides = [1, 1]} : vector<16x128xf32> to vector<16x16xf32>
    %c0_1090 = arith.constant 0 : index
    %c2_1091 = arith.constant 2 : index
    %c0_1092 = arith.constant 0 : index
    %c0_1093 = arith.constant 0 : index
    %1349 = vector.load %arg5[%c0_1090, %c2_1091, %c0_1092, %c0_1093] : memref<1x8x16x16xf32, #tpu.memory_space<vmem>>, vector<1x1x16x16xf32>
    %1350 = vector.shape_cast %1349 : vector<1x1x16x16xf32> to vector<16x16xf32>
    %1351 = vector.shape_cast %1348 : vector<16x16xf32> to vector<1x1x16x16xf32>
    tpu.vector_store %arg5[%c0_1090, %c2_1091, %c0_1092, %c0_1093], %1351 {strides = array<i32>} : memref<1x8x16x16xf32, #tpu.memory_space<vmem>>, vector<1x1x16x16xf32>,
    %c3_1094 = arith.constant 3 : index
    %c0_1095 = arith.constant 0 : index
    %1352 = memref.load %arg3[%c3_1094, %c0_1095] : memref<8x4xf32, #tpu.memory_space<smem>>
    %1353 = vector.broadcast %1352 : f32 to vector<16x128xf32>
    %1354 = arith.mulf %1279, %1353 : vector<16x128xf32>
    %c3_1096 = arith.constant 3 : index
    %c1_1097 = arith.constant 1 : index
    %1355 = memref.load %arg3[%c3_1096, %c1_1097] : memref<8x4xf32, #tpu.memory_space<smem>>
    %1356 = vector.broadcast %1355 : f32 to vector<16x128xf32>
    %1357 = arith.mulf %1281, %1356 : vector<16x128xf32>
    %1358 = arith.addf %1354, %1357 : vector<16x128xf32>
    %c3_1098 = arith.constant 3 : index
    %c2_1099 = arith.constant 2 : index
    %1359 = memref.load %arg3[%c3_1098, %c2_1099] : memref<8x4xf32, #tpu.memory_space<smem>>
    %1360 = vector.broadcast %1359 : f32 to vector<16x128xf32>
    %1361 = arith.mulf %1283, %1360 : vector<16x128xf32>
    %1362 = arith.addf %1358, %1361 : vector<16x128xf32>
    %c3_1100 = arith.constant 3 : index
    %c3_1101 = arith.constant 3 : index
    %1363 = memref.load %arg3[%c3_1100, %c3_1101] : memref<8x4xf32, #tpu.memory_space<smem>>
    %1364 = vector.broadcast %1363 : f32 to vector<16x128xf32>
    %1365 = arith.mulf %1285, %1364 : vector<16x128xf32>
    %1366 = arith.addf %1362, %1365 : vector<16x128xf32>
    %c3_1102 = arith.constant 3 : index
    %1367 = memref.load %arg4[%c3_1102] : memref<8xf32, #tpu.memory_space<smem>>
    %1368 = vector.broadcast %1367 : f32 to vector<16x128xf32>
    %1369 = arith.addf %1366, %1368 : vector<16x128xf32>
    %1370 = vector.extract_strided_slice %1369 {offsets = [0, 0], sizes = [16, 16], strides = [1, 1]} : vector<16x128xf32> to vector<16x16xf32>
    %c0_1103 = arith.constant 0 : index
    %c3_1104 = arith.constant 3 : index
    %c0_1105 = arith.constant 0 : index
    %c0_1106 = arith.constant 0 : index
    %1371 = vector.load %arg5[%c0_1103, %c3_1104, %c0_1105, %c0_1106] : memref<1x8x16x16xf32, #tpu.memory_space<vmem>>, vector<1x1x16x16xf32>
    %1372 = vector.shape_cast %1371 : vector<1x1x16x16xf32> to vector<16x16xf32>
    %1373 = vector.shape_cast %1370 : vector<16x16xf32> to vector<1x1x16x16xf32>
    tpu.vector_store %arg5[%c0_1103, %c3_1104, %c0_1105, %c0_1106], %1373 {strides = array<i32>} : memref<1x8x16x16xf32, #tpu.memory_space<vmem>>, vector<1x1x16x16xf32>,
    %c4_1107 = arith.constant 4 : index
    %c0_1108 = arith.constant 0 : index
    %1374 = memref.load %arg3[%c4_1107, %c0_1108] : memref<8x4xf32, #tpu.memory_space<smem>>
    %1375 = vector.broadcast %1374 : f32 to vector<16x128xf32>
    %1376 = arith.mulf %1279, %1375 : vector<16x128xf32>
    %c4_1109 = arith.constant 4 : index
    %c1_1110 = arith.constant 1 : index
    %1377 = memref.load %arg3[%c4_1109, %c1_1110] : memref<8x4xf32, #tpu.memory_space<smem>>
    %1378 = vector.broadcast %1377 : f32 to vector<16x128xf32>
    %1379 = arith.mulf %1281, %1378 : vector<16x128xf32>
    %1380 = arith.addf %1376, %1379 : vector<16x128xf32>
    %c4_1111 = arith.constant 4 : index
    %c2_1112 = arith.constant 2 : index
    %1381 = memref.load %arg3[%c4_1111, %c2_1112] : memref<8x4xf32, #tpu.memory_space<smem>>
    %1382 = vector.broadcast %1381 : f32 to vector<16x128xf32>
    %1383 = arith.mulf %1283, %1382 : vector<16x128xf32>
    %1384 = arith.addf %1380, %1383 : vector<16x128xf32>
    %c4_1113 = arith.constant 4 : index
    %c3_1114 = arith.constant 3 : index
    %1385 = memref.load %arg3[%c4_1113, %c3_1114] : memref<8x4xf32, #tpu.memory_space<smem>>
    %1386 = vector.broadcast %1385 : f32 to vector<16x128xf32>
    %1387 = arith.mulf %1285, %1386 : vector<16x128xf32>
    %1388 = arith.addf %1384, %1387 : vector<16x128xf32>
    %c4_1115 = arith.constant 4 : index
    %1389 = memref.load %arg4[%c4_1115] : memref<8xf32, #tpu.memory_space<smem>>
    %1390 = vector.broadcast %1389 : f32 to vector<16x128xf32>
    %1391 = arith.addf %1388, %1390 : vector<16x128xf32>
    %1392 = vector.extract_strided_slice %1391 {offsets = [0, 0], sizes = [16, 16], strides = [1, 1]} : vector<16x128xf32> to vector<16x16xf32>
    %c0_1116 = arith.constant 0 : index
    %c4_1117 = arith.constant 4 : index
    %c0_1118 = arith.constant 0 : index
    %c0_1119 = arith.constant 0 : index
    %1393 = vector.load %arg5[%c0_1116, %c4_1117, %c0_1118, %c0_1119] : memref<1x8x16x16xf32, #tpu.memory_space<vmem>>, vector<1x1x16x16xf32>
    %1394 = vector.shape_cast %1393 : vector<1x1x16x16xf32> to vector<16x16xf32>
    %1395 = vector.shape_cast %1392 : vector<16x16xf32> to vector<1x1x16x16xf32>
    tpu.vector_store %arg5[%c0_1116, %c4_1117, %c0_1118, %c0_1119], %1395 {strides = array<i32>} : memref<1x8x16x16xf32, #tpu.memory_space<vmem>>, vector<1x1x16x16xf32>,
    %c5_1120 = arith.constant 5 : index
    %c0_1121 = arith.constant 0 : index
    %1396 = memref.load %arg3[%c5_1120, %c0_1121] : memref<8x4xf32, #tpu.memory_space<smem>>
    %1397 = vector.broadcast %1396 : f32 to vector<16x128xf32>
    %1398 = arith.mulf %1279, %1397 : vector<16x128xf32>
    %c5_1122 = arith.constant 5 : index
    %c1_1123 = arith.constant 1 : index
    %1399 = memref.load %arg3[%c5_1122, %c1_1123] : memref<8x4xf32, #tpu.memory_space<smem>>
    %1400 = vector.broadcast %1399 : f32 to vector<16x128xf32>
    %1401 = arith.mulf %1281, %1400 : vector<16x128xf32>
    %1402 = arith.addf %1398, %1401 : vector<16x128xf32>
    %c5_1124 = arith.constant 5 : index
    %c2_1125 = arith.constant 2 : index
    %1403 = memref.load %arg3[%c5_1124, %c2_1125] : memref<8x4xf32, #tpu.memory_space<smem>>
    %1404 = vector.broadcast %1403 : f32 to vector<16x128xf32>
    %1405 = arith.mulf %1283, %1404 : vector<16x128xf32>
    %1406 = arith.addf %1402, %1405 : vector<16x128xf32>
    %c5_1126 = arith.constant 5 : index
    %c3_1127 = arith.constant 3 : index
    %1407 = memref.load %arg3[%c5_1126, %c3_1127] : memref<8x4xf32, #tpu.memory_space<smem>>
    %1408 = vector.broadcast %1407 : f32 to vector<16x128xf32>
    %1409 = arith.mulf %1285, %1408 : vector<16x128xf32>
    %1410 = arith.addf %1406, %1409 : vector<16x128xf32>
    %c5_1128 = arith.constant 5 : index
    %1411 = memref.load %arg4[%c5_1128] : memref<8xf32, #tpu.memory_space<smem>>
    %1412 = vector.broadcast %1411 : f32 to vector<16x128xf32>
    %1413 = arith.addf %1410, %1412 : vector<16x128xf32>
    %1414 = vector.extract_strided_slice %1413 {offsets = [0, 0], sizes = [16, 16], strides = [1, 1]} : vector<16x128xf32> to vector<16x16xf32>
    %c0_1129 = arith.constant 0 : index
    %c5_1130 = arith.constant 5 : index
    %c0_1131 = arith.constant 0 : index
    %c0_1132 = arith.constant 0 : index
    %1415 = vector.load %arg5[%c0_1129, %c5_1130, %c0_1131, %c0_1132] : memref<1x8x16x16xf32, #tpu.memory_space<vmem>>, vector<1x1x16x16xf32>
    %1416 = vector.shape_cast %1415 : vector<1x1x16x16xf32> to vector<16x16xf32>
    %1417 = vector.shape_cast %1414 : vector<16x16xf32> to vector<1x1x16x16xf32>
    tpu.vector_store %arg5[%c0_1129, %c5_1130, %c0_1131, %c0_1132], %1417 {strides = array<i32>} : memref<1x8x16x16xf32, #tpu.memory_space<vmem>>, vector<1x1x16x16xf32>,
    %c6_1133 = arith.constant 6 : index
    %c0_1134 = arith.constant 0 : index
    %1418 = memref.load %arg3[%c6_1133, %c0_1134] : memref<8x4xf32, #tpu.memory_space<smem>>
    %1419 = vector.broadcast %1418 : f32 to vector<16x128xf32>
    %1420 = arith.mulf %1279, %1419 : vector<16x128xf32>
    %c6_1135 = arith.constant 6 : index
    %c1_1136 = arith.constant 1 : index
    %1421 = memref.load %arg3[%c6_1135, %c1_1136] : memref<8x4xf32, #tpu.memory_space<smem>>
    %1422 = vector.broadcast %1421 : f32 to vector<16x128xf32>
    %1423 = arith.mulf %1281, %1422 : vector<16x128xf32>
    %1424 = arith.addf %1420, %1423 : vector<16x128xf32>
    %c6_1137 = arith.constant 6 : index
    %c2_1138 = arith.constant 2 : index
    %1425 = memref.load %arg3[%c6_1137, %c2_1138] : memref<8x4xf32, #tpu.memory_space<smem>>
    %1426 = vector.broadcast %1425 : f32 to vector<16x128xf32>
    %1427 = arith.mulf %1283, %1426 : vector<16x128xf32>
    %1428 = arith.addf %1424, %1427 : vector<16x128xf32>
    %c6_1139 = arith.constant 6 : index
    %c3_1140 = arith.constant 3 : index
    %1429 = memref.load %arg3[%c6_1139, %c3_1140] : memref<8x4xf32, #tpu.memory_space<smem>>
    %1430 = vector.broadcast %1429 : f32 to vector<16x128xf32>
    %1431 = arith.mulf %1285, %1430 : vector<16x128xf32>
    %1432 = arith.addf %1428, %1431 : vector<16x128xf32>
    %c6_1141 = arith.constant 6 : index
    %1433 = memref.load %arg4[%c6_1141] : memref<8xf32, #tpu.memory_space<smem>>
    %1434 = vector.broadcast %1433 : f32 to vector<16x128xf32>
    %1435 = arith.addf %1432, %1434 : vector<16x128xf32>
    %1436 = vector.extract_strided_slice %1435 {offsets = [0, 0], sizes = [16, 16], strides = [1, 1]} : vector<16x128xf32> to vector<16x16xf32>
    %c0_1142 = arith.constant 0 : index
    %c6_1143 = arith.constant 6 : index
    %c0_1144 = arith.constant 0 : index
    %c0_1145 = arith.constant 0 : index
    %1437 = vector.load %arg5[%c0_1142, %c6_1143, %c0_1144, %c0_1145] : memref<1x8x16x16xf32, #tpu.memory_space<vmem>>, vector<1x1x16x16xf32>
    %1438 = vector.shape_cast %1437 : vector<1x1x16x16xf32> to vector<16x16xf32>
    %1439 = vector.shape_cast %1436 : vector<16x16xf32> to vector<1x1x16x16xf32>
    tpu.vector_store %arg5[%c0_1142, %c6_1143, %c0_1144, %c0_1145], %1439 {strides = array<i32>} : memref<1x8x16x16xf32, #tpu.memory_space<vmem>>, vector<1x1x16x16xf32>,
    %c7_1146 = arith.constant 7 : index
    %c0_1147 = arith.constant 0 : index
    %1440 = memref.load %arg3[%c7_1146, %c0_1147] : memref<8x4xf32, #tpu.memory_space<smem>>
    %1441 = vector.broadcast %1440 : f32 to vector<16x128xf32>
    %1442 = arith.mulf %1279, %1441 : vector<16x128xf32>
    %c7_1148 = arith.constant 7 : index
    %c1_1149 = arith.constant 1 : index
    %1443 = memref.load %arg3[%c7_1148, %c1_1149] : memref<8x4xf32, #tpu.memory_space<smem>>
    %1444 = vector.broadcast %1443 : f32 to vector<16x128xf32>
    %1445 = arith.mulf %1281, %1444 : vector<16x128xf32>
    %1446 = arith.addf %1442, %1445 : vector<16x128xf32>
    %c7_1150 = arith.constant 7 : index
    %c2_1151 = arith.constant 2 : index
    %1447 = memref.load %arg3[%c7_1150, %c2_1151] : memref<8x4xf32, #tpu.memory_space<smem>>
    %1448 = vector.broadcast %1447 : f32 to vector<16x128xf32>
    %1449 = arith.mulf %1283, %1448 : vector<16x128xf32>
    %1450 = arith.addf %1446, %1449 : vector<16x128xf32>
    %c7_1152 = arith.constant 7 : index
    %c3_1153 = arith.constant 3 : index
    %1451 = memref.load %arg3[%c7_1152, %c3_1153] : memref<8x4xf32, #tpu.memory_space<smem>>
    %1452 = vector.broadcast %1451 : f32 to vector<16x128xf32>
    %1453 = arith.mulf %1285, %1452 : vector<16x128xf32>
    %1454 = arith.addf %1450, %1453 : vector<16x128xf32>
    %c7_1154 = arith.constant 7 : index
    %1455 = memref.load %arg4[%c7_1154] : memref<8xf32, #tpu.memory_space<smem>>
    %1456 = vector.broadcast %1455 : f32 to vector<16x128xf32>
    %1457 = arith.addf %1454, %1456 : vector<16x128xf32>
    %1458 = vector.extract_strided_slice %1457 {offsets = [0, 0], sizes = [16, 16], strides = [1, 1]} : vector<16x128xf32> to vector<16x16xf32>
    %c0_1155 = arith.constant 0 : index
    %c7_1156 = arith.constant 7 : index
    %c0_1157 = arith.constant 0 : index
    %c0_1158 = arith.constant 0 : index
    %1459 = vector.load %arg5[%c0_1155, %c7_1156, %c0_1157, %c0_1158] : memref<1x8x16x16xf32, #tpu.memory_space<vmem>>, vector<1x1x16x16xf32>
    %1460 = vector.shape_cast %1459 : vector<1x1x16x16xf32> to vector<16x16xf32>
    %1461 = vector.shape_cast %1458 : vector<16x16xf32> to vector<1x1x16x16xf32>
    tpu.vector_store %arg5[%c0_1155, %c7_1156, %c0_1157, %c0_1158], %1461 {strides = array<i32>} : memref<1x8x16x16xf32, #tpu.memory_space<vmem>>, vector<1x1x16x16xf32>,
    return
  }
  func.func @transform_0(%arg0: i32) -> (i32, i32, i32, i32) {
    %c0_i32 = arith.constant 0 : i32
    %c0_i32_0 = arith.constant 0 : i32
    %c0_i32_1 = arith.constant 0 : i32
    %c0_i32_2 = arith.constant 0 : i32
    return %arg0, %c0_i32, %c0_i32_0, %c0_i32_1 : i32, i32, i32, i32
  }
  func.func @transform_1(%arg0: i32) -> (i32, i32) {
    %c0_i32 = arith.constant 0 : i32
    %c0_i32_0 = arith.constant 0 : i32
    %c0_i32_1 = arith.constant 0 : i32
    return %c0_i32, %c0_i32_0 : i32, i32
  }
  func.func @transform_2(%arg0: i32) -> (i32, i32) {
    %c0_i32 = arith.constant 0 : i32
    %c0_i32_0 = arith.constant 0 : i32
    %c0_i32_1 = arith.constant 0 : i32
    return %c0_i32, %c0_i32_0 : i32, i32
  }
  func.func @transform_3(%arg0: i32) -> i32 {
    %c0_i32 = arith.constant 0 : i32
    %c0_i32_0 = arith.constant 0 : i32
    return %c0_i32 : i32
  }
  func.func @transform_4(%arg0: i32) -> (i32, i32, i32, i32) {
    %c0_i32 = arith.constant 0 : i32
    %c0_i32_0 = arith.constant 0 : i32
    %c0_i32_1 = arith.constant 0 : i32
    %c0_i32_2 = arith.constant 0 : i32
    return %arg0, %c0_i32, %c0_i32_0, %c0_i32_1 : i32, i32, i32, i32
  }
}

</mosaic_0001>

<llo_original>
// kernel: tpu_custom_call.1
$region0: #{tpu_custom_call.1}
  #allocation0 [shape = 'u32[]', space=smem, size = 0x4, offset = 0x4, fixed_abs, tag = 'smem constant byte address 0x4 - core index']
  #allocation1 [shape = 'u32[144,128]{1,0:T(1,128)}', space=vmem, size = 0x12000, scoped, tag = 'internal scratch']
  #allocation2 [shape = 'f32[24,128]{1,0:T(8,128)}', space=vmem, size = 0x3000, scoped, tag = 'scratch operand']
  #allocation3 [shape = 'f32[6,24,128]{2,1,0:T(8,128)}', space=vmem, size = 0x12000, scoped, tag = 'scratch operand']
  #allocation4 [shape = 'f32[4,16,128]{2,1,0:T(8,128)}', space=vmem, size = 0x8000, scoped, tag = 'scratch operand']
  %s0 = inlined_call_operand.hbm [shape: f32[2,4,16,16], index: 0, kind: input, shape index: {}]
  %s1 = inlined_call_operand.vmem [shape: f32[4,49], index: 1, kind: input, shape index: {}]
  %s2 = inlined_call_operand.vmem [shape: f32[8,4], index: 2, kind: input, shape index: {}]
  %s3 = inlined_call_operand.vmem [shape: f32[8], index: 3, kind: input, shape index: {}]
  %s4 = inlined_call_operand.hbm [shape: f32[2,8,16,16], index: 4, kind: output, shape index: {}]
  %s5 = sld [smem:[#allocation0]]
  $region65: #{tpu_custom_call.1} parent=0
    _
  %s7 = ssub.s32 1, %s5
  %s8 = scalar_select 0, %s7, %s5
  $region1: #{tpu_custom_call.1} parent=0
    #allocation5 [shape = 'u8[65536]{0}', space=vmem, size = 0x10000, scoped, tag = 'input window, operand 0']
    #allocation6 [shape = 's32[2]{0}', space=sflag, size = 0x8, scoped, tag = 'scoped memory for tpu_custom_call.1']
    #allocation7 [shape = 's32[2]{0}', space=sflag, size = 0x8, scoped, tag = 'scoped memory for tpu_custom_call.1']
    #allocation8 [shape = 's32[2]{0}', space=sflag, size = 0x8, scoped, tag = 'scoped memory for tpu_custom_call.1']
    #allocation9 [shape = 'u8[2048]{0}', space=smem, size = 0x800, scoped, tag = 'input window, operand 1, single buffered']
    #allocation10 [shape = 'u8[4096]{0}', space=smem, size = 0x1000, scoped, tag = 'input window, operand 2, single buffered']
    #allocation11 [shape = 's32[1]{0}', space=sflag, size = 0x4, scoped, tag = 'scoped memory for tpu_custom_call.1']
    #allocation12 [shape = 'u8[512]{0}', space=smem, size = 0x200, scoped, tag = 'input window, operand 3, single buffered']
    #allocation13 [shape = 'u8[131072]{0}', space=vmem, size = 0x20000, scoped, tag = 'output window, operand 0']
    %9 = vsyncpa [#allocation6], 0
    %s10 = scalar_lea.sflag [#allocation6], 1
    %11 = vsyncpa %s10, 0
    %12 = vsyncpa [#allocation8], 0
    %13 = vsyncpa [#allocation11], 0
    %14 = vsyncpa [#allocation7], 0
    %s15 = scalar_lea.sflag [#allocation7], 1
    %16 = vsyncpa %s15, 0
    loop: start=0, step=1, limit=4
    $region2: #{tpu_custom_call.1} parent=1 // loop_pre_header
      _
    $region3: #{tpu_custom_call.1} parent=1 // loop_header
      %s18 = sphi 0, %s22
      %p19 = scmp.ge.s32.totalorder %s18, 4
      %s28 = sphi 0, %s30
      %s31 = sphi 0, %s28
      %s32 = sphi 0, %s31
      %s48 = sphi 0, %s32
      %s52 = sphi 0, %s52
      %s54 = sphi 0, %s52
      %s55 = sphi 0, %s54
      %s69 = sphi 0, %s55
      %s73 = sphi 0, %s73
      %s75 = sphi 0, %s73
      %s76 = sphi 0, %s75
      %s90 = sphi 0, %s76
      %s94 = sphi 0, %s94
      %s96 = sphi 0, %s94
      %s97 = sphi 0, %s96
      %s111 = sphi 0, %s97
      %s117 = sphi 0, %s119
      %s120 = sphi 0, %s117
      %s121 = sphi 0, %s120
      %s137 = sphi 0, %s121
    $region4: #{tpu_custom_call.1} parent=1 // loop_header_branch
      %21 = sbr.rel (%p19) target = $region8
    $region5: #{tpu_custom_call.1} parent=1 // loop_body
      %s23 = ssub.s32 %s18, 1
      %s24 = ssub.s32 %s18, 2
      %s25 = sadd.s32 %s18, 1
      %s26 = ssub.s32 %s18, %s25
      %p27 = scmp.eq.s32.totalorder %s26, 0
      %s29 = sadd.s32 %s28, 1
      %s30 = scalar_select %p27, %s28, %s29
      %p33 = pneg %p27
      %p34 = scmp.eq.s32.totalorder %s18, 1
      %p35 = por %p33, %p34
      %p36 = scmp.ne.s32.totalorder %s28, %s31
      %p37 = scmp.eq.s32.totalorder %s18, 0
      %p38 = por %p36, %p37
      %p39 = scmp.ne.s32.totalorder %s28, %s31
      %p40 = scmp.eq.s32.totalorder %s23, 1
      %p41 = por %p39, %p40
      %p42 = scmp.ne.s32.totalorder %s31, %s32
      %p43 = scmp.eq.s32.totalorder %s23, 0
      %p44 = por %p42, %p43
      %p45 = scmp.ne.s32.totalorder %s31, %s32
      %p46 = scmp.eq.s32.totalorder %s24, 1
      %p47 = por %p45, %p46
      %p49 = scmp.ne.s32.totalorder %s32, %s48
      %p50 = scmp.eq.s32.totalorder %s24, 0
      %p51 = por %p49, %p50
      %s53 = sadd.s32 %s52, 1
      %p56 = scmp.eq.s32.totalorder %s18, 1
      %p57 = scmp.ne.s32.totalorder %s52, %s54
      %p58 = scmp.eq.s32.totalorder %s18, 0
      %p59 = por %p57, %p58
      %p60 = scmp.ne.s32.totalorder %s52, %s54
      %p61 = scmp.eq.s32.totalorder %s23, 1
      %p62 = por %p60, %p61
      %p63 = scmp.ne.s32.totalorder %s54, %s55
      %p64 = scmp.eq.s32.totalorder %s23, 0
      %p65 = por %p63, %p64
      %p66 = scmp.ne.s32.totalorder %s54, %s55
      %p67 = scmp.eq.s32.totalorder %s24, 1
      %p68 = por %p66, %p67
      %p70 = scmp.ne.s32.totalorder %s55, %s69
      %p71 = scmp.eq.s32.totalorder %s24, 0
      %p72 = por %p70, %p71
      %s74 = sadd.s32 %s73, 1
      %p77 = scmp.eq.s32.totalorder %s18, 1
      %p78 = scmp.ne.s32.totalorder %s73, %s75
      %p79 = scmp.eq.s32.totalorder %s18, 0
      %p80 = por %p78, %p79
      %p81 = scmp.ne.s32.totalorder %s73, %s75
      %p82 = scmp.eq.s32.totalorder %s23, 1
      %p83 = por %p81, %p82
      %p84 = scmp.ne.s32.totalorder %s75, %s76
      %p85 = scmp.eq.s32.totalorder %s23, 0
      %p86 = por %p84, %p85
      %p87 = scmp.ne.s32.totalorder %s75, %s76
      %p88 = scmp.eq.s32.totalorder %s24, 1
      %p89 = por %p87, %p88
      %p91 = scmp.ne.s32.totalorder %s76, %s90
      %p92 = scmp.eq.s32.totalorder %s24, 0
      %p93 = por %p91, %p92
      %s95 = sadd.s32 %s94, 1
      %p98 = scmp.eq.s32.totalorder %s18, 1
      %p99 = scmp.ne.s32.totalorder %s94, %s96
      %p100 = scmp.eq.s32.totalorder %s18, 0
      %p101 = por %p99, %p100
      %p102 = scmp.ne.s32.totalorder %s94, %s96
      %p103 = scmp.eq.s32.totalorder %s23, 1
      %p104 = por %p102, %p103
      %p105 = scmp.ne.s32.totalorder %s96, %s97
      %p106 = scmp.eq.s32.totalorder %s23, 0
      %p107 = por %p105, %p106
      %p108 = scmp.ne.s32.totalorder %s96, %s97
      %p109 = scmp.eq.s32.totalorder %s24, 1
      %p110 = por %p108, %p109
      %p112 = scmp.ne.s32.totalorder %s97, %s111
      %p113 = scmp.eq.s32.totalorder %s24, 0
      %p114 = por %p112, %p113
      %s115 = ssub.s32 %s18, %s25
      %p116 = scmp.eq.s32.totalorder %s115, 0
      %s118 = sadd.s32 %s117, 1
      %s119 = scalar_select %p116, %s117, %s118
      %p122 = pneg %p116
      %p123 = scmp.eq.s32.totalorder %s18, 1
      %p124 = por %p122, %p123
      %p125 = scmp.ne.s32.totalorder %s117, %s120
      %p126 = scmp.eq.s32.totalorder %s18, 0
      %p127 = por %p125, %p126
      %p128 = scmp.ne.s32.totalorder %s117, %s120
      %p129 = scmp.eq.s32.totalorder %s23, 1
      %p130 = por %p128, %p129
      %p131 = scmp.ne.s32.totalorder %s120, %s121
      %p132 = scmp.eq.s32.totalorder %s23, 0
      %p133 = por %p131, %p132
      %p134 = scmp.ne.s32.totalorder %s120, %s121
      %p135 = scmp.eq.s32.totalorder %s24, 1
      %p136 = por %p134, %p135
      %p138 = scmp.ne.s32.totalorder %s121, %s137
      %p139 = scmp.eq.s32.totalorder %s24, 0
      %p140 = por %p138, %p139
      %p141 = scmp.le.s32.totalorder 1, %s18
      %p142 = scmp.lt.s32.totalorder %s18, 3
      %p143 = pnand %p141, %p142
      %p144 = pneg %p143
      // Predicated region
      $region9: #{tpu_custom_call.1} parent=5 // pred_check
        _
      $region10: #{tpu_custom_call.1} parent=5 // pred_check_branch
        %146 = sbr.rel (%p143) target = $region12
      $region11: #{tpu_custom_call.1} parent=5 // pred_region
        %s147 = ssub.s32 %s18, 1
        // Predicated region
        $region13: #{tpu_custom_call.1} parent=11 // pred_check
          %p148 = pneg %p65
        $region14: #{tpu_custom_call.1} parent=11 // pred_check_branch
          %150 = sbr.rel (%p148) target = $region16
        $region15: #{tpu_custom_call.1} parent=11 // pred_region
          %s152 = ssub.s32 64, 64
          %153 = vsyncadd [#allocation8], %s152
          %s155 = sshll.u32 %s1, 4
          %s156 = int_to_ptr.vmem [resolvable:$true] %s155
          %158 = dma.vmem_to_smem %s156, 64, [#allocation9], [#allocation8]
        $region16: #{tpu_custom_call.1} parent=11 // pred_fallthru
          _
        // Predicated region
        $region17: #{tpu_custom_call.1} parent=11 // pred_check
          %p159 = pneg %p86
        $region18: #{tpu_custom_call.1} parent=11 // pred_check_branch
          %161 = sbr.rel (%p159) target = $region20
        $region19: #{tpu_custom_call.1} parent=11 // pred_region
          %s163 = ssub.s32 128, 128
          %164 = vsyncadd [#allocation11], %s163
          %s166 = sshll.u32 %s2, 4
          %s167 = int_to_ptr.vmem [resolvable:$true] %s166
          %169 = dma.vmem_to_smem %s167, 128, [#allocation10], [#allocation11]
        $region20: #{tpu_custom_call.1} parent=11 // pred_fallthru
          _
        // Predicated region
        $region21: #{tpu_custom_call.1} parent=11 // pred_check
          %p170 = pneg %p107
        $region22: #{tpu_custom_call.1} parent=11 // pred_check_branch
          %172 = sbr.rel (%p170) target = $region24
        $region23: #{tpu_custom_call.1} parent=11 // pred_region
          %s174 = ssub.s32 16, 16
          %175 = vsyncadd [#allocation11], %s174
          %s177 = sshll.u32 %s3, 4
          %s178 = int_to_ptr.vmem [resolvable:$true] %s177
          %180 = dma.vmem_to_smem %s178, 16, [#allocation12], [#allocation11]
        $region24: #{tpu_custom_call.1} parent=11 // pred_fallthru
          _
      $region12: #{tpu_custom_call.1} parent=5 // pred_fallthru
        _
      %p181 = scmp.lt.s32.totalorder %s18, 2
      // Predicated region
      $region25: #{tpu_custom_call.1} parent=5 // pred_check
        %p182 = pneg %p181
      $region26: #{tpu_custom_call.1} parent=5 // pred_check_branch
        %184 = sbr.rel (%p182) target = $region28
      $region27: #{tpu_custom_call.1} parent=5 // pred_region
        // Predicated region
        $region29: #{tpu_custom_call.1} parent=27 // pred_check
          %p185 = pneg %p38
        $region30: #{tpu_custom_call.1} parent=27 // pred_check_branch
          %187 = sbr.rel (%p185) target = $region32
        $region31: #{tpu_custom_call.1} parent=27 // pred_region
          %s188 = sand.u32 %s28, 1
          %s189 = scalar_lea.sflag [#allocation6], %s188
          %s190 = sand.u32 %s28, 1
          %s191 = smul.addr %s190, 64
          %s192 = scalar_lea.vmem [#allocation5], %s191
          %s194 = ssub.s32 1024, 1024
          %195 = vsyncadd %s189, %s194
          %s196 = smul.addr %s18, 8
          %s197 = smul.addr %s196, 128
          %s198 = scalar_lea.hbm %s0, %s197
          %s199 = sshll.u32 %s192, 4
          %s200 = int_to_ptr.vmem [resolvable:$true] %s199
          %205 = dma.hbm_to_vmem [thread:$0]  %s198, 1024, %s200, %s189, 128, 128, 8
        $region32: #{tpu_custom_call.1} parent=27 // pred_fallthru
          _
      $region28: #{tpu_custom_call.1} parent=5 // pred_fallthru
        _
      %p206 = scmp.le.s32.totalorder 1, %s18
      %p207 = scmp.lt.s32.totalorder %s18, 3
      %p208 = pnand %p206, %p207
      %p209 = pneg %p208
      // Predicated region
      $region33: #{tpu_custom_call.1} parent=5 // pred_check
        _
      $region34: #{tpu_custom_call.1} parent=5 // pred_check_branch
        %211 = sbr.rel (%p208) target = $region36
      $region35: #{tpu_custom_call.1} parent=5 // pred_region
        %s212 = ssub.s32 %s18, 1
        %s213 = sand.u32 %s31, 1
        %s214 = scalar_lea.sflag [#allocation6], %s213
        %s215 = sand.u32 %s31, 1
        %s216 = smul.addr %s215, 64
        %s217 = scalar_lea.vmem [#allocation5], %s216
        // Predicated region
        $region37: #{tpu_custom_call.1} parent=35 // pred_check
          %p218 = pneg %p44
        $region38: #{tpu_custom_call.1} parent=35 // pred_check_branch
          %220 = sbr.rel (%p218) target = $region40
        $region39: #{tpu_custom_call.1} parent=35 // pred_region
          %221 = dma.done %s214, 1024
        $region40: #{tpu_custom_call.1} parent=35 // pred_fallthru
          _
        // Predicated region
        $region41: #{tpu_custom_call.1} parent=35 // pred_check
          %p222 = pneg %p65
        $region42: #{tpu_custom_call.1} parent=35 // pred_check_branch
          %224 = sbr.rel (%p222) target = $region44
        $region43: #{tpu_custom_call.1} parent=35 // pred_region
          %225 = dma.done [#allocation8], 64
        $region44: #{tpu_custom_call.1} parent=35 // pred_fallthru
          _
        // Predicated region
        $region45: #{tpu_custom_call.1} parent=35 // pred_check
          %p226 = pneg %p86
        $region46: #{tpu_custom_call.1} parent=35 // pred_check_branch
          %228 = sbr.rel (%p226) target = $region48
        $region47: #{tpu_custom_call.1} parent=35 // pred_region
          %229 = dma.done [#allocation11], 128
        $region48: #{tpu_custom_call.1} parent=35 // pred_fallthru
          _
        // Predicated region
        $region49: #{tpu_custom_call.1} parent=35 // pred_check
          %p230 = pneg %p107
        $region50: #{tpu_custom_call.1} parent=35 // pred_check_branch
          %232 = sbr.rel (%p230) target = $region52
        $region51: #{tpu_custom_call.1} parent=35 // pred_region
          %233 = dma.done [#allocation11], 16
        $region52: #{tpu_custom_call.1} parent=35 // pred_fallthru
          _
        %234 = sfence
        %s235 = sand.u32 %s31, 1
        %s236 = scalar_lea.sflag [#allocation6], %s235
        %s237 = sand.u32 %s31, 1
        %s238 = smul.addr %s237, 64
        %s239 = scalar_lea.vmem [#allocation5], %s238
        %p240 = pneg %p44
        %p241 = pneg %p41
        %p242 = pneg %p65
        %p243 = pneg %p62
        %p244 = pneg %p86
        %p245 = pneg %p83
        %p246 = pneg %p107
        %p247 = pneg %p104
        %p248 = pneg %p133
        %p249 = pneg %p130
        %s250 = sand.u32 %s120, 1
        %s251 = scalar_lea.sflag [#allocation7], %s250
        %s252 = sand.u32 %s120, 1
        %s253 = smul.addr %s252, 128
        %s254 = scalar_lea.vmem [#allocation13], %s253
        %255 = vst [vmem:[#allocation2] sm:$0xff] 0.0
        %256 = vst [vmem:[#allocation2 + $0x8] sm:$0xff] 0.0
        %257 = vst [vmem:[#allocation2 + $0x10] sm:$0xff] 0.0
        %v258 = vld [vmem:[%s217] sm:$0xff]
        %v259 = vld [vmem:[%s217 + $0x8] sm:$0xff]
        %vm260 = vcmask 130048
        %261 = vst.msk [vmem:[#allocation2 + $0x3] sm:$0xff] %vm260, %v258
        %262 = vst.msk [vmem:[#allocation2 + $0xb] sm:$0xff] %vm260, %v259
        %v263 = vld [vmem:[#allocation2] sm:$0xff]
        %v264 = vld [vmem:[#allocation2 + $0x8] sm:$0xff]
        %v265 = vld [vmem:[#allocation2 + $0x10] sm:$0xff]
        %266 = vrot.lane.b32.xlu0 %v263, 3
        %v267 = vpop.permute.xlu0 %266
        %268 = vrot.lane.b32.xlu0 %v264, 3
        %v269 = vpop.permute.xlu0 %268
        %270 = vrot.lane.b32.xlu0 %v265, 3
        %v271 = vpop.permute.xlu0 %270
        %272 = vst [vmem:[#allocation3] sm:$0xff] %v267
        %273 = vst [vmem:[#allocation3 + $0x8] sm:$0xff] %v269
        %274 = vst [vmem:[#allocation3 + $0x10] sm:$0xff] %v271
        %275 = vrot.lane.b32.xlu0 %v263, 2
        %v276 = vpop.permute.xlu0 %275
        %277 = vrot.lane.b32.xlu0 %v264, 2
        %v278 = vpop.permute.xlu0 %277
        %279 = vrot.lane.b32.xlu0 %v265, 2
        %v280 = vpop.permute.xlu0 %279
        %s281 = scalar_lea.vmem [#allocation3], 24
        %282 = vst [vmem:[%s281] sm:$0xff] %v276
        %283 = vst [vmem:[%s281 + $0x8] sm:$0xff] %v278
        %284 = vst [vmem:[%s281 + $0x10] sm:$0xff] %v280
        %285 = vrot.lane.b32.xlu0 %v263, 1
        %v286 = vpop.permute.xlu0 %285
        %287 = vrot.lane.b32.xlu0 %v264, 1
        %v288 = vpop.permute.xlu0 %287
        %289 = vrot.lane.b32.xlu0 %v265, 1
        %v290 = vpop.permute.xlu0 %289
        %s291 = scalar_lea.vmem [#allocation3], 48
        %292 = vst [vmem:[%s291] sm:$0xff] %v286
        %293 = vst [vmem:[%s291 + $0x8] sm:$0xff] %v288
        %294 = vst [vmem:[%s291 + $0x10] sm:$0xff] %v290
        %295 = vrot.lane.b32.xlu0 %v263, 127
        %v296 = vpop.permute.xlu0 %295
        %297 = vrot.lane.b32.xlu0 %v264, 127
        %v298 = vpop.permute.xlu0 %297
        %299 = vrot.lane.b32.xlu0 %v265, 127
        %v300 = vpop.permute.xlu0 %299
        %s301 = scalar_lea.vmem [#allocation3], 72
        %302 = vst [vmem:[%s301] sm:$0xff] %v296
        %303 = vst [vmem:[%s301 + $0x8] sm:$0xff] %v298
        %304 = vst [vmem:[%s301 + $0x10] sm:$0xff] %v300
        %305 = vrot.lane.b32.xlu0 %v263, 126
        %v306 = vpop.permute.xlu0 %305
        %307 = vrot.lane.b32.xlu0 %v264, 126
        %v308 = vpop.permute.xlu0 %307
        %309 = vrot.lane.b32.xlu0 %v265, 126
        %v310 = vpop.permute.xlu0 %309
        %s311 = scalar_lea.vmem [#allocation3], 96
        %312 = vst [vmem:[%s311] sm:$0xff] %v306
        %313 = vst [vmem:[%s311 + $0x8] sm:$0xff] %v308
        %314 = vst [vmem:[%s311 + $0x10] sm:$0xff] %v310
        %315 = vrot.lane.b32.xlu0 %v263, 125
        %v316 = vpop.permute.xlu0 %315
        %317 = vrot.lane.b32.xlu0 %v264, 125
        %v318 = vpop.permute.xlu0 %317
        %319 = vrot.lane.b32.xlu0 %v265, 125
        %v320 = vpop.permute.xlu0 %319
        %s321 = scalar_lea.vmem [#allocation3], 120
        %322 = vst [vmem:[%s321] sm:$0xff] %v316
        %323 = vst [vmem:[%s321 + $0x8] sm:$0xff] %v318
        %324 = vst [vmem:[%s321 + $0x10] sm:$0xff] %v320
        %s325 = sld [smem:[#allocation9]]
        %s326 = sld [smem:[#allocation9 + $0x1]]
        %s327 = sld [smem:[#allocation9 + $0x2]]
        %s328 = sld [smem:[#allocation9 + $0x3]]
        %s329 = sld [smem:[#allocation9 + $0x4]]
        %s330 = sld [smem:[#allocation9 + $0x5]]
        %s331 = sld [smem:[#allocation9 + $0x6]]
        %s332 = sld [smem:[#allocation9 + $0x7]]
        %s333 = sld [smem:[#allocation9 + $0x8]]
        %s334 = sld [smem:[#allocation9 + $0x9]]
        %s335 = sld [smem:[#allocation9 + $0xa]]
        %s336 = sld [smem:[#allocation9 + $0xb]]
        %s337 = sld [smem:[#allocation9 + $0xc]]
        %s338 = sld [smem:[#allocation9 + $0xd]]
        %s339 = sld [smem:[#allocation9 + $0xe]]
        %s340 = sld [smem:[#allocation9 + $0xf]]
        %s341 = sld [smem:[#allocation9 + $0x10]]
        %s342 = sld [smem:[#allocation9 + $0x11]]
        %s343 = sld [smem:[#allocation9 + $0x12]]
        %s344 = sld [smem:[#allocation9 + $0x13]]
        %s345 = sld [smem:[#allocation9 + $0x14]]
        %s346 = sld [smem:[#allocation9 + $0x15]]
        %s347 = sld [smem:[#allocation9 + $0x16]]
        %s348 = sld [smem:[#allocation9 + $0x17]]
        %s349 = sld [smem:[#allocation9 + $0x18]]
        %s350 = sld [smem:[#allocation9 + $0x19]]
        %s351 = sld [smem:[#allocation9 + $0x1a]]
        %s352 = sld [smem:[#allocation9 + $0x1b]]
        %s353 = sld [smem:[#allocation9 + $0x1c]]
        %s354 = sld [smem:[#allocation9 + $0x1d]]
        %s355 = sld [smem:[#allocation9 + $0x1e]]
        %s356 = sld [smem:[#allocation9 + $0x1f]]
        %s357 = sld [smem:[#allocation9 + $0x20]]
        %s358 = sld [smem:[#allocation9 + $0x21]]
        %s359 = sld [smem:[#allocation9 + $0x22]]
        %s360 = sld [smem:[#allocation9 + $0x23]]
        %s361 = sld [smem:[#allocation9 + $0x24]]
        %s362 = sld [smem:[#allocation9 + $0x25]]
        %s363 = sld [smem:[#allocation9 + $0x26]]
        %s364 = sld [smem:[#allocation9 + $0x27]]
        %s365 = sld [smem:[#allocation9 + $0x28]]
        %s366 = sld [smem:[#allocation9 + $0x29]]
        %s367 = sld [smem:[#allocation9 + $0x2a]]
        %s368 = sld [smem:[#allocation9 + $0x2b]]
        %s369 = sld [smem:[#allocation9 + $0x2c]]
        %s370 = sld [smem:[#allocation9 + $0x2d]]
        %s371 = sld [smem:[#allocation9 + $0x2e]]
        %s372 = sld [smem:[#allocation9 + $0x2f]]
        %s373 = sld [smem:[#allocation9 + $0x30]]
        %v374 = vld [vmem:[#allocation3] sm:$0xff]
        %v375 = vld [vmem:[#allocation3 + $0x8] sm:$0xff]
        %v376 = vstv %s325
        %v377 = vmul.f32 %v374, %v376
        %v378 = vmul.f32 %v375, %v376
        %v379 = vadd.f32 %v377, 0.0
        %v380 = vadd.f32 %v378, 0.0
        %v381 = vld [vmem:[#allocation3 + $0x1] sm:$0xff]
        %v382 = vld [vmem:[#allocation3 + $0x9] sm:$0xff]
        %v383 = vstv %s332
        %v384 = vmul.f32 %v381, %v383
        %v385 = vmul.f32 %v382, %v383
        %v386 = vadd.f32 %v379, %v384
        %v387 = vadd.f32 %v380, %v385
        %v388 = vld [vmem:[#allocation3 + $0x2] sm:$0xff]
        %v389 = vld [vmem:[#allocation3 + $0xa] sm:$0xff]
        %v390 = vstv %s339
        %v391 = vmul.f32 %v388, %v390
        %v392 = vmul.f32 %v389, %v390
        %v393 = vadd.f32 %v386, %v391
        %v394 = vadd.f32 %v387, %v392
        %v395 = vld [vmem:[#allocation3 + $0x3] sm:$0xff]
        %v396 = vld [vmem:[#allocation3 + $0xb] sm:$0xff]
        %v397 = vstv %s346
        %v398 = vmul.f32 %v395, %v397
        %v399 = vmul.f32 %v396, %v397
        %v400 = vadd.f32 %v393, %v398
        %v401 = vadd.f32 %v394, %v399
        %v402 = vld [vmem:[#allocation3 + $0x4] sm:$0xff]
        %v403 = vld [vmem:[#allocation3 + $0xc] sm:$0xff]
        %v404 = vstv %s353
        %v405 = vmul.f32 %v402, %v404
        %v406 = vmul.f32 %v403, %v404
        %v407 = vadd.f32 %v400, %v405
        %v408 = vadd.f32 %v401, %v406
        %v409 = vld [vmem:[#allocation3 + $0x5] sm:$0xff]
        %v410 = vld [vmem:[#allocation3 + $0xd] sm:$0xff]
        %v411 = vstv %s360
        %v412 = vmul.f32 %v409, %v411
        %v413 = vmul.f32 %v410, %v411
        %v414 = vadd.f32 %v407, %v412
        %v415 = vadd.f32 %v408, %v413
        %v416 = vld [vmem:[#allocation3 + $0x6] sm:$0xff]
        %v417 = vld [vmem:[#allocation3 + $0xe] sm:$0xff]
        %v418 = vstv %s367
        %v419 = vmul.f32 %v416, %v418
        %v420 = vmul.f32 %v417, %v418
        %v421 = vadd.f32 %v414, %v419
        %v422 = vadd.f32 %v415, %v420
        %v423 = vld [vmem:[%s281] sm:$0xff]
        %v424 = vld [vmem:[%s281 + $0x8] sm:$0xff]
        %v425 = vstv %s326
        %v426 = vmul.f32 %v423, %v425
        %v427 = vmul.f32 %v424, %v425
        %v428 = vadd.f32 %v421, %v426
        %v429 = vadd.f32 %v422, %v427
        %v430 = vld [vmem:[%s281 + $0x1] sm:$0xff]
        %v431 = vld [vmem:[%s281 + $0x9] sm:$0xff]
        %v432 = vstv %s333
        %v433 = vmul.f32 %v430, %v432
        %v434 = vmul.f32 %v431, %v432
        %v435 = vadd.f32 %v428, %v433
        %v436 = vadd.f32 %v429, %v434
        %v437 = vld [vmem:[%s281 + $0x2] sm:$0xff]
        %v438 = vld [vmem:[%s281 + $0xa] sm:$0xff]
        %v439 = vstv %s340
        %v440 = vmul.f32 %v437, %v439
        %v441 = vmul.f32 %v438, %v439
        %v442 = vadd.f32 %v435, %v440
        %v443 = vadd.f32 %v436, %v441
        %v444 = vld [vmem:[%s281 + $0x3] sm:$0xff]
        %v445 = vld [vmem:[%s281 + $0xb] sm:$0xff]
        %v446 = vstv %s347
        %v447 = vmul.f32 %v444, %v446
        %v448 = vmul.f32 %v445, %v446
        %v449 = vadd.f32 %v442, %v447
        %v450 = vadd.f32 %v443, %v448
        %v451 = vld [vmem:[%s281 + $0x4] sm:$0xff]
        %v452 = vld [vmem:[%s281 + $0xc] sm:$0xff]
        %v453 = vstv %s354
        %v454 = vmul.f32 %v451, %v453
        %v455 = vmul.f32 %v452, %v453
        %v456 = vadd.f32 %v449, %v454
        %v457 = vadd.f32 %v450, %v455
        %v458 = vld [vmem:[%s281 + $0x5] sm:$0xff]
        %v459 = vld [vmem:[%s281 + $0xd] sm:$0xff]
        %v460 = vstv %s361
        %v461 = vmul.f32 %v458, %v460
        %v462 = vmul.f32 %v459, %v460
        %v463 = vadd.f32 %v456, %v461
        %v464 = vadd.f32 %v457, %v462
        %v465 = vld [vmem:[%s281 + $0x6] sm:$0xff]
        %v466 = vld [vmem:[%s281 + $0xe] sm:$0xff]
        %v467 = vstv %s368
        %v468 = vmul.f32 %v465, %v467
        %v469 = vmul.f32 %v466, %v467
        %v470 = vadd.f32 %v463, %v468
        %v471 = vadd.f32 %v464, %v469
        %v472 = vld [vmem:[%s291] sm:$0xff]
        %v473 = vld [vmem:[%s291 + $0x8] sm:$0xff]
        %v474 = vstv %s327
        %v475 = vmul.f32 %v472, %v474
        %v476 = vmul.f32 %v473, %v474
        %v477 = vadd.f32 %v470, %v475
        %v478 = vadd.f32 %v471, %v476
        %v479 = vld [vmem:[%s291 + $0x1] sm:$0xff]
        %v480 = vld [vmem:[%s291 + $0x9] sm:$0xff]
        %v481 = vstv %s334
        %v482 = vmul.f32 %v479, %v481
        %v483 = vmul.f32 %v480, %v481
        %v484 = vadd.f32 %v477, %v482
        %v485 = vadd.f32 %v478, %v483
        %v486 = vld [vmem:[%s291 + $0x2] sm:$0xff]
        %v487 = vld [vmem:[%s291 + $0xa] sm:$0xff]
        %v488 = vstv %s341
        %v489 = vmul.f32 %v486, %v488
        %v490 = vmul.f32 %v487, %v488
        %v491 = vadd.f32 %v484, %v489
        %v492 = vadd.f32 %v485, %v490
        %v493 = vld [vmem:[%s291 + $0x3] sm:$0xff]
        %v494 = vld [vmem:[%s291 + $0xb] sm:$0xff]
        %v495 = vstv %s348
        %v496 = vmul.f32 %v493, %v495
        %v497 = vmul.f32 %v494, %v495
        %v498 = vadd.f32 %v491, %v496
        %v499 = vadd.f32 %v492, %v497
        %v500 = vld [vmem:[%s291 + $0x4] sm:$0xff]
        %v501 = vld [vmem:[%s291 + $0xc] sm:$0xff]
        %v502 = vstv %s355
        %v503 = vmul.f32 %v500, %v502
        %v504 = vmul.f32 %v501, %v502
        %v505 = vadd.f32 %v498, %v503
        %v506 = vadd.f32 %v499, %v504
        %v507 = vld [vmem:[%s291 + $0x5] sm:$0xff]
        %v508 = vld [vmem:[%s291 + $0xd] sm:$0xff]
        %v509 = vstv %s362
        %v510 = vmul.f32 %v507, %v509
        %v511 = vmul.f32 %v508, %v509
        %v512 = vadd.f32 %v505, %v510
        %v513 = vadd.f32 %v506, %v511
        %v514 = vld [vmem:[%s291 + $0x6] sm:$0xff]
        %v515 = vld [vmem:[%s291 + $0xe] sm:$0xff]
        %v516 = vstv %s369
        %v517 = vmul.f32 %v514, %v516
        %v518 = vmul.f32 %v515, %v516
        %v519 = vadd.f32 %v512, %v517
        %v520 = vadd.f32 %v513, %v518
        %v521 = vld [vmem:[#allocation2] sm:$0xff]
        %v522 = vld [vmem:[#allocation2 + $0x8] sm:$0xff]
        %v523 = vstv %s328
        %v524 = vmul.f32 %v521, %v523
        %v525 = vmul.f32 %v522, %v523
        %v526 = vadd.f32 %v519, %v524
        %v527 = vadd.f32 %v520, %v525
        %v528 = vld [vmem:[#allocation2 + $0x1] sm:$0xff]
        %v529 = vld [vmem:[#allocation2 + $0x9] sm:$0xff]
        %v530 = vstv %s335
        %v531 = vmul.f32 %v528, %v530
        %v532 = vmul.f32 %v529, %v530
        %v533 = vadd.f32 %v526, %v531
        %v534 = vadd.f32 %v527, %v532
        %v535 = vld [vmem:[#allocation2 + $0x2] sm:$0xff]
        %v536 = vld [vmem:[#allocation2 + $0xa] sm:$0xff]
        %v537 = vstv %s342
        %v538 = vmul.f32 %v535, %v537
        %v539 = vmul.f32 %v536, %v537
        %v540 = vadd.f32 %v533, %v538
        %v541 = vadd.f32 %v534, %v539
        %v542 = vld [vmem:[#allocation2 + $0x3] sm:$0xff]
        %v543 = vld [vmem:[#allocation2 + $0xb] sm:$0xff]
        %v544 = vstv %s349
        %v545 = vmul.f32 %v542, %v544
        %v546 = vmul.f32 %v543, %v544
        %v547 = vadd.f32 %v540, %v545
        %v548 = vadd.f32 %v541, %v546
        %v549 = vld [vmem:[#allocation2 + $0x4] sm:$0xff]
        %v550 = vld [vmem:[#allocation2 + $0xc] sm:$0xff]
        %v551 = vstv %s356
        %v552 = vmul.f32 %v549, %v551
        %v553 = vmul.f32 %v550, %v551
        %v554 = vadd.f32 %v547, %v552
        %v555 = vadd.f32 %v548, %v553
        %v556 = vld [vmem:[#allocation2 + $0x5] sm:$0xff]
        %v557 = vld [vmem:[#allocation2 + $0xd] sm:$0xff]
        %v558 = vstv %s363
        %v559 = vmul.f32 %v556, %v558
        %v560 = vmul.f32 %v557, %v558
        %v561 = vadd.f32 %v554, %v559
        %v562 = vadd.f32 %v555, %v560
        %v563 = vld [vmem:[#allocation2 + $0x6] sm:$0xff]
        %v564 = vld [vmem:[#allocation2 + $0xe] sm:$0xff]
        %v565 = vstv %s370
        %v566 = vmul.f32 %v563, %v565
        %v567 = vmul.f32 %v564, %v565
        %v568 = vadd.f32 %v561, %v566
        %v569 = vadd.f32 %v562, %v567
        %v570 = vld [vmem:[%s301] sm:$0xff]
        %v571 = vld [vmem:[%s301 + $0x8] sm:$0xff]
        %v572 = vstv %s329
        %v573 = vmul.f32 %v570, %v572
        %v574 = vmul.f32 %v571, %v572
        %v575 = vadd.f32 %v568, %v573
        %v576 = vadd.f32 %v569, %v574
        %v577 = vld [vmem:[%s301 + $0x1] sm:$0xff]
        %v578 = vld [vmem:[%s301 + $0x9] sm:$0xff]
        %v579 = vstv %s336
        %v580 = vmul.f32 %v577, %v579
        %v581 = vmul.f32 %v578, %v579
        %v582 = vadd.f32 %v575, %v580
        %v583 = vadd.f32 %v576, %v581
        %v584 = vld [vmem:[%s301 + $0x2] sm:$0xff]
        %v585 = vld [vmem:[%s301 + $0xa] sm:$0xff]
        %v586 = vstv %s343
        %v587 = vmul.f32 %v584, %v586
        %v588 = vmul.f32 %v585, %v586
        %v589 = vadd.f32 %v582, %v587
        %v590 = vadd.f32 %v583, %v588
        %v591 = vld [vmem:[%s301 + $0x3] sm:$0xff]
        %v592 = vld [vmem:[%s301 + $0xb] sm:$0xff]
        %v593 = vstv %s350
        %v594 = vmul.f32 %v591, %v593
        %v595 = vmul.f32 %v592, %v593
        %v596 = vadd.f32 %v589, %v594
        %v597 = vadd.f32 %v590, %v595
        %v598 = vld [vmem:[%s301 + $0x4] sm:$0xff]
        %v599 = vld [vmem:[%s301 + $0xc] sm:$0xff]
        %v600 = vstv %s357
        %v601 = vmul.f32 %v598, %v600
        %v602 = vmul.f32 %v599, %v600
        %v603 = vadd.f32 %v596, %v601
        %v604 = vadd.f32 %v597, %v602
        %v605 = vld [vmem:[%s301 + $0x5] sm:$0xff]
        %v606 = vld [vmem:[%s301 + $0xd] sm:$0xff]
        %v607 = vstv %s364
        %v608 = vmul.f32 %v605, %v607
        %v609 = vmul.f32 %v606, %v607
        %v610 = vadd.f32 %v603, %v608
        %v611 = vadd.f32 %v604, %v609
        %v612 = vld [vmem:[%s301 + $0x6] sm:$0xff]
        %v613 = vld [vmem:[%s301 + $0xe] sm:$0xff]
        %v614 = vstv %s371
        %v615 = vmul.f32 %v612, %v614
        %v616 = vmul.f32 %v613, %v614
        %v617 = vadd.f32 %v610, %v615
        %v618 = vadd.f32 %v611, %v616
        %v619 = vld [vmem:[%s311] sm:$0xff]
        %v620 = vld [vmem:[%s311 + $0x8] sm:$0xff]
        %v621 = vstv %s330
        %v622 = vmul.f32 %v619, %v621
        %v623 = vmul.f32 %v620, %v621
        %v624 = vadd.f32 %v617, %v622
        %v625 = vadd.f32 %v618, %v623
        %v626 = vld [vmem:[%s311 + $0x1] sm:$0xff]
        %v627 = vld [vmem:[%s311 + $0x9] sm:$0xff]
        %v628 = vstv %s337
        %v629 = vmul.f32 %v626, %v628
        %v630 = vmul.f32 %v627, %v628
        %v631 = vadd.f32 %v624, %v629
        %v632 = vadd.f32 %v625, %v630
        %v633 = vld [vmem:[%s311 + $0x2] sm:$0xff]
        %v634 = vld [vmem:[%s311 + $0xa] sm:$0xff]
        %v635 = vstv %s344
        %v636 = vmul.f32 %v633, %v635
        %v637 = vmul.f32 %v634, %v635
        %v638 = vadd.f32 %v631, %v636
        %v639 = vadd.f32 %v632, %v637
        %v640 = vld [vmem:[%s311 + $0x3] sm:$0xff]
        %v641 = vld [vmem:[%s311 + $0xb] sm:$0xff]
        %v642 = vstv %s351
        %v643 = vmul.f32 %v640, %v642
        %v644 = vmul.f32 %v641, %v642
        %v645 = vadd.f32 %v638, %v643
        %v646 = vadd.f32 %v639, %v644
        %v647 = vld [vmem:[%s311 + $0x4] sm:$0xff]
        %v648 = vld [vmem:[%s311 + $0xc] sm:$0xff]
        %v649 = vstv %s358
        %v650 = vmul.f32 %v647, %v649
        %v651 = vmul.f32 %v648, %v649
        %v652 = vadd.f32 %v645, %v650
        %v653 = vadd.f32 %v646, %v651
        %v654 = vld [vmem:[%s311 + $0x5] sm:$0xff]
        %v655 = vld [vmem:[%s311 + $0xd] sm:$0xff]
        %v656 = vstv %s365
        %v657 = vmul.f32 %v654, %v656
        %v658 = vmul.f32 %v655, %v656
        %v659 = vadd.f32 %v652, %v657
        %v660 = vadd.f32 %v653, %v658
        %v661 = vld [vmem:[%s311 + $0x6] sm:$0xff]
        %v662 = vld [vmem:[%s311 + $0xe] sm:$0xff]
        %v663 = vstv %s372
        %v664 = vmul.f32 %v661, %v663
        %v665 = vmul.f32 %v662, %v663
        %v666 = vadd.f32 %v659, %v664
        %v667 = vadd.f32 %v660, %v665
        %v668 = vld [vmem:[%s321] sm:$0xff]
        %v669 = vld [vmem:[%s321 + $0x8] sm:$0xff]
        %v670 = vstv %s331
        %v671 = vmul.f32 %v668, %v670
        %v672 = vmul.f32 %v669, %v670
        %v673 = vadd.f32 %v666, %v671
        %v674 = vadd.f32 %v667, %v672
        %v675 = vld [vmem:[%s321 + $0x1] sm:$0xff]
        %v676 = vld [vmem:[%s321 + $0x9] sm:$0xff]
        %v677 = vstv %s338
        %v678 = vmul.f32 %v675, %v677
        %v679 = vmul.f32 %v676, %v677
        %v680 = vadd.f32 %v673, %v678
        %v681 = vadd.f32 %v674, %v679
        %v682 = vld [vmem:[%s321 + $0x2] sm:$0xff]
        %v683 = vld [vmem:[%s321 + $0xa] sm:$0xff]
        %v684 = vstv %s345
        %v685 = vmul.f32 %v682, %v684
        %v686 = vmul.f32 %v683, %v684
        %v687 = vadd.f32 %v680, %v685
        %v688 = vadd.f32 %v681, %v686
        %v689 = vld [vmem:[%s321 + $0x3] sm:$0xff]
        %v690 = vld [vmem:[%s321 + $0xb] sm:$0xff]
        %v691 = vstv %s352
        %v692 = vmul.f32 %v689, %v691
        %v693 = vmul.f32 %v690, %v691
        %v694 = vadd.f32 %v687, %v692
        %v695 = vadd.f32 %v688, %v693
        %v696 = vld [vmem:[%s321 + $0x4] sm:$0xff]
        %v697 = vld [vmem:[%s321 + $0xc] sm:$0xff]
        %v698 = vstv %s359
        %v699 = vmul.f32 %v696, %v698
        %v700 = vmul.f32 %v697, %v698
        %v701 = vadd.f32 %v694, %v699
        %v702 = vadd.f32 %v695, %v700
        %v703 = vld [vmem:[%s321 + $0x5] sm:$0xff]
        %v704 = vld [vmem:[%s321 + $0xd] sm:$0xff]
        %v705 = vstv %s366
        %v706 = vmul.f32 %v703, %v705
        %v707 = vmul.f32 %v704, %v705
        %v708 = vadd.f32 %v701, %v706
        %v709 = vadd.f32 %v702, %v707
        %v710 = vld [vmem:[%s321 + $0x6] sm:$0xff]
        %v711 = vld [vmem:[%s321 + $0xe] sm:$0xff]
        %v712 = vstv %s373
        %v713 = vmul.f32 %v710, %v712
        %v714 = vmul.f32 %v711, %v712
        %v715 = vadd.f32 %v708, %v713
        %v716 = vadd.f32 %v709, %v714
        %717 = vst [vmem:[#allocation4] sm:$0xff] %v715
        %718 = vst [vmem:[#allocation4 + $0x8] sm:$0xff] %v716
        %s719 = scalar_lea.vmem %s217, 16 [#allocation5]
        %v720 = vld [vmem:[%s719] sm:$0xff]
        %v721 = vld [vmem:[%s719 + $0x8] sm:$0xff]
        %722 = vst.msk [vmem:[#allocation2 + $0x3] sm:$0xff] %vm260, %v720
        %723 = vst.msk [vmem:[#allocation2 + $0xb] sm:$0xff] %vm260, %v721
        %v724 = vld [vmem:[#allocation2] sm:$0xff]
        %v725 = vld [vmem:[#allocation2 + $0x8] sm:$0xff]
        %v726 = vld [vmem:[#allocation2 + $0x10] sm:$0xff]
        %727 = vrot.lane.b32.xlu0 %v724, 3
        %v728 = vpop.permute.xlu0 %727
        %729 = vrot.lane.b32.xlu0 %v725, 3
        %v730 = vpop.permute.xlu0 %729
        %731 = vrot.lane.b32.xlu0 %v726, 3
        %v732 = vpop.permute.xlu0 %731
        %733 = vst [vmem:[#allocation3] sm:$0xff] %v728
        %734 = vst [vmem:[#allocation3 + $0x8] sm:$0xff] %v730
        %735 = vst [vmem:[#allocation3 + $0x10] sm:$0xff] %v732
        %736 = vrot.lane.b32.xlu0 %v724, 2
        %v737 = vpop.permute.xlu0 %736
        %738 = vrot.lane.b32.xlu0 %v725, 2
        %v739 = vpop.permute.xlu0 %738
        %740 = vrot.lane.b32.xlu0 %v726, 2
        %v741 = vpop.permute.xlu0 %740
        %742 = vst [vmem:[%s281] sm:$0xff] %v737
        %743 = vst [vmem:[%s281 + $0x8] sm:$0xff] %v739
        %744 = vst [vmem:[%s281 + $0x10] sm:$0xff] %v741
        %745 = vrot.lane.b32.xlu0 %v724, 1
        %v746 = vpop.permute.xlu0 %745
        %747 = vrot.lane.b32.xlu0 %v725, 1
        %v748 = vpop.permute.xlu0 %747
        %749 = vrot.lane.b32.xlu0 %v726, 1
        %v750 = vpop.permute.xlu0 %749
        %751 = vst [vmem:[%s291] sm:$0xff] %v746
        %752 = vst [vmem:[%s291 + $0x8] sm:$0xff] %v748
        %753 = vst [vmem:[%s291 + $0x10] sm:$0xff] %v750
        %754 = vrot.lane.b32.xlu0 %v724, 127
        %v755 = vpop.permute.xlu0 %754
        %756 = vrot.lane.b32.xlu0 %v725, 127
        %v757 = vpop.permute.xlu0 %756
        %758 = vrot.lane.b32.xlu0 %v726, 127
        %v759 = vpop.permute.xlu0 %758
        %760 = vst [vmem:[%s301] sm:$0xff] %v755
        %761 = vst [vmem:[%s301 + $0x8] sm:$0xff] %v757
        %762 = vst [vmem:[%s301 + $0x10] sm:$0xff] %v759
        %763 = vrot.lane.b32.xlu0 %v724, 126
        %v764 = vpop.permute.xlu0 %763
        %765 = vrot.lane.b32.xlu0 %v725, 126
        %v766 = vpop.permute.xlu0 %765
        %767 = vrot.lane.b32.xlu0 %v726, 126
        %v768 = vpop.permute.xlu0 %767
        %769 = vst [vmem:[%s311] sm:$0xff] %v764
        %770 = vst [vmem:[%s311 + $0x8] sm:$0xff] %v766
        %771 = vst [vmem:[%s311 + $0x10] sm:$0xff] %v768
        %772 = vrot.lane.b32.xlu0 %v724, 125
        %v773 = vpop.permute.xlu0 %772
        %774 = vrot.lane.b32.xlu0 %v725, 125
        %v775 = vpop.permute.xlu0 %774
        %776 = vrot.lane.b32.xlu0 %v726, 125
        %v777 = vpop.permute.xlu0 %776
        %778 = vst [vmem:[%s321] sm:$0xff] %v773
        %779 = vst [vmem:[%s321 + $0x8] sm:$0xff] %v775
        %780 = vst [vmem:[%s321 + $0x10] sm:$0xff] %v777
        %s781 = sld [smem:[#allocation9 + $0x80]]
        %s782 = sld [smem:[#allocation9 + $0x81]]
        %s783 = sld [smem:[#allocation9 + $0x82]]
        %s784 = sld [smem:[#allocation9 + $0x83]]
        %s785 = sld [smem:[#allocation9 + $0x84]]
        %s786 = sld [smem:[#allocation9 + $0x85]]
        %s787 = sld [smem:[#allocation9 + $0x86]]
        %s788 = sld [smem:[#allocation9 + $0x87]]
        %s789 = sld [smem:[#allocation9 + $0x88]]
        %s790 = sld [smem:[#allocation9 + $0x89]]
        %s791 = sld [smem:[#allocation9 + $0x8a]]
        %s792 = sld [smem:[#allocation9 + $0x8b]]
        %s793 = sld [smem:[#allocation9 + $0x8c]]
        %s794 = sld [smem:[#allocation9 + $0x8d]]
        %s795 = sld [smem:[#allocation9 + $0x8e]]
        %s796 = sld [smem:[#allocation9 + $0x8f]]
        %s797 = sld [smem:[#allocation9 + $0x90]]
        %s798 = sld [smem:[#allocation9 + $0x91]]
        %s799 = sld [smem:[#allocation9 + $0x92]]
        %s800 = sld [smem:[#allocation9 + $0x93]]
        %s801 = sld [smem:[#allocation9 + $0x94]]
        %s802 = sld [smem:[#allocation9 + $0x95]]
        %s803 = sld [smem:[#allocation9 + $0x96]]
        %s804 = sld [smem:[#allocation9 + $0x97]]
        %s805 = sld [smem:[#allocation9 + $0x98]]
        %s806 = sld [smem:[#allocation9 + $0x99]]
        %s807 = sld [smem:[#allocation9 + $0x9a]]
        %s808 = sld [smem:[#allocation9 + $0x9b]]
        %s809 = sld [smem:[#allocation9 + $0x9c]]
        %s810 = sld [smem:[#allocation9 + $0x9d]]
        %s811 = sld [smem:[#allocation9 + $0x9e]]
        %s812 = sld [smem:[#allocation9 + $0x9f]]
        %s813 = sld [smem:[#allocation9 + $0xa0]]
        %s814 = sld [smem:[#allocation9 + $0xa1]]
        %s815 = sld [smem:[#allocation9 + $0xa2]]
        %s816 = sld [smem:[#allocation9 + $0xa3]]
        %s817 = sld [smem:[#allocation9 + $0xa4]]
        %s818 = sld [smem:[#allocation9 + $0xa5]]
        %s819 = sld [smem:[#allocation9 + $0xa6]]
        %s820 = sld [smem:[#allocation9 + $0xa7]]
        %s821 = sld [smem:[#allocation9 + $0xa8]]
        %s822 = sld [smem:[#allocation9 + $0xa9]]
        %s823 = sld [smem:[#allocation9 + $0xaa]]
        %s824 = sld [smem:[#allocation9 + $0xab]]
        %s825 = sld [smem:[#allocation9 + $0xac]]
        %s826 = sld [smem:[#allocation9 + $0xad]]
        %s827 = sld [smem:[#allocation9 + $0xae]]
        %s828 = sld [smem:[#allocation9 + $0xaf]]
        %s829 = sld [smem:[#allocation9 + $0xb0]]
        %v830 = vld [vmem:[#allocation3] sm:$0xff]
        %v831 = vld [vmem:[#allocation3 + $0x8] sm:$0xff]
        %v832 = vstv %s781
        %v833 = vmul.f32 %v830, %v832
        %v834 = vmul.f32 %v831, %v832
        %v835 = vadd.f32 %v833, 0.0
        %v836 = vadd.f32 %v834, 0.0
        %v837 = vld [vmem:[#allocation3 + $0x1] sm:$0xff]
        %v838 = vld [vmem:[#allocation3 + $0x9] sm:$0xff]
        %v839 = vstv %s788
        %v840 = vmul.f32 %v837, %v839
        %v841 = vmul.f32 %v838, %v839
        %v842 = vadd.f32 %v835, %v840
        %v843 = vadd.f32 %v836, %v841
        %v844 = vld [vmem:[#allocation3 + $0x2] sm:$0xff]
        %v845 = vld [vmem:[#allocation3 + $0xa] sm:$0xff]
        %v846 = vstv %s795
        %v847 = vmul.f32 %v844, %v846
        %v848 = vmul.f32 %v845, %v846
        %v849 = vadd.f32 %v842, %v847
        %v850 = vadd.f32 %v843, %v848
        %v851 = vld [vmem:[#allocation3 + $0x3] sm:$0xff]
        %v852 = vld [vmem:[#allocation3 + $0xb] sm:$0xff]
        %v853 = vstv %s802
        %v854 = vmul.f32 %v851, %v853
        %v855 = vmul.f32 %v852, %v853
        %v856 = vadd.f32 %v849, %v854
        %v857 = vadd.f32 %v850, %v855
        %v858 = vld [vmem:[#allocation3 + $0x4] sm:$0xff]
        %v859 = vld [vmem:[#allocation3 + $0xc] sm:$0xff]
        %v860 = vstv %s809
        %v861 = vmul.f32 %v858, %v860
        %v862 = vmul.f32 %v859, %v860
        %v863 = vadd.f32 %v856, %v861
        %v864 = vadd.f32 %v857, %v862
        %v865 = vld [vmem:[#allocation3 + $0x5] sm:$0xff]
        %v866 = vld [vmem:[#allocation3 + $0xd] sm:$0xff]
        %v867 = vstv %s816
        %v868 = vmul.f32 %v865, %v867
        %v869 = vmul.f32 %v866, %v867
        %v870 = vadd.f32 %v863, %v868
        %v871 = vadd.f32 %v864, %v869
        %v872 = vld [vmem:[#allocation3 + $0x6] sm:$0xff]
        %v873 = vld [vmem:[#allocation3 + $0xe] sm:$0xff]
        %v874 = vstv %s823
        %v875 = vmul.f32 %v872, %v874
        %v876 = vmul.f32 %v873, %v874
        %v877 = vadd.f32 %v870, %v875
        %v878 = vadd.f32 %v871, %v876
        %v879 = vld [vmem:[%s281] sm:$0xff]
        %v880 = vld [vmem:[%s281 + $0x8] sm:$0xff]
        %v881 = vstv %s782
        %v882 = vmul.f32 %v879, %v881
        %v883 = vmul.f32 %v880, %v881
        %v884 = vadd.f32 %v877, %v882
        %v885 = vadd.f32 %v878, %v883
        %v886 = vld [vmem:[%s281 + $0x1] sm:$0xff]
        %v887 = vld [vmem:[%s281 + $0x9] sm:$0xff]
        %v888 = vstv %s789
        %v889 = vmul.f32 %v886, %v888
        %v890 = vmul.f32 %v887, %v888
        %v891 = vadd.f32 %v884, %v889
        %v892 = vadd.f32 %v885, %v890
        %v893 = vld [vmem:[%s281 + $0x2] sm:$0xff]
        %v894 = vld [vmem:[%s281 + $0xa] sm:$0xff]
        %v895 = vstv %s796
        %v896 = vmul.f32 %v893, %v895
        %v897 = vmul.f32 %v894, %v895
        %v898 = vadd.f32 %v891, %v896
        %v899 = vadd.f32 %v892, %v897
        %v900 = vld [vmem:[%s281 + $0x3] sm:$0xff]
        %v901 = vld [vmem:[%s281 + $0xb] sm:$0xff]
        %v902 = vstv %s803
        %v903 = vmul.f32 %v900, %v902
        %v904 = vmul.f32 %v901, %v902
        %v905 = vadd.f32 %v898, %v903
        %v906 = vadd.f32 %v899, %v904
        %v907 = vld [vmem:[%s281 + $0x4] sm:$0xff]
        %v908 = vld [vmem:[%s281 + $0xc] sm:$0xff]
        %v909 = vstv %s810
        %v910 = vmul.f32 %v907, %v909
        %v911 = vmul.f32 %v908, %v909
        %v912 = vadd.f32 %v905, %v910
        %v913 = vadd.f32 %v906, %v911
        %v914 = vld [vmem:[%s281 + $0x5] sm:$0xff]
        %v915 = vld [vmem:[%s281 + $0xd] sm:$0xff]
        %v916 = vstv %s817
        %v917 = vmul.f32 %v914, %v916
        %v918 = vmul.f32 %v915, %v916
        %v919 = vadd.f32 %v912, %v917
        %v920 = vadd.f32 %v913, %v918
        %v921 = vld [vmem:[%s281 + $0x6] sm:$0xff]
        %v922 = vld [vmem:[%s281 + $0xe] sm:$0xff]
        %v923 = vstv %s824
        %v924 = vmul.f32 %v921, %v923
        %v925 = vmul.f32 %v922, %v923
        %v926 = vadd.f32 %v919, %v924
        %v927 = vadd.f32 %v920, %v925
        %v928 = vld [vmem:[%s291] sm:$0xff]
        %v929 = vld [vmem:[%s291 + $0x8] sm:$0xff]
        %v930 = vstv %s783
        %v931 = vmul.f32 %v928, %v930
        %v932 = vmul.f32 %v929, %v930
        %v933 = vadd.f32 %v926, %v931
        %v934 = vadd.f32 %v927, %v932
        %v935 = vld [vmem:[%s291 + $0x1] sm:$0xff]
        %v936 = vld [vmem:[%s291 + $0x9] sm:$0xff]
        %v937 = vstv %s790
        %v938 = vmul.f32 %v935, %v937
        %v939 = vmul.f32 %v936, %v937
        %v940 = vadd.f32 %v933, %v938
        %v941 = vadd.f32 %v934, %v939
        %v942 = vld [vmem:[%s291 + $0x2] sm:$0xff]
        %v943 = vld [vmem:[%s291 + $0xa] sm:$0xff]
        %v944 = vstv %s797
        %v945 = vmul.f32 %v942, %v944
        %v946 = vmul.f32 %v943, %v944
        %v947 = vadd.f32 %v940, %v945
        %v948 = vadd.f32 %v941, %v946
        %v949 = vld [vmem:[%s291 + $0x3] sm:$0xff]
        %v950 = vld [vmem:[%s291 + $0xb] sm:$0xff]
        %v951 = vstv %s804
        %v952 = vmul.f32 %v949, %v951
        %v953 = vmul.f32 %v950, %v951
        %v954 = vadd.f32 %v947, %v952
        %v955 = vadd.f32 %v948, %v953
        %v956 = vld [vmem:[%s291 + $0x4] sm:$0xff]
        %v957 = vld [vmem:[%s291 + $0xc] sm:$0xff]
        %v958 = vstv %s811
        %v959 = vmul.f32 %v956, %v958
        %v960 = vmul.f32 %v957, %v958
        %v961 = vadd.f32 %v954, %v959
        %v962 = vadd.f32 %v955, %v960
        %v963 = vld [vmem:[%s291 + $0x5] sm:$0xff]
        %v964 = vld [vmem:[%s291 + $0xd] sm:$0xff]
        %v965 = vstv %s818
        %v966 = vmul.f32 %v963, %v965
        %v967 = vmul.f32 %v964, %v965
        %v968 = vadd.f32 %v961, %v966
        %v969 = vadd.f32 %v962, %v967
        %v970 = vld [vmem:[%s291 + $0x6] sm:$0xff]
        %v971 = vld [vmem:[%s291 + $0xe] sm:$0xff]
        %v972 = vstv %s825
        %v973 = vmul.f32 %v970, %v972
        %v974 = vmul.f32 %v971, %v972
        %v975 = vadd.f32 %v968, %v973
        %v976 = vadd.f32 %v969, %v974
        %v977 = vld [vmem:[#allocation2] sm:$0xff]
        %v978 = vld [vmem:[#allocation2 + $0x8] sm:$0xff]
        %v979 = vstv %s784
        %v980 = vmul.f32 %v977, %v979
        %v981 = vmul.f32 %v978, %v979
        %v982 = vadd.f32 %v975, %v980
        %v983 = vadd.f32 %v976, %v981
        %v984 = vld [vmem:[#allocation2 + $0x1] sm:$0xff]
        %v985 = vld [vmem:[#allocation2 + $0x9] sm:$0xff]
        %v986 = vstv %s791
        %v987 = vmul.f32 %v984, %v986
        %v988 = vmul.f32 %v985, %v986
        %v989 = vadd.f32 %v982, %v987
        %v990 = vadd.f32 %v983, %v988
        %v991 = vld [vmem:[#allocation2 + $0x2] sm:$0xff]
        %v992 = vld [vmem:[#allocation2 + $0xa] sm:$0xff]
        %v993 = vstv %s798
        %v994 = vmul.f32 %v991, %v993
        %v995 = vmul.f32 %v992, %v993
        %v996 = vadd.f32 %v989, %v994
        %v997 = vadd.f32 %v990, %v995
        %v998 = vld [vmem:[#allocation2 + $0x3] sm:$0xff]
        %v999 = vld [vmem:[#allocation2 + $0xb] sm:$0xff]
        %v1000 = vstv %s805
        %v1001 = vmul.f32 %v998, %v1000
        %v1002 = vmul.f32 %v999, %v1000
        %v1003 = vadd.f32 %v996, %v1001
        %v1004 = vadd.f32 %v997, %v1002
        %v1005 = vld [vmem:[#allocation2 + $0x4] sm:$0xff]
        %v1006 = vld [vmem:[#allocation2 + $0xc] sm:$0xff]
        %v1007 = vstv %s812
        %v1008 = vmul.f32 %v1005, %v1007
        %v1009 = vmul.f32 %v1006, %v1007
        %v1010 = vadd.f32 %v1003, %v1008
        %v1011 = vadd.f32 %v1004, %v1009
        %v1012 = vld [vmem:[#allocation2 + $0x5] sm:$0xff]
        %v1013 = vld [vmem:[#allocation2 + $0xd] sm:$0xff]
        %v1014 = vstv %s819
        %v1015 = vmul.f32 %v1012, %v1014
        %v1016 = vmul.f32 %v1013, %v1014
        %v1017 = vadd.f32 %v1010, %v1015
        %v1018 = vadd.f32 %v1011, %v1016
        %v1019 = vld [vmem:[#allocation2 + $0x6] sm:$0xff]
        %v1020 = vld [vmem:[#allocation2 + $0xe] sm:$0xff]
        %v1021 = vstv %s826
        %v1022 = vmul.f32 %v1019, %v1021
        %v1023 = vmul.f32 %v1020, %v1021
        %v1024 = vadd.f32 %v1017, %v1022
        %v1025 = vadd.f32 %v1018, %v1023
        %v1026 = vld [vmem:[%s301] sm:$0xff]
        %v1027 = vld [vmem:[%s301 + $0x8] sm:$0xff]
        %v1028 = vstv %s785
        %v1029 = vmul.f32 %v1026, %v1028
        %v1030 = vmul.f32 %v1027, %v1028
        %v1031 = vadd.f32 %v1024, %v1029
        %v1032 = vadd.f32 %v1025, %v1030
        %v1033 = vld [vmem:[%s301 + $0x1] sm:$0xff]
        %v1034 = vld [vmem:[%s301 + $0x9] sm:$0xff]
        %v1035 = vstv %s792
        %v1036 = vmul.f32 %v1033, %v1035
        %v1037 = vmul.f32 %v1034, %v1035
        %v1038 = vadd.f32 %v1031, %v1036
        %v1039 = vadd.f32 %v1032, %v1037
        %v1040 = vld [vmem:[%s301 + $0x2] sm:$0xff]
        %v1041 = vld [vmem:[%s301 + $0xa] sm:$0xff]
        %v1042 = vstv %s799
        %v1043 = vmul.f32 %v1040, %v1042
        %v1044 = vmul.f32 %v1041, %v1042
        %v1045 = vadd.f32 %v1038, %v1043
        %v1046 = vadd.f32 %v1039, %v1044
        %v1047 = vld [vmem:[%s301 + $0x3] sm:$0xff]
        %v1048 = vld [vmem:[%s301 + $0xb] sm:$0xff]
        %v1049 = vstv %s806
        %v1050 = vmul.f32 %v1047, %v1049
        %v1051 = vmul.f32 %v1048, %v1049
        %v1052 = vadd.f32 %v1045, %v1050
        %v1053 = vadd.f32 %v1046, %v1051
        %v1054 = vld [vmem:[%s301 + $0x4] sm:$0xff]
        %v1055 = vld [vmem:[%s301 + $0xc] sm:$0xff]
        %v1056 = vstv %s813
        %v1057 = vmul.f32 %v1054, %v1056
        %v1058 = vmul.f32 %v1055, %v1056
        %v1059 = vadd.f32 %v1052, %v1057
        %v1060 = vadd.f32 %v1053, %v1058
        %v1061 = vld [vmem:[%s301 + $0x5] sm:$0xff]
        %v1062 = vld [vmem:[%s301 + $0xd] sm:$0xff]
        %v1063 = vstv %s820
        %v1064 = vmul.f32 %v1061, %v1063
        %v1065 = vmul.f32 %v1062, %v1063
        %v1066 = vadd.f32 %v1059, %v1064
        %v1067 = vadd.f32 %v1060, %v1065
        %v1068 = vld [vmem:[%s301 + $0x6] sm:$0xff]
        %v1069 = vld [vmem:[%s301 + $0xe] sm:$0xff]
        %v1070 = vstv %s827
        %v1071 = vmul.f32 %v1068, %v1070
        %v1072 = vmul.f32 %v1069, %v1070
        %v1073 = vadd.f32 %v1066, %v1071
        %v1074 = vadd.f32 %v1067, %v1072
        %v1075 = vld [vmem:[%s311] sm:$0xff]
        %v1076 = vld [vmem:[%s311 + $0x8] sm:$0xff]
        %v1077 = vstv %s786
        %v1078 = vmul.f32 %v1075, %v1077
        %v1079 = vmul.f32 %v1076, %v1077
        %v1080 = vadd.f32 %v1073, %v1078
        %v1081 = vadd.f32 %v1074, %v1079
        %v1082 = vld [vmem:[%s311 + $0x1] sm:$0xff]
        %v1083 = vld [vmem:[%s311 + $0x9] sm:$0xff]
        %v1084 = vstv %s793
        %v1085 = vmul.f32 %v1082, %v1084
        %v1086 = vmul.f32 %v1083, %v1084
        %v1087 = vadd.f32 %v1080, %v1085
        %v1088 = vadd.f32 %v1081, %v1086
        %v1089 = vld [vmem:[%s311 + $0x2] sm:$0xff]
        %v1090 = vld [vmem:[%s311 + $0xa] sm:$0xff]
        %v1091 = vstv %s800
        %v1092 = vmul.f32 %v1089, %v1091
        %v1093 = vmul.f32 %v1090, %v1091
        %v1094 = vadd.f32 %v1087, %v1092
        %v1095 = vadd.f32 %v1088, %v1093
        %v1096 = vld [vmem:[%s311 + $0x3] sm:$0xff]
        %v1097 = vld [vmem:[%s311 + $0xb] sm:$0xff]
        %v1098 = vstv %s807
        %v1099 = vmul.f32 %v1096, %v1098
        %v1100 = vmul.f32 %v1097, %v1098
        %v1101 = vadd.f32 %v1094, %v1099
        %v1102 = vadd.f32 %v1095, %v1100
        %v1103 = vld [vmem:[%s311 + $0x4] sm:$0xff]
        %v1104 = vld [vmem:[%s311 + $0xc] sm:$0xff]
        %v1105 = vstv %s814
        %v1106 = vmul.f32 %v1103, %v1105
        %v1107 = vmul.f32 %v1104, %v1105
        %v1108 = vadd.f32 %v1101, %v1106
        %v1109 = vadd.f32 %v1102, %v1107
        %v1110 = vld [vmem:[%s311 + $0x5] sm:$0xff]
        %v1111 = vld [vmem:[%s311 + $0xd] sm:$0xff]
        %v1112 = vstv %s821
        %v1113 = vmul.f32 %v1110, %v1112
        %v1114 = vmul.f32 %v1111, %v1112
        %v1115 = vadd.f32 %v1108, %v1113
        %v1116 = vadd.f32 %v1109, %v1114
        %v1117 = vld [vmem:[%s311 + $0x6] sm:$0xff]
        %v1118 = vld [vmem:[%s311 + $0xe] sm:$0xff]
        %v1119 = vstv %s828
        %v1120 = vmul.f32 %v1117, %v1119
        %v1121 = vmul.f32 %v1118, %v1119
        %v1122 = vadd.f32 %v1115, %v1120
        %v1123 = vadd.f32 %v1116, %v1121
        %v1124 = vld [vmem:[%s321] sm:$0xff]
        %v1125 = vld [vmem:[%s321 + $0x8] sm:$0xff]
        %v1126 = vstv %s787
        %v1127 = vmul.f32 %v1124, %v1126
        %v1128 = vmul.f32 %v1125, %v1126
        %v1129 = vadd.f32 %v1122, %v1127
        %v1130 = vadd.f32 %v1123, %v1128
        %v1131 = vld [vmem:[%s321 + $0x1] sm:$0xff]
        %v1132 = vld [vmem:[%s321 + $0x9] sm:$0xff]
        %v1133 = vstv %s794
        %v1134 = vmul.f32 %v1131, %v1133
        %v1135 = vmul.f32 %v1132, %v1133
        %v1136 = vadd.f32 %v1129, %v1134
        %v1137 = vadd.f32 %v1130, %v1135
        %v1138 = vld [vmem:[%s321 + $0x2] sm:$0xff]
        %v1139 = vld [vmem:[%s321 + $0xa] sm:$0xff]
        %v1140 = vstv %s801
        %v1141 = vmul.f32 %v1138, %v1140
        %v1142 = vmul.f32 %v1139, %v1140
        %v1143 = vadd.f32 %v1136, %v1141
        %v1144 = vadd.f32 %v1137, %v1142
        %v1145 = vld [vmem:[%s321 + $0x3] sm:$0xff]
        %v1146 = vld [vmem:[%s321 + $0xb] sm:$0xff]
        %v1147 = vstv %s808
        %v1148 = vmul.f32 %v1145, %v1147
        %v1149 = vmul.f32 %v1146, %v1147
        %v1150 = vadd.f32 %v1143, %v1148
        %v1151 = vadd.f32 %v1144, %v1149
        %v1152 = vld [vmem:[%s321 + $0x4] sm:$0xff]
        %v1153 = vld [vmem:[%s321 + $0xc] sm:$0xff]
        %v1154 = vstv %s815
        %v1155 = vmul.f32 %v1152, %v1154
        %v1156 = vmul.f32 %v1153, %v1154
        %v1157 = vadd.f32 %v1150, %v1155
        %v1158 = vadd.f32 %v1151, %v1156
        %v1159 = vld [vmem:[%s321 + $0x5] sm:$0xff]
        %v1160 = vld [vmem:[%s321 + $0xd] sm:$0xff]
        %v1161 = vstv %s822
        %v1162 = vmul.f32 %v1159, %v1161
        %v1163 = vmul.f32 %v1160, %v1161
        %v1164 = vadd.f32 %v1157, %v1162
        %v1165 = vadd.f32 %v1158, %v1163
        %v1166 = vld [vmem:[%s321 + $0x6] sm:$0xff]
        %v1167 = vld [vmem:[%s321 + $0xe] sm:$0xff]
        %v1168 = vstv %s829
        %v1169 = vmul.f32 %v1166, %v1168
        %v1170 = vmul.f32 %v1167, %v1168
        %v1171 = vadd.f32 %v1164, %v1169
        %v1172 = vadd.f32 %v1165, %v1170
        %s1173 = scalar_lea.vmem [#allocation4], 16
        %1174 = vst [vmem:[%s1173] sm:$0xff] %v1171
        %1175 = vst [vmem:[%s1173 + $0x8] sm:$0xff] %v1172
        %s1176 = scalar_lea.vmem %s217, 32 [#allocation5]
        %v1177 = vld [vmem:[%s1176] sm:$0xff]
        %v1178 = vld [vmem:[%s1176 + $0x8] sm:$0xff]
        %1179 = vst.msk [vmem:[#allocation2 + $0x3] sm:$0xff] %vm260, %v1177
        %1180 = vst.msk [vmem:[#allocation2 + $0xb] sm:$0xff] %vm260, %v1178
        %v1181 = vld [vmem:[#allocation2] sm:$0xff]
        %v1182 = vld [vmem:[#allocation2 + $0x8] sm:$0xff]
        %v1183 = vld [vmem:[#allocation2 + $0x10] sm:$0xff]
        %1184 = vrot.lane.b32.xlu0 %v1181, 3
        %v1185 = vpop.permute.xlu0 %1184
        %1186 = vrot.lane.b32.xlu0 %v1182, 3
        %v1187 = vpop.permute.xlu0 %1186
        %1188 = vrot.lane.b32.xlu0 %v1183, 3
        %v1189 = vpop.permute.xlu0 %1188
        %1190 = vst [vmem:[#allocation3] sm:$0xff] %v1185
        %1191 = vst [vmem:[#allocation3 + $0x8] sm:$0xff] %v1187
        %1192 = vst [vmem:[#allocation3 + $0x10] sm:$0xff] %v1189
        %1193 = vrot.lane.b32.xlu0 %v1181, 2
        %v1194 = vpop.permute.xlu0 %1193
        %1195 = vrot.lane.b32.xlu0 %v1182, 2
        %v1196 = vpop.permute.xlu0 %1195
        %1197 = vrot.lane.b32.xlu0 %v1183, 2
        %v1198 = vpop.permute.xlu0 %1197
        %1199 = vst [vmem:[%s281] sm:$0xff] %v1194
        %1200 = vst [vmem:[%s281 + $0x8] sm:$0xff] %v1196
        %1201 = vst [vmem:[%s281 + $0x10] sm:$0xff] %v1198
        %1202 = vrot.lane.b32.xlu0 %v1181, 1
        %v1203 = vpop.permute.xlu0 %1202
        %1204 = vrot.lane.b32.xlu0 %v1182, 1
        %v1205 = vpop.permute.xlu0 %1204
        %1206 = vrot.lane.b32.xlu0 %v1183, 1
        %v1207 = vpop.permute.xlu0 %1206
        %1208 = vst [vmem:[%s291] sm:$0xff] %v1203
        %1209 = vst [vmem:[%s291 + $0x8] sm:$0xff] %v1205
        %1210 = vst [vmem:[%s291 + $0x10] sm:$0xff] %v1207
        %1211 = vrot.lane.b32.xlu0 %v1181, 127
        %v1212 = vpop.permute.xlu0 %1211
        %1213 = vrot.lane.b32.xlu0 %v1182, 127
        %v1214 = vpop.permute.xlu0 %1213
        %1215 = vrot.lane.b32.xlu0 %v1183, 127
        %v1216 = vpop.permute.xlu0 %1215
        %1217 = vst [vmem:[%s301] sm:$0xff] %v1212
        %1218 = vst [vmem:[%s301 + $0x8] sm:$0xff] %v1214
        %1219 = vst [vmem:[%s301 + $0x10] sm:$0xff] %v1216
        %1220 = vrot.lane.b32.xlu0 %v1181, 126
        %v1221 = vpop.permute.xlu0 %1220
        %1222 = vrot.lane.b32.xlu0 %v1182, 126
        %v1223 = vpop.permute.xlu0 %1222
        %1224 = vrot.lane.b32.xlu0 %v1183, 126
        %v1225 = vpop.permute.xlu0 %1224
        %1226 = vst [vmem:[%s311] sm:$0xff] %v1221
        %1227 = vst [vmem:[%s311 + $0x8] sm:$0xff] %v1223
        %1228 = vst [vmem:[%s311 + $0x10] sm:$0xff] %v1225
        %1229 = vrot.lane.b32.xlu0 %v1181, 125
        %v1230 = vpop.permute.xlu0 %1229
        %1231 = vrot.lane.b32.xlu0 %v1182, 125
        %v1232 = vpop.permute.xlu0 %1231
        %1233 = vrot.lane.b32.xlu0 %v1183, 125
        %v1234 = vpop.permute.xlu0 %1233
        %1235 = vst [vmem:[%s321] sm:$0xff] %v1230
        %1236 = vst [vmem:[%s321 + $0x8] sm:$0xff] %v1232
        %1237 = vst [vmem:[%s321 + $0x10] sm:$0xff] %v1234
        %s1238 = sld [smem:[#allocation9 + $0x100]]
        %s1239 = sld [smem:[#allocation9 + $0x101]]
        %s1240 = sld [smem:[#allocation9 + $0x102]]
        %s1241 = sld [smem:[#allocation9 + $0x103]]
        %s1242 = sld [smem:[#allocation9 + $0x104]]
        %s1243 = sld [smem:[#allocation9 + $0x105]]
        %s1244 = sld [smem:[#allocation9 + $0x106]]
        %s1245 = sld [smem:[#allocation9 + $0x107]]
        %s1246 = sld [smem:[#allocation9 + $0x108]]
        %s1247 = sld [smem:[#allocation9 + $0x109]]
        %s1248 = sld [smem:[#allocation9 + $0x10a]]
        %s1249 = sld [smem:[#allocation9 + $0x10b]]
        %s1250 = sld [smem:[#allocation9 + $0x10c]]
        %s1251 = sld [smem:[#allocation9 + $0x10d]]
        %s1252 = sld [smem:[#allocation9 + $0x10e]]
        %s1253 = sld [smem:[#allocation9 + $0x10f]]
        %s1254 = sld [smem:[#allocation9 + $0x110]]
        %s1255 = sld [smem:[#allocation9 + $0x111]]
        %s1256 = sld [smem:[#allocation9 + $0x112]]
        %s1257 = sld [smem:[#allocation9 + $0x113]]
        %s1258 = sld [smem:[#allocation9 + $0x114]]
        %s1259 = sld [smem:[#allocation9 + $0x115]]
        %s1260 = sld [smem:[#allocation9 + $0x116]]
        %s1261 = sld [smem:[#allocation9 + $0x117]]
        %s1262 = sld [smem:[#allocation9 + $0x118]]
        %s1263 = sld [smem:[#allocation9 + $0x119]]
        %s1264 = sld [smem:[#allocation9 + $0x11a]]
        %s1265 = sld [smem:[#allocation9 + $0x11b]]
        %s1266 = sld [smem:[#allocation9 + $0x11c]]
        %s1267 = sld [smem:[#allocation9 + $0x11d]]
        %s1268 = sld [smem:[#allocation9 + $0x11e]]
        %s1269 = sld [smem:[#allocation9 + $0x11f]]
        %s1270 = sld [smem:[#allocation9 + $0x120]]
        %s1271 = sld [smem:[#allocation9 + $0x121]]
        %s1272 = sld [smem:[#allocation9 + $0x122]]
        %s1273 = sld [smem:[#allocation9 + $0x123]]
        %s1274 = sld [smem:[#allocation9 + $0x124]]
        %s1275 = sld [smem:[#allocation9 + $0x125]]
        %s1276 = sld [smem:[#allocation9 + $0x126]]
        %s1277 = sld [smem:[#allocation9 + $0x127]]
        %s1278 = sld [smem:[#allocation9 + $0x128]]
        %s1279 = sld [smem:[#allocation9 + $0x129]]
        %s1280 = sld [smem:[#allocation9 + $0x12a]]
        %s1281 = sld [smem:[#allocation9 + $0x12b]]
        %s1282 = sld [smem:[#allocation9 + $0x12c]]
        %s1283 = sld [smem:[#allocation9 + $0x12d]]
        %s1284 = sld [smem:[#allocation9 + $0x12e]]
        %s1285 = sld [smem:[#allocation9 + $0x12f]]
        %s1286 = sld [smem:[#allocation9 + $0x130]]
        %v1287 = vld [vmem:[#allocation3] sm:$0xff]
        %v1288 = vld [vmem:[#allocation3 + $0x8] sm:$0xff]
        %v1289 = vstv %s1238
        %v1290 = vmul.f32 %v1287, %v1289
        %v1291 = vmul.f32 %v1288, %v1289
        %v1292 = vadd.f32 %v1290, 0.0
        %v1293 = vadd.f32 %v1291, 0.0
        %v1294 = vld [vmem:[#allocation3 + $0x1] sm:$0xff]
        %v1295 = vld [vmem:[#allocation3 + $0x9] sm:$0xff]
        %v1296 = vstv %s1245
        %v1297 = vmul.f32 %v1294, %v1296
        %v1298 = vmul.f32 %v1295, %v1296
        %v1299 = vadd.f32 %v1292, %v1297
        %v1300 = vadd.f32 %v1293, %v1298
        %v1301 = vld [vmem:[#allocation3 + $0x2] sm:$0xff]
        %v1302 = vld [vmem:[#allocation3 + $0xa] sm:$0xff]
        %v1303 = vstv %s1252
        %v1304 = vmul.f32 %v1301, %v1303
        %v1305 = vmul.f32 %v1302, %v1303
        %v1306 = vadd.f32 %v1299, %v1304
        %v1307 = vadd.f32 %v1300, %v1305
        %v1308 = vld [vmem:[#allocation3 + $0x3] sm:$0xff]
        %v1309 = vld [vmem:[#allocation3 + $0xb] sm:$0xff]
        %v1310 = vstv %s1259
        %v1311 = vmul.f32 %v1308, %v1310
        %v1312 = vmul.f32 %v1309, %v1310
        %v1313 = vadd.f32 %v1306, %v1311
        %v1314 = vadd.f32 %v1307, %v1312
        %v1315 = vld [vmem:[#allocation3 + $0x4] sm:$0xff]
        %v1316 = vld [vmem:[#allocation3 + $0xc] sm:$0xff]
        %v1317 = vstv %s1266
        %v1318 = vmul.f32 %v1315, %v1317
        %v1319 = vmul.f32 %v1316, %v1317
        %v1320 = vadd.f32 %v1313, %v1318
        %v1321 = vadd.f32 %v1314, %v1319
        %v1322 = vld [vmem:[#allocation3 + $0x5] sm:$0xff]
        %v1323 = vld [vmem:[#allocation3 + $0xd] sm:$0xff]
        %v1324 = vstv %s1273
        %v1325 = vmul.f32 %v1322, %v1324
        %v1326 = vmul.f32 %v1323, %v1324
        %v1327 = vadd.f32 %v1320, %v1325
        %v1328 = vadd.f32 %v1321, %v1326
        %v1329 = vld [vmem:[#allocation3 + $0x6] sm:$0xff]
        %v1330 = vld [vmem:[#allocation3 + $0xe] sm:$0xff]
        %v1331 = vstv %s1280
        %v1332 = vmul.f32 %v1329, %v1331
        %v1333 = vmul.f32 %v1330, %v1331
        %v1334 = vadd.f32 %v1327, %v1332
        %v1335 = vadd.f32 %v1328, %v1333
        %v1336 = vld [vmem:[%s281] sm:$0xff]
        %v1337 = vld [vmem:[%s281 + $0x8] sm:$0xff]
        %v1338 = vstv %s1239
        %v1339 = vmul.f32 %v1336, %v1338
        %v1340 = vmul.f32 %v1337, %v1338
        %v1341 = vadd.f32 %v1334, %v1339
        %v1342 = vadd.f32 %v1335, %v1340
        %v1343 = vld [vmem:[%s281 + $0x1] sm:$0xff]
        %v1344 = vld [vmem:[%s281 + $0x9] sm:$0xff]
        %v1345 = vstv %s1246
        %v1346 = vmul.f32 %v1343, %v1345
        %v1347 = vmul.f32 %v1344, %v1345
        %v1348 = vadd.f32 %v1341, %v1346
        %v1349 = vadd.f32 %v1342, %v1347
        %v1350 = vld [vmem:[%s281 + $0x2] sm:$0xff]
        %v1351 = vld [vmem:[%s281 + $0xa] sm:$0xff]
        %v1352 = vstv %s1253
        %v1353 = vmul.f32 %v1350, %v1352
        %v1354 = vmul.f32 %v1351, %v1352
        %v1355 = vadd.f32 %v1348, %v1353
        %v1356 = vadd.f32 %v1349, %v1354
        %v1357 = vld [vmem:[%s281 + $0x3] sm:$0xff]
        %v1358 = vld [vmem:[%s281 + $0xb] sm:$0xff]
        %v1359 = vstv %s1260
        %v1360 = vmul.f32 %v1357, %v1359
        %v1361 = vmul.f32 %v1358, %v1359
        %v1362 = vadd.f32 %v1355, %v1360
        %v1363 = vadd.f32 %v1356, %v1361
        %v1364 = vld [vmem:[%s281 + $0x4] sm:$0xff]
        %v1365 = vld [vmem:[%s281 + $0xc] sm:$0xff]
        %v1366 = vstv %s1267
        %v1367 = vmul.f32 %v1364, %v1366
        %v1368 = vmul.f32 %v1365, %v1366
        %v1369 = vadd.f32 %v1362, %v1367
        %v1370 = vadd.f32 %v1363, %v1368
        %v1371 = vld [vmem:[%s281 + $0x5] sm:$0xff]
        %v1372 = vld [vmem:[%s281 + $0xd] sm:$0xff]
        %v1373 = vstv %s1274
        %v1374 = vmul.f32 %v1371, %v1373
        %v1375 = vmul.f32 %v1372, %v1373
        %v1376 = vadd.f32 %v1369, %v1374
        %v1377 = vadd.f32 %v1370, %v1375
        %v1378 = vld [vmem:[%s281 + $0x6] sm:$0xff]
        %v1379 = vld [vmem:[%s281 + $0xe] sm:$0xff]
        %v1380 = vstv %s1281
        %v1381 = vmul.f32 %v1378, %v1380
        %v1382 = vmul.f32 %v1379, %v1380
        %v1383 = vadd.f32 %v1376, %v1381
        %v1384 = vadd.f32 %v1377, %v1382
        %v1385 = vld [vmem:[%s291] sm:$0xff]
        %v1386 = vld [vmem:[%s291 + $0x8] sm:$0xff]
        %v1387 = vstv %s1240
        %v1388 = vmul.f32 %v1385, %v1387
        %v1389 = vmul.f32 %v1386, %v1387
        %v1390 = vadd.f32 %v1383, %v1388
        %v1391 = vadd.f32 %v1384, %v1389
        %v1392 = vld [vmem:[%s291 + $0x1] sm:$0xff]
        %v1393 = vld [vmem:[%s291 + $0x9] sm:$0xff]
        %v1394 = vstv %s1247
        %v1395 = vmul.f32 %v1392, %v1394
        %v1396 = vmul.f32 %v1393, %v1394
        %v1397 = vadd.f32 %v1390, %v1395
        %v1398 = vadd.f32 %v1391, %v1396
        %v1399 = vld [vmem:[%s291 + $0x2] sm:$0xff]
        %v1400 = vld [vmem:[%s291 + $0xa] sm:$0xff]
        %v1401 = vstv %s1254
        %v1402 = vmul.f32 %v1399, %v1401
        %v1403 = vmul.f32 %v1400, %v1401
        %v1404 = vadd.f32 %v1397, %v1402
        %v1405 = vadd.f32 %v1398, %v1403
        %v1406 = vld [vmem:[%s291 + $0x3] sm:$0xff]
        %v1407 = vld [vmem:[%s291 + $0xb] sm:$0xff]
        %v1408 = vstv %s1261
        %v1409 = vmul.f32 %v1406, %v1408
        %v1410 = vmul.f32 %v1407, %v1408
        %v1411 = vadd.f32 %v1404, %v1409
        %v1412 = vadd.f32 %v1405, %v1410
        %v1413 = vld [vmem:[%s291 + $0x4] sm:$0xff]
        %v1414 = vld [vmem:[%s291 + $0xc] sm:$0xff]
        %v1415 = vstv %s1268
        %v1416 = vmul.f32 %v1413, %v1415
        %v1417 = vmul.f32 %v1414, %v1415
        %v1418 = vadd.f32 %v1411, %v1416
        %v1419 = vadd.f32 %v1412, %v1417
        %v1420 = vld [vmem:[%s291 + $0x5] sm:$0xff]
        %v1421 = vld [vmem:[%s291 + $0xd] sm:$0xff]
        %v1422 = vstv %s1275
        %v1423 = vmul.f32 %v1420, %v1422
        %v1424 = vmul.f32 %v1421, %v1422
        %v1425 = vadd.f32 %v1418, %v1423
        %v1426 = vadd.f32 %v1419, %v1424
        %v1427 = vld [vmem:[%s291 + $0x6] sm:$0xff]
        %v1428 = vld [vmem:[%s291 + $0xe] sm:$0xff]
        %v1429 = vstv %s1282
        %v1430 = vmul.f32 %v1427, %v1429
        %v1431 = vmul.f32 %v1428, %v1429
        %v1432 = vadd.f32 %v1425, %v1430
        %v1433 = vadd.f32 %v1426, %v1431
        %v1434 = vld [vmem:[#allocation2] sm:$0xff]
        %v1435 = vld [vmem:[#allocation2 + $0x8] sm:$0xff]
        %v1436 = vstv %s1241
        %v1437 = vmul.f32 %v1434, %v1436
        %v1438 = vmul.f32 %v1435, %v1436
        %v1439 = vadd.f32 %v1432, %v1437
        %v1440 = vadd.f32 %v1433, %v1438
        %v1441 = vld [vmem:[#allocation2 + $0x1] sm:$0xff]
        %v1442 = vld [vmem:[#allocation2 + $0x9] sm:$0xff]
        %v1443 = vstv %s1248
        %v1444 = vmul.f32 %v1441, %v1443
        %v1445 = vmul.f32 %v1442, %v1443
        %v1446 = vadd.f32 %v1439, %v1444
        %v1447 = vadd.f32 %v1440, %v1445
        %v1448 = vld [vmem:[#allocation2 + $0x2] sm:$0xff]
        %v1449 = vld [vmem:[#allocation2 + $0xa] sm:$0xff]
        %v1450 = vstv %s1255
        %v1451 = vmul.f32 %v1448, %v1450
        %v1452 = vmul.f32 %v1449, %v1450
        %v1453 = vadd.f32 %v1446, %v1451
        %v1454 = vadd.f32 %v1447, %v1452
        %v1455 = vld [vmem:[#allocation2 + $0x3] sm:$0xff]
        %v1456 = vld [vmem:[#allocation2 + $0xb] sm:$0xff]
        %v1457 = vstv %s1262
        %v1458 = vmul.f32 %v1455, %v1457
        %v1459 = vmul.f32 %v1456, %v1457
        %v1460 = vadd.f32 %v1453, %v1458
        %v1461 = vadd.f32 %v1454, %v1459
        %v1462 = vld [vmem:[#allocation2 + $0x4] sm:$0xff]
        %v1463 = vld [vmem:[#allocation2 + $0xc] sm:$0xff]
        %v1464 = vstv %s1269
        %v1465 = vmul.f32 %v1462, %v1464
        %v1466 = vmul.f32 %v1463, %v1464
        %v1467 = vadd.f32 %v1460, %v1465
        %v1468 = vadd.f32 %v1461, %v1466
        %v1469 = vld [vmem:[#allocation2 + $0x5] sm:$0xff]
        %v1470 = vld [vmem:[#allocation2 + $0xd] sm:$0xff]
        %v1471 = vstv %s1276
        %v1472 = vmul.f32 %v1469, %v1471
        %v1473 = vmul.f32 %v1470, %v1471
        %v1474 = vadd.f32 %v1467, %v1472
        %v1475 = vadd.f32 %v1468, %v1473
        %v1476 = vld [vmem:[#allocation2 + $0x6] sm:$0xff]
        %v1477 = vld [vmem:[#allocation2 + $0xe] sm:$0xff]
        %v1478 = vstv %s1283
        %v1479 = vmul.f32 %v1476, %v1478
        %v1480 = vmul.f32 %v1477, %v1478
        %v1481 = vadd.f32 %v1474, %v1479
        %v1482 = vadd.f32 %v1475, %v1480
        %v1483 = vld [vmem:[%s301] sm:$0xff]
        %v1484 = vld [vmem:[%s301 + $0x8] sm:$0xff]
        %v1485 = vstv %s1242
        %v1486 = vmul.f32 %v1483, %v1485
        %v1487 = vmul.f32 %v1484, %v1485
        %v1488 = vadd.f32 %v1481, %v1486
        %v1489 = vadd.f32 %v1482, %v1487
        %v1490 = vld [vmem:[%s301 + $0x1] sm:$0xff]
        %v1491 = vld [vmem:[%s301 + $0x9] sm:$0xff]
        %v1492 = vstv %s1249
        %v1493 = vmul.f32 %v1490, %v1492
        %v1494 = vmul.f32 %v1491, %v1492
        %v1495 = vadd.f32 %v1488, %v1493
        %v1496 = vadd.f32 %v1489, %v1494
        %v1497 = vld [vmem:[%s301 + $0x2] sm:$0xff]
        %v1498 = vld [vmem:[%s301 + $0xa] sm:$0xff]
        %v1499 = vstv %s1256
        %v1500 = vmul.f32 %v1497, %v1499
        %v1501 = vmul.f32 %v1498, %v1499
        %v1502 = vadd.f32 %v1495, %v1500
        %v1503 = vadd.f32 %v1496, %v1501
        %v1504 = vld [vmem:[%s301 + $0x3] sm:$0xff]
        %v1505 = vld [vmem:[%s301 + $0xb] sm:$0xff]
        %v1506 = vstv %s1263
        %v1507 = vmul.f32 %v1504, %v1506
        %v1508 = vmul.f32 %v1505, %v1506
        %v1509 = vadd.f32 %v1502, %v1507
        %v1510 = vadd.f32 %v1503, %v1508
        %v1511 = vld [vmem:[%s301 + $0x4] sm:$0xff]
        %v1512 = vld [vmem:[%s301 + $0xc] sm:$0xff]
        %v1513 = vstv %s1270
        %v1514 = vmul.f32 %v1511, %v1513
        %v1515 = vmul.f32 %v1512, %v1513
        %v1516 = vadd.f32 %v1509, %v1514
        %v1517 = vadd.f32 %v1510, %v1515
        %v1518 = vld [vmem:[%s301 + $0x5] sm:$0xff]
        %v1519 = vld [vmem:[%s301 + $0xd] sm:$0xff]
        %v1520 = vstv %s1277
        %v1521 = vmul.f32 %v1518, %v1520
        %v1522 = vmul.f32 %v1519, %v1520
        %v1523 = vadd.f32 %v1516, %v1521
        %v1524 = vadd.f32 %v1517, %v1522
        %v1525 = vld [vmem:[%s301 + $0x6] sm:$0xff]
        %v1526 = vld [vmem:[%s301 + $0xe] sm:$0xff]
        %v1527 = vstv %s1284
        %v1528 = vmul.f32 %v1525, %v1527
        %v1529 = vmul.f32 %v1526, %v1527
        %v1530 = vadd.f32 %v1523, %v1528
        %v1531 = vadd.f32 %v1524, %v1529
        %v1532 = vld [vmem:[%s311] sm:$0xff]
        %v1533 = vld [vmem:[%s311 + $0x8] sm:$0xff]
        %v1534 = vstv %s1243
        %v1535 = vmul.f32 %v1532, %v1534
        %v1536 = vmul.f32 %v1533, %v1534
        %v1537 = vadd.f32 %v1530, %v1535
        %v1538 = vadd.f32 %v1531, %v1536
        %v1539 = vld [vmem:[%s311 + $0x1] sm:$0xff]
        %v1540 = vld [vmem:[%s311 + $0x9] sm:$0xff]
        %v1541 = vstv %s1250
        %v1542 = vmul.f32 %v1539, %v1541
        %v1543 = vmul.f32 %v1540, %v1541
        %v1544 = vadd.f32 %v1537, %v1542
        %v1545 = vadd.f32 %v1538, %v1543
        %v1546 = vld [vmem:[%s311 + $0x2] sm:$0xff]
        %v1547 = vld [vmem:[%s311 + $0xa] sm:$0xff]
        %v1548 = vstv %s1257
        %v1549 = vmul.f32 %v1546, %v1548
        %v1550 = vmul.f32 %v1547, %v1548
        %v1551 = vadd.f32 %v1544, %v1549
        %v1552 = vadd.f32 %v1545, %v1550
        %v1553 = vld [vmem:[%s311 + $0x3] sm:$0xff]
        %v1554 = vld [vmem:[%s311 + $0xb] sm:$0xff]
        %v1555 = vstv %s1264
        %v1556 = vmul.f32 %v1553, %v1555
        %v1557 = vmul.f32 %v1554, %v1555
        %v1558 = vadd.f32 %v1551, %v1556
        %v1559 = vadd.f32 %v1552, %v1557
        %v1560 = vld [vmem:[%s311 + $0x4] sm:$0xff]
        %v1561 = vld [vmem:[%s311 + $0xc] sm:$0xff]
        %v1562 = vstv %s1271
        %v1563 = vmul.f32 %v1560, %v1562
        %v1564 = vmul.f32 %v1561, %v1562
        %v1565 = vadd.f32 %v1558, %v1563
        %v1566 = vadd.f32 %v1559, %v1564
        %v1567 = vld [vmem:[%s311 + $0x5] sm:$0xff]
        %v1568 = vld [vmem:[%s311 + $0xd] sm:$0xff]
        %v1569 = vstv %s1278
        %v1570 = vmul.f32 %v1567, %v1569
        %v1571 = vmul.f32 %v1568, %v1569
        %v1572 = vadd.f32 %v1565, %v1570
        %v1573 = vadd.f32 %v1566, %v1571
        %v1574 = vld [vmem:[%s311 + $0x6] sm:$0xff]
        %v1575 = vld [vmem:[%s311 + $0xe] sm:$0xff]
        %v1576 = vstv %s1285
        %v1577 = vmul.f32 %v1574, %v1576
        %v1578 = vmul.f32 %v1575, %v1576
        %v1579 = vadd.f32 %v1572, %v1577
        %v1580 = vadd.f32 %v1573, %v1578
        %v1581 = vld [vmem:[%s321] sm:$0xff]
        %v1582 = vld [vmem:[%s321 + $0x8] sm:$0xff]
        %v1583 = vstv %s1244
        %v1584 = vmul.f32 %v1581, %v1583
        %v1585 = vmul.f32 %v1582, %v1583
        %v1586 = vadd.f32 %v1579, %v1584
        %v1587 = vadd.f32 %v1580, %v1585
        %v1588 = vld [vmem:[%s321 + $0x1] sm:$0xff]
        %v1589 = vld [vmem:[%s321 + $0x9] sm:$0xff]
        %v1590 = vstv %s1251
        %v1591 = vmul.f32 %v1588, %v1590
        %v1592 = vmul.f32 %v1589, %v1590
        %v1593 = vadd.f32 %v1586, %v1591
        %v1594 = vadd.f32 %v1587, %v1592
        %v1595 = vld [vmem:[%s321 + $0x2] sm:$0xff]
        %v1596 = vld [vmem:[%s321 + $0xa] sm:$0xff]
        %v1597 = vstv %s1258
        %v1598 = vmul.f32 %v1595, %v1597
        %v1599 = vmul.f32 %v1596, %v1597
        %v1600 = vadd.f32 %v1593, %v1598
        %v1601 = vadd.f32 %v1594, %v1599
        %v1602 = vld [vmem:[%s321 + $0x3] sm:$0xff]
        %v1603 = vld [vmem:[%s321 + $0xb] sm:$0xff]
        %v1604 = vstv %s1265
        %v1605 = vmul.f32 %v1602, %v1604
        %v1606 = vmul.f32 %v1603, %v1604
        %v1607 = vadd.f32 %v1600, %v1605
        %v1608 = vadd.f32 %v1601, %v1606
        %v1609 = vld [vmem:[%s321 + $0x4] sm:$0xff]
        %v1610 = vld [vmem:[%s321 + $0xc] sm:$0xff]
        %v1611 = vstv %s1272
        %v1612 = vmul.f32 %v1609, %v1611
        %v1613 = vmul.f32 %v1610, %v1611
        %v1614 = vadd.f32 %v1607, %v1612
        %v1615 = vadd.f32 %v1608, %v1613
        %v1616 = vld [vmem:[%s321 + $0x5] sm:$0xff]
        %v1617 = vld [vmem:[%s321 + $0xd] sm:$0xff]
        %v1618 = vstv %s1279
        %v1619 = vmul.f32 %v1616, %v1618
        %v1620 = vmul.f32 %v1617, %v1618
        %v1621 = vadd.f32 %v1614, %v1619
        %v1622 = vadd.f32 %v1615, %v1620
        %v1623 = vld [vmem:[%s321 + $0x6] sm:$0xff]
        %v1624 = vld [vmem:[%s321 + $0xe] sm:$0xff]
        %v1625 = vstv %s1286
        %v1626 = vmul.f32 %v1623, %v1625
        %v1627 = vmul.f32 %v1624, %v1625
        %v1628 = vadd.f32 %v1621, %v1626
        %v1629 = vadd.f32 %v1622, %v1627
        %s1630 = scalar_lea.vmem [#allocation4], 32
        %1631 = vst [vmem:[%s1630] sm:$0xff] %v1628
        %1632 = vst [vmem:[%s1630 + $0x8] sm:$0xff] %v1629
        %s1633 = scalar_lea.vmem %s217, 48 [#allocation5]
        %v1634 = vld [vmem:[%s1633] sm:$0xff]
        %v1635 = vld [vmem:[%s1633 + $0x8] sm:$0xff]
        %1636 = vst.msk [vmem:[#allocation2 + $0x3] sm:$0xff] %vm260, %v1634
        %1637 = vst.msk [vmem:[#allocation2 + $0xb] sm:$0xff] %vm260, %v1635
        %v1638 = vld [vmem:[#allocation2] sm:$0xff]
        %v1639 = vld [vmem:[#allocation2 + $0x8] sm:$0xff]
        %v1640 = vld [vmem:[#allocation2 + $0x10] sm:$0xff]
        %1641 = vrot.lane.b32.xlu0 %v1638, 3
        %v1642 = vpop.permute.xlu0 %1641
        %1643 = vrot.lane.b32.xlu0 %v1639, 3
        %v1644 = vpop.permute.xlu0 %1643
        %1645 = vrot.lane.b32.xlu0 %v1640, 3
        %v1646 = vpop.permute.xlu0 %1645
        %1647 = vst [vmem:[#allocation3] sm:$0xff] %v1642
        %1648 = vst [vmem:[#allocation3 + $0x8] sm:$0xff] %v1644
        %1649 = vst [vmem:[#allocation3 + $0x10] sm:$0xff] %v1646
        %1650 = vrot.lane.b32.xlu0 %v1638, 2
        %v1651 = vpop.permute.xlu0 %1650
        %1652 = vrot.lane.b32.xlu0 %v1639, 2
        %v1653 = vpop.permute.xlu0 %1652
        %1654 = vrot.lane.b32.xlu0 %v1640, 2
        %v1655 = vpop.permute.xlu0 %1654
        %1656 = vst [vmem:[%s281] sm:$0xff] %v1651
        %1657 = vst [vmem:[%s281 + $0x8] sm:$0xff] %v1653
        %1658 = vst [vmem:[%s281 + $0x10] sm:$0xff] %v1655
        %1659 = vrot.lane.b32.xlu0 %v1638, 1
        %v1660 = vpop.permute.xlu0 %1659
        %1661 = vrot.lane.b32.xlu0 %v1639, 1
        %v1662 = vpop.permute.xlu0 %1661
        %1663 = vrot.lane.b32.xlu0 %v1640, 1
        %v1664 = vpop.permute.xlu0 %1663
        %1665 = vst [vmem:[%s291] sm:$0xff] %v1660
        %1666 = vst [vmem:[%s291 + $0x8] sm:$0xff] %v1662
        %1667 = vst [vmem:[%s291 + $0x10] sm:$0xff] %v1664
        %1668 = vrot.lane.b32.xlu0 %v1638, 127
        %v1669 = vpop.permute.xlu0 %1668
        %1670 = vrot.lane.b32.xlu0 %v1639, 127
        %v1671 = vpop.permute.xlu0 %1670
        %1672 = vrot.lane.b32.xlu0 %v1640, 127
        %v1673 = vpop.permute.xlu0 %1672
        %1674 = vst [vmem:[%s301] sm:$0xff] %v1669
        %1675 = vst [vmem:[%s301 + $0x8] sm:$0xff] %v1671
        %1676 = vst [vmem:[%s301 + $0x10] sm:$0xff] %v1673
        %1677 = vrot.lane.b32.xlu0 %v1638, 126
        %v1678 = vpop.permute.xlu0 %1677
        %1679 = vrot.lane.b32.xlu0 %v1639, 126
        %v1680 = vpop.permute.xlu0 %1679
        %1681 = vrot.lane.b32.xlu0 %v1640, 126
        %v1682 = vpop.permute.xlu0 %1681
        %1683 = vst [vmem:[%s311] sm:$0xff] %v1678
        %1684 = vst [vmem:[%s311 + $0x8] sm:$0xff] %v1680
        %1685 = vst [vmem:[%s311 + $0x10] sm:$0xff] %v1682
        %1686 = vrot.lane.b32.xlu0 %v1638, 125
        %v1687 = vpop.permute.xlu0 %1686
        %1688 = vrot.lane.b32.xlu0 %v1639, 125
        %v1689 = vpop.permute.xlu0 %1688
        %1690 = vrot.lane.b32.xlu0 %v1640, 125
        %v1691 = vpop.permute.xlu0 %1690
        %1692 = vst [vmem:[%s321] sm:$0xff] %v1687
        %1693 = vst [vmem:[%s321 + $0x8] sm:$0xff] %v1689
        %1694 = vst [vmem:[%s321 + $0x10] sm:$0xff] %v1691
        %s1695 = sld [smem:[#allocation9 + $0x180]]
        %s1696 = sld [smem:[#allocation9 + $0x181]]
        %s1697 = sld [smem:[#allocation9 + $0x182]]
        %s1698 = sld [smem:[#allocation9 + $0x183]]
        %s1699 = sld [smem:[#allocation9 + $0x184]]
        %s1700 = sld [smem:[#allocation9 + $0x185]]
        %s1701 = sld [smem:[#allocation9 + $0x186]]
        %s1702 = sld [smem:[#allocation9 + $0x187]]
        %s1703 = sld [smem:[#allocation9 + $0x188]]
        %s1704 = sld [smem:[#allocation9 + $0x189]]
        %s1705 = sld [smem:[#allocation9 + $0x18a]]
        %s1706 = sld [smem:[#allocation9 + $0x18b]]
        %s1707 = sld [smem:[#allocation9 + $0x18c]]
        %s1708 = sld [smem:[#allocation9 + $0x18d]]
        %s1709 = sld [smem:[#allocation9 + $0x18e]]
        %s1710 = sld [smem:[#allocation9 + $0x18f]]
        %s1711 = sld [smem:[#allocation9 + $0x190]]
        %s1712 = sld [smem:[#allocation9 + $0x191]]
        %s1713 = sld [smem:[#allocation9 + $0x192]]
        %s1714 = sld [smem:[#allocation9 + $0x193]]
        %s1715 = sld [smem:[#allocation9 + $0x194]]
        %s1716 = sld [smem:[#allocation9 + $0x195]]
        %s1717 = sld [smem:[#allocation9 + $0x196]]
        %s1718 = sld [smem:[#allocation9 + $0x197]]
        %s1719 = sld [smem:[#allocation9 + $0x198]]
        %s1720 = sld [smem:[#allocation9 + $0x199]]
        %s1721 = sld [smem:[#allocation9 + $0x19a]]
        %s1722 = sld [smem:[#allocation9 + $0x19b]]
        %s1723 = sld [smem:[#allocation9 + $0x19c]]
        %s1724 = sld [smem:[#allocation9 + $0x19d]]
        %s1725 = sld [smem:[#allocation9 + $0x19e]]
        %s1726 = sld [smem:[#allocation9 + $0x19f]]
        %s1727 = sld [smem:[#allocation9 + $0x1a0]]
        %s1728 = sld [smem:[#allocation9 + $0x1a1]]
        %s1729 = sld [smem:[#allocation9 + $0x1a2]]
        %s1730 = sld [smem:[#allocation9 + $0x1a3]]
        %s1731 = sld [smem:[#allocation9 + $0x1a4]]
        %s1732 = sld [smem:[#allocation9 + $0x1a5]]
        %s1733 = sld [smem:[#allocation9 + $0x1a6]]
        %s1734 = sld [smem:[#allocation9 + $0x1a7]]
        %s1735 = sld [smem:[#allocation9 + $0x1a8]]
        %s1736 = sld [smem:[#allocation9 + $0x1a9]]
        %s1737 = sld [smem:[#allocation9 + $0x1aa]]
        %s1738 = sld [smem:[#allocation9 + $0x1ab]]
        %s1739 = sld [smem:[#allocation9 + $0x1ac]]
        %s1740 = sld [smem:[#allocation9 + $0x1ad]]
        %s1741 = sld [smem:[#allocation9 + $0x1ae]]
        %s1742 = sld [smem:[#allocation9 + $0x1af]]
        %s1743 = sld [smem:[#allocation9 + $0x1b0]]
        %v1744 = vld [vmem:[#allocation3] sm:$0xff]
        %v1745 = vld [vmem:[#allocation3 + $0x8] sm:$0xff]
        %v1746 = vstv %s1695
        %v1747 = vmul.f32 %v1744, %v1746
        %v1748 = vmul.f32 %v1745, %v1746
        %v1749 = vadd.f32 %v1747, 0.0
        %v1750 = vadd.f32 %v1748, 0.0
        %v1751 = vld [vmem:[#allocation3 + $0x1] sm:$0xff]
        %v1752 = vld [vmem:[#allocation3 + $0x9] sm:$0xff]
        %v1753 = vstv %s1702
        %v1754 = vmul.f32 %v1751, %v1753
        %v1755 = vmul.f32 %v1752, %v1753
        %v1756 = vadd.f32 %v1749, %v1754
        %v1757 = vadd.f32 %v1750, %v1755
        %v1758 = vld [vmem:[#allocation3 + $0x2] sm:$0xff]
        %v1759 = vld [vmem:[#allocation3 + $0xa] sm:$0xff]
        %v1760 = vstv %s1709
        %v1761 = vmul.f32 %v1758, %v1760
        %v1762 = vmul.f32 %v1759, %v1760
        %v1763 = vadd.f32 %v1756, %v1761
        %v1764 = vadd.f32 %v1757, %v1762
        %v1765 = vld [vmem:[#allocation3 + $0x3] sm:$0xff]
        %v1766 = vld [vmem:[#allocation3 + $0xb] sm:$0xff]
        %v1767 = vstv %s1716
        %v1768 = vmul.f32 %v1765, %v1767
        %v1769 = vmul.f32 %v1766, %v1767
        %v1770 = vadd.f32 %v1763, %v1768
        %v1771 = vadd.f32 %v1764, %v1769
        %v1772 = vld [vmem:[#allocation3 + $0x4] sm:$0xff]
        %v1773 = vld [vmem:[#allocation3 + $0xc] sm:$0xff]
        %v1774 = vstv %s1723
        %v1775 = vmul.f32 %v1772, %v1774
        %v1776 = vmul.f32 %v1773, %v1774
        %v1777 = vadd.f32 %v1770, %v1775
        %v1778 = vadd.f32 %v1771, %v1776
        %v1779 = vld [vmem:[#allocation3 + $0x5] sm:$0xff]
        %v1780 = vld [vmem:[#allocation3 + $0xd] sm:$0xff]
        %v1781 = vstv %s1730
        %v1782 = vmul.f32 %v1779, %v1781
        %v1783 = vmul.f32 %v1780, %v1781
        %v1784 = vadd.f32 %v1777, %v1782
        %v1785 = vadd.f32 %v1778, %v1783
        %v1786 = vld [vmem:[#allocation3 + $0x6] sm:$0xff]
        %v1787 = vld [vmem:[#allocation3 + $0xe] sm:$0xff]
        %v1788 = vstv %s1737
        %v1789 = vmul.f32 %v1786, %v1788
        %v1790 = vmul.f32 %v1787, %v1788
        %v1791 = vadd.f32 %v1784, %v1789
        %v1792 = vadd.f32 %v1785, %v1790
        %v1793 = vld [vmem:[%s281] sm:$0xff]
        %v1794 = vld [vmem:[%s281 + $0x8] sm:$0xff]
        %v1795 = vstv %s1696
        %v1796 = vmul.f32 %v1793, %v1795
        %v1797 = vmul.f32 %v1794, %v1795
        %v1798 = vadd.f32 %v1791, %v1796
        %v1799 = vadd.f32 %v1792, %v1797
        %v1800 = vld [vmem:[%s281 + $0x1] sm:$0xff]
        %v1801 = vld [vmem:[%s281 + $0x9] sm:$0xff]
        %v1802 = vstv %s1703
        %v1803 = vmul.f32 %v1800, %v1802
        %v1804 = vmul.f32 %v1801, %v1802
        %v1805 = vadd.f32 %v1798, %v1803
        %v1806 = vadd.f32 %v1799, %v1804
        %v1807 = vld [vmem:[%s281 + $0x2] sm:$0xff]
        %v1808 = vld [vmem:[%s281 + $0xa] sm:$0xff]
        %v1809 = vstv %s1710
        %v1810 = vmul.f32 %v1807, %v1809
        %v1811 = vmul.f32 %v1808, %v1809
        %v1812 = vadd.f32 %v1805, %v1810
        %v1813 = vadd.f32 %v1806, %v1811
        %v1814 = vld [vmem:[%s281 + $0x3] sm:$0xff]
        %v1815 = vld [vmem:[%s281 + $0xb] sm:$0xff]
        %v1816 = vstv %s1717
        %v1817 = vmul.f32 %v1814, %v1816
        %v1818 = vmul.f32 %v1815, %v1816
        %v1819 = vadd.f32 %v1812, %v1817
        %v1820 = vadd.f32 %v1813, %v1818
        %v1821 = vld [vmem:[%s281 + $0x4] sm:$0xff]
        %v1822 = vld [vmem:[%s281 + $0xc] sm:$0xff]
        %v1823 = vstv %s1724
        %v1824 = vmul.f32 %v1821, %v1823
        %v1825 = vmul.f32 %v1822, %v1823
        %v1826 = vadd.f32 %v1819, %v1824
        %v1827 = vadd.f32 %v1820, %v1825
        %v1828 = vld [vmem:[%s281 + $0x5] sm:$0xff]
        %v1829 = vld [vmem:[%s281 + $0xd] sm:$0xff]
        %v1830 = vstv %s1731
        %v1831 = vmul.f32 %v1828, %v1830
        %v1832 = vmul.f32 %v1829, %v1830
        %v1833 = vadd.f32 %v1826, %v1831
        %v1834 = vadd.f32 %v1827, %v1832
        %v1835 = vld [vmem:[%s281 + $0x6] sm:$0xff]
        %v1836 = vld [vmem:[%s281 + $0xe] sm:$0xff]
        %v1837 = vstv %s1738
        %v1838 = vmul.f32 %v1835, %v1837
        %v1839 = vmul.f32 %v1836, %v1837
        %v1840 = vadd.f32 %v1833, %v1838
        %v1841 = vadd.f32 %v1834, %v1839
        %v1842 = vld [vmem:[%s291] sm:$0xff]
        %v1843 = vld [vmem:[%s291 + $0x8] sm:$0xff]
        %v1844 = vstv %s1697
        %v1845 = vmul.f32 %v1842, %v1844
        %v1846 = vmul.f32 %v1843, %v1844
        %v1847 = vadd.f32 %v1840, %v1845
        %v1848 = vadd.f32 %v1841, %v1846
        %v1849 = vld [vmem:[%s291 + $0x1] sm:$0xff]
        %v1850 = vld [vmem:[%s291 + $0x9] sm:$0xff]
        %v1851 = vstv %s1704
        %v1852 = vmul.f32 %v1849, %v1851
        %v1853 = vmul.f32 %v1850, %v1851
        %v1854 = vadd.f32 %v1847, %v1852
        %v1855 = vadd.f32 %v1848, %v1853
        %v1856 = vld [vmem:[%s291 + $0x2] sm:$0xff]
        %v1857 = vld [vmem:[%s291 + $0xa] sm:$0xff]
        %v1858 = vstv %s1711
        %v1859 = vmul.f32 %v1856, %v1858
        %v1860 = vmul.f32 %v1857, %v1858
        %v1861 = vadd.f32 %v1854, %v1859
        %v1862 = vadd.f32 %v1855, %v1860
        %v1863 = vld [vmem:[%s291 + $0x3] sm:$0xff]
        %v1864 = vld [vmem:[%s291 + $0xb] sm:$0xff]
        %v1865 = vstv %s1718
        %v1866 = vmul.f32 %v1863, %v1865
        %v1867 = vmul.f32 %v1864, %v1865
        %v1868 = vadd.f32 %v1861, %v1866
        %v1869 = vadd.f32 %v1862, %v1867
        %v1870 = vld [vmem:[%s291 + $0x4] sm:$0xff]
        %v1871 = vld [vmem:[%s291 + $0xc] sm:$0xff]
        %v1872 = vstv %s1725
        %v1873 = vmul.f32 %v1870, %v1872
        %v1874 = vmul.f32 %v1871, %v1872
        %v1875 = vadd.f32 %v1868, %v1873
        %v1876 = vadd.f32 %v1869, %v1874
        %v1877 = vld [vmem:[%s291 + $0x5] sm:$0xff]
        %v1878 = vld [vmem:[%s291 + $0xd] sm:$0xff]
        %v1879 = vstv %s1732
        %v1880 = vmul.f32 %v1877, %v1879
        %v1881 = vmul.f32 %v1878, %v1879
        %v1882 = vadd.f32 %v1875, %v1880
        %v1883 = vadd.f32 %v1876, %v1881
        %v1884 = vld [vmem:[%s291 + $0x6] sm:$0xff]
        %v1885 = vld [vmem:[%s291 + $0xe] sm:$0xff]
        %v1886 = vstv %s1739
        %v1887 = vmul.f32 %v1884, %v1886
        %v1888 = vmul.f32 %v1885, %v1886
        %v1889 = vadd.f32 %v1882, %v1887
        %v1890 = vadd.f32 %v1883, %v1888
        %v1891 = vld [vmem:[#allocation2] sm:$0xff]
        %v1892 = vld [vmem:[#allocation2 + $0x8] sm:$0xff]
        %v1893 = vstv %s1698
        %v1894 = vmul.f32 %v1891, %v1893
        %v1895 = vmul.f32 %v1892, %v1893
        %v1896 = vadd.f32 %v1889, %v1894
        %v1897 = vadd.f32 %v1890, %v1895
        %v1898 = vld [vmem:[#allocation2 + $0x1] sm:$0xff]
        %v1899 = vld [vmem:[#allocation2 + $0x9] sm:$0xff]
        %v1900 = vstv %s1705
        %v1901 = vmul.f32 %v1898, %v1900
        %v1902 = vmul.f32 %v1899, %v1900
        %v1903 = vadd.f32 %v1896, %v1901
        %v1904 = vadd.f32 %v1897, %v1902
        %v1905 = vld [vmem:[#allocation2 + $0x2] sm:$0xff]
        %v1906 = vld [vmem:[#allocation2 + $0xa] sm:$0xff]
        %v1907 = vstv %s1712
        %v1908 = vmul.f32 %v1905, %v1907
        %v1909 = vmul.f32 %v1906, %v1907
        %v1910 = vadd.f32 %v1903, %v1908
        %v1911 = vadd.f32 %v1904, %v1909
        %v1912 = vld [vmem:[#allocation2 + $0x3] sm:$0xff]
        %v1913 = vld [vmem:[#allocation2 + $0xb] sm:$0xff]
        %v1914 = vstv %s1719
        %v1915 = vmul.f32 %v1912, %v1914
        %v1916 = vmul.f32 %v1913, %v1914
        %v1917 = vadd.f32 %v1910, %v1915
        %v1918 = vadd.f32 %v1911, %v1916
        %v1919 = vld [vmem:[#allocation2 + $0x4] sm:$0xff]
        %v1920 = vld [vmem:[#allocation2 + $0xc] sm:$0xff]
        %v1921 = vstv %s1726
        %v1922 = vmul.f32 %v1919, %v1921
        %v1923 = vmul.f32 %v1920, %v1921
        %v1924 = vadd.f32 %v1917, %v1922
        %v1925 = vadd.f32 %v1918, %v1923
        %v1926 = vld [vmem:[#allocation2 + $0x5] sm:$0xff]
        %v1927 = vld [vmem:[#allocation2 + $0xd] sm:$0xff]
        %v1928 = vstv %s1733
        %v1929 = vmul.f32 %v1926, %v1928
        %v1930 = vmul.f32 %v1927, %v1928
        %v1931 = vadd.f32 %v1924, %v1929
        %v1932 = vadd.f32 %v1925, %v1930
        %v1933 = vld [vmem:[#allocation2 + $0x6] sm:$0xff]
        %v1934 = vld [vmem:[#allocation2 + $0xe] sm:$0xff]
        %v1935 = vstv %s1740
        %v1936 = vmul.f32 %v1933, %v1935
        %v1937 = vmul.f32 %v1934, %v1935
        %v1938 = vadd.f32 %v1931, %v1936
        %v1939 = vadd.f32 %v1932, %v1937
        %v1940 = vld [vmem:[%s301] sm:$0xff]
        %v1941 = vld [vmem:[%s301 + $0x8] sm:$0xff]
        %v1942 = vstv %s1699
        %v1943 = vmul.f32 %v1940, %v1942
        %v1944 = vmul.f32 %v1941, %v1942
        %v1945 = vadd.f32 %v1938, %v1943
        %v1946 = vadd.f32 %v1939, %v1944
        %v1947 = vld [vmem:[%s301 + $0x1] sm:$0xff]
        %v1948 = vld [vmem:[%s301 + $0x9] sm:$0xff]
        %v1949 = vstv %s1706
        %v1950 = vmul.f32 %v1947, %v1949
        %v1951 = vmul.f32 %v1948, %v1949
        %v1952 = vadd.f32 %v1945, %v1950
        %v1953 = vadd.f32 %v1946, %v1951
        %v1954 = vld [vmem:[%s301 + $0x2] sm:$0xff]
        %v1955 = vld [vmem:[%s301 + $0xa] sm:$0xff]
        %v1956 = vstv %s1713
        %v1957 = vmul.f32 %v1954, %v1956
        %v1958 = vmul.f32 %v1955, %v1956
        %v1959 = vadd.f32 %v1952, %v1957
        %v1960 = vadd.f32 %v1953, %v1958
        %v1961 = vld [vmem:[%s301 + $0x3] sm:$0xff]
        %v1962 = vld [vmem:[%s301 + $0xb] sm:$0xff]
        %v1963 = vstv %s1720
        %v1964 = vmul.f32 %v1961, %v1963
        %v1965 = vmul.f32 %v1962, %v1963
        %v1966 = vadd.f32 %v1959, %v1964
        %v1967 = vadd.f32 %v1960, %v1965
        %v1968 = vld [vmem:[%s301 + $0x4] sm:$0xff]
        %v1969 = vld [vmem:[%s301 + $0xc] sm:$0xff]
        %v1970 = vstv %s1727
        %v1971 = vmul.f32 %v1968, %v1970
        %v1972 = vmul.f32 %v1969, %v1970
        %v1973 = vadd.f32 %v1966, %v1971
        %v1974 = vadd.f32 %v1967, %v1972
        %v1975 = vld [vmem:[%s301 + $0x5] sm:$0xff]
        %v1976 = vld [vmem:[%s301 + $0xd] sm:$0xff]
        %v1977 = vstv %s1734
        %v1978 = vmul.f32 %v1975, %v1977
        %v1979 = vmul.f32 %v1976, %v1977
        %v1980 = vadd.f32 %v1973, %v1978
        %v1981 = vadd.f32 %v1974, %v1979
        %v1982 = vld [vmem:[%s301 + $0x6] sm:$0xff]
        %v1983 = vld [vmem:[%s301 + $0xe] sm:$0xff]
        %v1984 = vstv %s1741
        %v1985 = vmul.f32 %v1982, %v1984
        %v1986 = vmul.f32 %v1983, %v1984
        %v1987 = vadd.f32 %v1980, %v1985
        %v1988 = vadd.f32 %v1981, %v1986
        %v1989 = vld [vmem:[%s311] sm:$0xff]
        %v1990 = vld [vmem:[%s311 + $0x8] sm:$0xff]
        %v1991 = vstv %s1700
        %v1992 = vmul.f32 %v1989, %v1991
        %v1993 = vmul.f32 %v1990, %v1991
        %v1994 = vadd.f32 %v1987, %v1992
        %v1995 = vadd.f32 %v1988, %v1993
        %v1996 = vld [vmem:[%s311 + $0x1] sm:$0xff]
        %v1997 = vld [vmem:[%s311 + $0x9] sm:$0xff]
        %v1998 = vstv %s1707
        %v1999 = vmul.f32 %v1996, %v1998
        %v2000 = vmul.f32 %v1997, %v1998
        %v2001 = vadd.f32 %v1994, %v1999
        %v2002 = vadd.f32 %v1995, %v2000
        %v2003 = vld [vmem:[%s311 + $0x2] sm:$0xff]
        %v2004 = vld [vmem:[%s311 + $0xa] sm:$0xff]
        %v2005 = vstv %s1714
        %v2006 = vmul.f32 %v2003, %v2005
        %v2007 = vmul.f32 %v2004, %v2005
        %v2008 = vadd.f32 %v2001, %v2006
        %v2009 = vadd.f32 %v2002, %v2007
        %v2010 = vld [vmem:[%s311 + $0x3] sm:$0xff]
        %v2011 = vld [vmem:[%s311 + $0xb] sm:$0xff]
        %v2012 = vstv %s1721
        %v2013 = vmul.f32 %v2010, %v2012
        %v2014 = vmul.f32 %v2011, %v2012
        %v2015 = vadd.f32 %v2008, %v2013
        %v2016 = vadd.f32 %v2009, %v2014
        %v2017 = vld [vmem:[%s311 + $0x4] sm:$0xff]
        %v2018 = vld [vmem:[%s311 + $0xc] sm:$0xff]
        %v2019 = vstv %s1728
        %v2020 = vmul.f32 %v2017, %v2019
        %v2021 = vmul.f32 %v2018, %v2019
        %v2022 = vadd.f32 %v2015, %v2020
        %v2023 = vadd.f32 %v2016, %v2021
        %v2024 = vld [vmem:[%s311 + $0x5] sm:$0xff]
        %v2025 = vld [vmem:[%s311 + $0xd] sm:$0xff]
        %v2026 = vstv %s1735
        %v2027 = vmul.f32 %v2024, %v2026
        %v2028 = vmul.f32 %v2025, %v2026
        %v2029 = vadd.f32 %v2022, %v2027
        %v2030 = vadd.f32 %v2023, %v2028
        %v2031 = vld [vmem:[%s311 + $0x6] sm:$0xff]
        %v2032 = vld [vmem:[%s311 + $0xe] sm:$0xff]
        %v2033 = vstv %s1742
        %v2034 = vmul.f32 %v2031, %v2033
        %v2035 = vmul.f32 %v2032, %v2033
        %v2036 = vadd.f32 %v2029, %v2034
        %v2037 = vadd.f32 %v2030, %v2035
        %v2038 = vld [vmem:[%s321] sm:$0xff]
        %v2039 = vld [vmem:[%s321 + $0x8] sm:$0xff]
        %v2040 = vstv %s1701
        %v2041 = vmul.f32 %v2038, %v2040
        %v2042 = vmul.f32 %v2039, %v2040
        %v2043 = vadd.f32 %v2036, %v2041
        %v2044 = vadd.f32 %v2037, %v2042
        %v2045 = vld [vmem:[%s321 + $0x1] sm:$0xff]
        %v2046 = vld [vmem:[%s321 + $0x9] sm:$0xff]
        %v2047 = vstv %s1708
        %v2048 = vmul.f32 %v2045, %v2047
        %v2049 = vmul.f32 %v2046, %v2047
        %v2050 = vadd.f32 %v2043, %v2048
        %v2051 = vadd.f32 %v2044, %v2049
        %v2052 = vld [vmem:[%s321 + $0x2] sm:$0xff]
        %v2053 = vld [vmem:[%s321 + $0xa] sm:$0xff]
        %v2054 = vstv %s1715
        %v2055 = vmul.f32 %v2052, %v2054
        %v2056 = vmul.f32 %v2053, %v2054
        %v2057 = vadd.f32 %v2050, %v2055
        %v2058 = vadd.f32 %v2051, %v2056
        %v2059 = vld [vmem:[%s321 + $0x3] sm:$0xff]
        %v2060 = vld [vmem:[%s321 + $0xb] sm:$0xff]
        %v2061 = vstv %s1722
        %v2062 = vmul.f32 %v2059, %v2061
        %v2063 = vmul.f32 %v2060, %v2061
        %v2064 = vadd.f32 %v2057, %v2062
        %v2065 = vadd.f32 %v2058, %v2063
        %v2066 = vld [vmem:[%s321 + $0x4] sm:$0xff]
        %v2067 = vld [vmem:[%s321 + $0xc] sm:$0xff]
        %v2068 = vstv %s1729
        %v2069 = vmul.f32 %v2066, %v2068
        %v2070 = vmul.f32 %v2067, %v2068
        %v2071 = vadd.f32 %v2064, %v2069
        %v2072 = vadd.f32 %v2065, %v2070
        %v2073 = vld [vmem:[%s321 + $0x5] sm:$0xff]
        %v2074 = vld [vmem:[%s321 + $0xd] sm:$0xff]
        %v2075 = vstv %s1736
        %v2076 = vmul.f32 %v2073, %v2075
        %v2077 = vmul.f32 %v2074, %v2075
        %v2078 = vadd.f32 %v2071, %v2076
        %v2079 = vadd.f32 %v2072, %v2077
        %v2080 = vld [vmem:[%s321 + $0x6] sm:$0xff]
        %v2081 = vld [vmem:[%s321 + $0xe] sm:$0xff]
        %v2082 = vstv %s1743
        %v2083 = vmul.f32 %v2080, %v2082
        %v2084 = vmul.f32 %v2081, %v2082
        %v2085 = vadd.f32 %v2078, %v2083
        %v2086 = vadd.f32 %v2079, %v2084
        %s2087 = scalar_lea.vmem [#allocation4], 48
        %2088 = vst [vmem:[%s2087] sm:$0xff] %v2085
        %2089 = vst [vmem:[%s2087 + $0x8] sm:$0xff] %v2086
        %v2090 = vld [vmem:[#allocation4] sm:$0xff]
        %v2091 = vld [vmem:[#allocation4 + $0x8] sm:$0xff]
        %v2092 = vld [vmem:[%s1173] sm:$0xff]
        %v2093 = vld [vmem:[%s1173 + $0x8] sm:$0xff]
        %v2094 = vld [vmem:[%s1630] sm:$0xff]
        %v2095 = vld [vmem:[%s1630 + $0x8] sm:$0xff]
        %v2096 = vld [vmem:[%s2087] sm:$0xff]
        %v2097 = vld [vmem:[%s2087 + $0x8] sm:$0xff]
        %s2098 = sld [smem:[#allocation10]]
        %v2099 = vstv %s2098
        %v2100 = vmul.f32 %v2090, %v2099
        %v2101 = vmul.f32 %v2091, %v2099
        %s2102 = sld [smem:[#allocation10 + $0x1]]
        %v2103 = vstv %s2102
        %v2104 = vmul.f32 %v2092, %v2103
        %v2105 = vmul.f32 %v2093, %v2103
        %v2106 = vadd.f32 %v2100, %v2104
        %v2107 = vadd.f32 %v2101, %v2105
        %s2108 = sld [smem:[#allocation10 + $0x2]]
        %v2109 = vstv %s2108
        %v2110 = vmul.f32 %v2094, %v2109
        %v2111 = vmul.f32 %v2095, %v2109
        %v2112 = vadd.f32 %v2106, %v2110
        %v2113 = vadd.f32 %v2107, %v2111
        %s2114 = sld [smem:[#allocation10 + $0x3]]
        %v2115 = vstv %s2114
        %v2116 = vmul.f32 %v2096, %v2115
        %v2117 = vmul.f32 %v2097, %v2115
        %v2118 = vadd.f32 %v2112, %v2116
        %v2119 = vadd.f32 %v2113, %v2117
        %s2120 = sld [smem:[#allocation12]]
        %v2121 = vstv %s2120
        %v2122 = vadd.f32 %v2118, %v2121
        %v2123 = vadd.f32 %v2119, %v2121
        %2124 = vst.msk [vmem:[%s254] sm:$0xff] %vm260, %v2122
        %2125 = vst.msk [vmem:[%s254 + $0x8] sm:$0xff] %vm260, %v2123
        %s2126 = sld [smem:[#allocation10 + $0x80]]
        %v2127 = vstv %s2126
        %v2128 = vmul.f32 %v2090, %v2127
        %v2129 = vmul.f32 %v2091, %v2127
        %s2130 = sld [smem:[#allocation10 + $0x81]]
        %v2131 = vstv %s2130
        %v2132 = vmul.f32 %v2092, %v2131
        %v2133 = vmul.f32 %v2093, %v2131
        %v2134 = vadd.f32 %v2128, %v2132
        %v2135 = vadd.f32 %v2129, %v2133
        %s2136 = sld [smem:[#allocation10 + $0x82]]
        %v2137 = vstv %s2136
        %v2138 = vmul.f32 %v2094, %v2137
        %v2139 = vmul.f32 %v2095, %v2137
        %v2140 = vadd.f32 %v2134, %v2138
        %v2141 = vadd.f32 %v2135, %v2139
        %s2142 = sld [smem:[#allocation10 + $0x83]]
        %v2143 = vstv %s2142
        %v2144 = vmul.f32 %v2096, %v2143
        %v2145 = vmul.f32 %v2097, %v2143
        %v2146 = vadd.f32 %v2140, %v2144
        %v2147 = vadd.f32 %v2141, %v2145
        %s2148 = sld [smem:[#allocation12 + $0x1]]
        %v2149 = vstv %s2148
        %v2150 = vadd.f32 %v2146, %v2149
        %v2151 = vadd.f32 %v2147, %v2149
        %s2152 = scalar_lea.vmem %s254, 16 [#allocation13]
        %2153 = vst.msk [vmem:[%s2152] sm:$0xff] %vm260, %v2150
        %2154 = vst.msk [vmem:[%s2152 + $0x8] sm:$0xff] %vm260, %v2151
        %s2155 = sld [smem:[#allocation10 + $0x100]]
        %v2156 = vstv %s2155
        %v2157 = vmul.f32 %v2090, %v2156
        %v2158 = vmul.f32 %v2091, %v2156
        %s2159 = sld [smem:[#allocation10 + $0x101]]
        %v2160 = vstv %s2159
        %v2161 = vmul.f32 %v2092, %v2160
        %v2162 = vmul.f32 %v2093, %v2160
        %v2163 = vadd.f32 %v2157, %v2161
        %v2164 = vadd.f32 %v2158, %v2162
        %s2165 = sld [smem:[#allocation10 + $0x102]]
        %v2166 = vstv %s2165
        %v2167 = vmul.f32 %v2094, %v2166
        %v2168 = vmul.f32 %v2095, %v2166
        %v2169 = vadd.f32 %v2163, %v2167
        %v2170 = vadd.f32 %v2164, %v2168
        %s2171 = sld [smem:[#allocation10 + $0x103]]
        %v2172 = vstv %s2171
        %v2173 = vmul.f32 %v2096, %v2172
        %v2174 = vmul.f32 %v2097, %v2172
        %v2175 = vadd.f32 %v2169, %v2173
        %v2176 = vadd.f32 %v2170, %v2174
        %s2177 = sld [smem:[#allocation12 + $0x2]]
        %v2178 = vstv %s2177
        %v2179 = vadd.f32 %v2175, %v2178
        %v2180 = vadd.f32 %v2176, %v2178
        %s2181 = scalar_lea.vmem %s254, 32 [#allocation13]
        %2182 = vst.msk [vmem:[%s2181] sm:$0xff] %vm260, %v2179
        %2183 = vst.msk [vmem:[%s2181 + $0x8] sm:$0xff] %vm260, %v2180
        %s2184 = sld [smem:[#allocation10 + $0x180]]
        %v2185 = vstv %s2184
        %v2186 = vmul.f32 %v2090, %v2185
        %v2187 = vmul.f32 %v2091, %v2185
        %s2188 = sld [smem:[#allocation10 + $0x181]]
        %v2189 = vstv %s2188
        %v2190 = vmul.f32 %v2092, %v2189
        %v2191 = vmul.f32 %v2093, %v2189
        %v2192 = vadd.f32 %v2186, %v2190
        %v2193 = vadd.f32 %v2187, %v2191
        %s2194 = sld [smem:[#allocation10 + $0x182]]
        %v2195 = vstv %s2194
        %v2196 = vmul.f32 %v2094, %v2195
        %v2197 = vmul.f32 %v2095, %v2195
        %v2198 = vadd.f32 %v2192, %v2196
        %v2199 = vadd.f32 %v2193, %v2197
        %s2200 = sld [smem:[#allocation10 + $0x183]]
        %v2201 = vstv %s2200
        %v2202 = vmul.f32 %v2096, %v2201
        %v2203 = vmul.f32 %v2097, %v2201
        %v2204 = vadd.f32 %v2198, %v2202
        %v2205 = vadd.f32 %v2199, %v2203
        %s2206 = sld [smem:[#allocation12 + $0x3]]
        %v2207 = vstv %s2206
        %v2208 = vadd.f32 %v2204, %v2207
        %v2209 = vadd.f32 %v2205, %v2207
        %s2210 = scalar_lea.vmem %s254, 48 [#allocation13]
        %2211 = vst.msk [vmem:[%s2210] sm:$0xff] %vm260, %v2208
        %2212 = vst.msk [vmem:[%s2210 + $0x8] sm:$0xff] %vm260, %v2209
        %s2213 = sld [smem:[#allocation10 + $0x200]]
        %v2214 = vstv %s2213
        %v2215 = vmul.f32 %v2090, %v2214
        %v2216 = vmul.f32 %v2091, %v2214
        %s2217 = sld [smem:[#allocation10 + $0x201]]
        %v2218 = vstv %s2217
        %v2219 = vmul.f32 %v2092, %v2218
        %v2220 = vmul.f32 %v2093, %v2218
        %v2221 = vadd.f32 %v2215, %v2219
        %v2222 = vadd.f32 %v2216, %v2220
        %s2223 = sld [smem:[#allocation10 + $0x202]]
        %v2224 = vstv %s2223
        %v2225 = vmul.f32 %v2094, %v2224
        %v2226 = vmul.f32 %v2095, %v2224
        %v2227 = vadd.f32 %v2221, %v2225
        %v2228 = vadd.f32 %v2222, %v2226
        %s2229 = sld [smem:[#allocation10 + $0x203]]
        %v2230 = vstv %s2229
        %v2231 = vmul.f32 %v2096, %v2230
        %v2232 = vmul.f32 %v2097, %v2230
        %v2233 = vadd.f32 %v2227, %v2231
        %v2234 = vadd.f32 %v2228, %v2232
        %s2235 = sld [smem:[#allocation12 + $0x4]]
        %v2236 = vstv %s2235
        %v2237 = vadd.f32 %v2233, %v2236
        %v2238 = vadd.f32 %v2234, %v2236
        %s2239 = scalar_lea.vmem %s254, 64 [#allocation13]
        %2240 = vst.msk [vmem:[%s2239] sm:$0xff] %vm260, %v2237
        %2241 = vst.msk [vmem:[%s2239 + $0x8] sm:$0xff] %vm260, %v2238
        %s2242 = sld [smem:[#allocation10 + $0x280]]
        %v2243 = vstv %s2242
        %v2244 = vmul.f32 %v2090, %v2243
        %v2245 = vmul.f32 %v2091, %v2243
        %s2246 = sld [smem:[#allocation10 + $0x281]]
        %v2247 = vstv %s2246
        %v2248 = vmul.f32 %v2092, %v2247
        %v2249 = vmul.f32 %v2093, %v2247
        %v2250 = vadd.f32 %v2244, %v2248
        %v2251 = vadd.f32 %v2245, %v2249
        %s2252 = sld [smem:[#allocation10 + $0x282]]
        %v2253 = vstv %s2252
        %v2254 = vmul.f32 %v2094, %v2253
        %v2255 = vmul.f32 %v2095, %v2253
        %v2256 = vadd.f32 %v2250, %v2254
        %v2257 = vadd.f32 %v2251, %v2255
        %s2258 = sld [smem:[#allocation10 + $0x283]]
        %v2259 = vstv %s2258
        %v2260 = vmul.f32 %v2096, %v2259
        %v2261 = vmul.f32 %v2097, %v2259
        %v2262 = vadd.f32 %v2256, %v2260
        %v2263 = vadd.f32 %v2257, %v2261
        %s2264 = sld [smem:[#allocation12 + $0x5]]
        %v2265 = vstv %s2264
        %v2266 = vadd.f32 %v2262, %v2265
        %v2267 = vadd.f32 %v2263, %v2265
        %s2268 = scalar_lea.vmem %s254, 80 [#allocation13]
        %2269 = vst.msk [vmem:[%s2268] sm:$0xff] %vm260, %v2266
        %2270 = vst.msk [vmem:[%s2268 + $0x8] sm:$0xff] %vm260, %v2267
        %s2271 = sld [smem:[#allocation10 + $0x300]]
        %v2272 = vstv %s2271
        %v2273 = vmul.f32 %v2090, %v2272
        %v2274 = vmul.f32 %v2091, %v2272
        %s2275 = sld [smem:[#allocation10 + $0x301]]
        %v2276 = vstv %s2275
        %v2277 = vmul.f32 %v2092, %v2276
        %v2278 = vmul.f32 %v2093, %v2276
        %v2279 = vadd.f32 %v2273, %v2277
        %v2280 = vadd.f32 %v2274, %v2278
        %s2281 = sld [smem:[#allocation10 + $0x302]]
        %v2282 = vstv %s2281
        %v2283 = vmul.f32 %v2094, %v2282
        %v2284 = vmul.f32 %v2095, %v2282
        %v2285 = vadd.f32 %v2279, %v2283
        %v2286 = vadd.f32 %v2280, %v2284
        %s2287 = sld [smem:[#allocation10 + $0x303]]
        %v2288 = vstv %s2287
        %v2289 = vmul.f32 %v2096, %v2288
        %v2290 = vmul.f32 %v2097, %v2288
        %v2291 = vadd.f32 %v2285, %v2289
        %v2292 = vadd.f32 %v2286, %v2290
        %s2293 = sld [smem:[#allocation12 + $0x6]]
        %v2294 = vstv %s2293
        %v2295 = vadd.f32 %v2291, %v2294
        %v2296 = vadd.f32 %v2292, %v2294
        %s2297 = scalar_lea.vmem %s254, 96 [#allocation13]
        %2298 = vst.msk [vmem:[%s2297] sm:$0xff] %vm260, %v2295
        %2299 = vst.msk [vmem:[%s2297 + $0x8] sm:$0xff] %vm260, %v2296
        %s2300 = sld [smem:[#allocation10 + $0x380]]
        %v2301 = vstv %s2300
        %v2302 = vmul.f32 %v2090, %v2301
        %v2303 = vmul.f32 %v2091, %v2301
        %s2304 = sld [smem:[#allocation10 + $0x381]]
        %v2305 = vstv %s2304
        %v2306 = vmul.f32 %v2092, %v2305
        %v2307 = vmul.f32 %v2093, %v2305
        %v2308 = vadd.f32 %v2302, %v2306
        %v2309 = vadd.f32 %v2303, %v2307
        %s2310 = sld [smem:[#allocation10 + $0x382]]
        %v2311 = vstv %s2310
        %v2312 = vmul.f32 %v2094, %v2311
        %v2313 = vmul.f32 %v2095, %v2311
        %v2314 = vadd.f32 %v2308, %v2312
        %v2315 = vadd.f32 %v2309, %v2313
        %s2316 = sld [smem:[#allocation10 + $0x383]]
        %v2317 = vstv %s2316
        %v2318 = vmul.f32 %v2096, %v2317
        %v2319 = vmul.f32 %v2097, %v2317
        %v2320 = vadd.f32 %v2314, %v2318
        %v2321 = vadd.f32 %v2315, %v2319
        %s2322 = sld [smem:[#allocation12 + $0x7]]
        %v2323 = vstv %s2322
        %v2324 = vadd.f32 %v2320, %v2323
        %v2325 = vadd.f32 %v2321, %v2323
        %s2326 = scalar_lea.vmem %s254, 112 [#allocation13]
        %2327 = vst.msk [vmem:[%s2326] sm:$0xff] %vm260, %v2324
        %2328 = vst.msk [vmem:[%s2326 + $0x8] sm:$0xff] %vm260, %v2325
        %s2329 = sand.u32 %s120, 1
        %s2330 = scalar_lea.sflag [#allocation7], %s2329
        %s2331 = sand.u32 %s120, 1
        %s2332 = smul.addr %s2331, 128
        %s2333 = scalar_lea.vmem [#allocation13], %s2332
        // Predicated region
        $region53: #{tpu_custom_call.1} parent=35 // pred_check
          %p2334 = pneg %p130
        $region54: #{tpu_custom_call.1} parent=35 // pred_check_branch
          %2336 = sbr.rel (%p2334) target = $region56
        $region55: #{tpu_custom_call.1} parent=35 // pred_region
          %s2338 = ssub.s32 2048, 2048
          %2339 = vsyncadd %s2330, %s2338
          %s2340 = smul.addr %s23, 16
          %s2341 = smul.addr %s2340, 128
          %s2342 = scalar_lea.hbm %s4, %s2341
          %s2343 = sshll.u32 %s2333, 4
          %s2344 = int_to_ptr.vmem [resolvable:$true] %s2343
          %2349 = dma.vmem_to_hbm [thread:$0]  %s2344, 2048, %s2342, %s2330, 128, 128, 8
        $region56: #{tpu_custom_call.1} parent=35 // pred_fallthru
          _
      $region36: #{tpu_custom_call.1} parent=5 // pred_fallthru
        _
      %p2350 = scmp.le.s32.totalorder 2, %s18
      // Predicated region
      $region57: #{tpu_custom_call.1} parent=5 // pred_check
        %p2351 = pneg %p2350
      $region58: #{tpu_custom_call.1} parent=5 // pred_check_branch
        %2353 = sbr.rel (%p2351) target = $region60
      $region59: #{tpu_custom_call.1} parent=5 // pred_region
        %s2354 = ssub.s32 %s18, 2
        // Predicated region
        $region61: #{tpu_custom_call.1} parent=59 // pred_check
          %p2355 = pneg %p136
        $region62: #{tpu_custom_call.1} parent=59 // pred_check_branch
          %2357 = sbr.rel (%p2355) target = $region64
        $region63: #{tpu_custom_call.1} parent=59 // pred_region
          %s2358 = sand.u32 %s121, 1
          %s2359 = scalar_lea.sflag [#allocation7], %s2358
          %s2360 = sand.u32 %s121, 1
          %s2361 = smul.addr %s2360, 128
          %s2362 = scalar_lea.vmem [#allocation13], %s2361
          %2363 = dma.done %s2359, 2048
        $region64: #{tpu_custom_call.1} parent=59 // pred_fallthru
          _
      $region60: #{tpu_custom_call.1} parent=5 // pred_fallthru
        _
    $region6: #{tpu_custom_call.1} parent=1 // loop_footer
      %s22 = sadd.s32 1, %s18
    $region7: #{tpu_custom_call.1} parent=1 // loop_footer_branch
      %17 = sbr.rel target = $region3
    $region8: #{tpu_custom_call.1} parent=1 // loop_exit
      _
    %2364 = vsyncpa [#allocation6], 1
    %s2365 = scalar_lea.sflag [#allocation6], 1
    %2366 = vsyncpa %s2365, 1
    %2367 = vsyncpa [#allocation7], 1
    %s2368 = scalar_lea.sflag [#allocation7], 1
    %2369 = vsyncpa %s2368, 1
    %2370 = vsyncpa [#allocation8], 1
    %s2371 = scalar_lea.sflag [#allocation8], 1
    %2372 = vsyncpa %s2371, 1
    %2373 = vsyncpa [#allocation11], 1

</llo_original>
